<compile_context>
chip_gen: v7x
topology: tpu7x:2x2x1
jax: 0.10.0
libtpu: 0.0.40
codegen_flags: <defaults>
</compile_context>

<pallas_src>
import math

import jax
import jax.numpy as jnp
from jax.experimental import pallas as pl
from jax.experimental.pallas import tpu as pltpu

# ------------------------- config (DiTConfig) --------------------------------
B = 2        # batch
N = 16       # dit (image) sequence length
NT = 8       # text sequence length
D = 128      # dit_hidden_size
H = 4        # num_attention_heads
HKV = 2      # num_key_value_heads
HD = 32      # head_dim
I = 256      # GemmaMLP intermediate_size
EPS = 1e-6   # rms_norm_eps
GROUPS = H // HKV
BN = B * N
BNT = B * NT


# ------------------------- in-kernel helpers ---------------------------------
def _rmsnorm(x, w):
    # GemmaRMSNorm: x * rsqrt(mean(x^2) + eps) * (1 + w)
    var = jnp.mean(x * x, axis=-1, keepdims=True)
    return (x * jax.lax.rsqrt(var + EPS)) * (1.0 + w)


def _gelu_tanh(x):
    # gelu_pytorch_tanh
    c = math.sqrt(2.0 / math.pi)
    return 0.5 * x * (1.0 + jnp.tanh(c * (x + 0.044715 * x * x * x)))


# ------------------------------ kernel ----------------------------------------
def dit_layer_kernel(h_ref, temb_ref, text_ref,
                     adaln_w_ref, adaln_b_ref,
                     innorm_w_ref, qn_w_ref, kn_w_ref,
                     qkv_w_ref, tkv_w_ref, ow_ref,
                     postnorm_w_ref, gateup_w_ref, downw_ref,
                     out_ref):
    f32 = jnp.float32
    bf16 = jnp.bfloat16

    x = h_ref[...]            # (BN, D)   batch folded into rows, f32
    text = text_ref[...]      # (BNT, D)  f32
    temb = temb_ref[...]      # (B, D)    f32

    # ---- AdaLN-Zero conditioning, computed in-kernel (tiny matmul). ----
    # chunk order: shift_msa | scale_msa | gate_msa | shift_mlp | scale_mlp | gate_mlp
    silu = temb * jax.nn.sigmoid(temb)
    emb = jnp.dot(silu.astype(bf16), adaln_w_ref[...],
                  preferred_element_type=f32) + adaln_b_ref[...]   # (B, 6*D)

    def chunk(b, idx):
        # per-batch (1, D) conditioning row; broadcasts against (N, D)
        return emb[b:b + 1, idx * D:(idx + 1) * D]

    # AdaLayerNormZero modulation.  DiTLayer later re-applies shift/scale_msa
    # set to zeros (exact no-op), so a single application here is the complete
    # semantics.
    norm_x = _rmsnorm(x, innorm_w_ref[...])
    norm_h = jnp.concatenate(
        [norm_x[b * N:(b + 1) * N, :] * (1.0 + chunk(b, 1)) + chunk(b, 0)
         for b in range(B)], axis=0)                                # (BN, D)

    # ---- DiTSelfAttention projections: fused q|k|v and fused text k|v ----
    qkv = jnp.dot(norm_h.astype(bf16), qkv_w_ref[...],
                  preferred_element_type=f32)        # (BN, (H + 2*HKV)*HD)
    q = qkv[:, :H * HD]                              # (BN, H*HD)
    k = qkv[:, H * HD:(H + HKV) * HD]                # (BN, HKV*HD)
    v = qkv[:, (H + HKV) * HD:]                      # (BN, HKV*HD)
    tkv = jnp.dot(text.astype(bf16), tkv_w_ref[...],
                  preferred_element_type=f32)        # (BNT, 2*HKV*HD)
    tk = tkv[:, :HKV * HD]
    tv = tkv[:, HKV * HD:]

    qn_w = qn_w_ref[...]      # (1, HD)
    kn_w = kn_w_ref[...]      # (1, HD)
    ow = ow_ref[...]          # (H*HD, D) bf16
    scale = 1.0 / math.sqrt(HD)

    # ---- attention: one pass per (batch, kv-head) with the GROUPS query
    # heads of each group stacked along rows.  Head outputs are folded
    # straight into the o_proj accumulation (no masked scatter / scratch). ----
    attn_rows = []
    for b in range(B):                      # B=2, static unroll
        q_b = q[b * N:(b + 1) * N, :]
        k_b = k[b * N:(b + 1) * N, :]
        v_b = v[b * N:(b + 1) * N, :]
        tk_b = tk[b * NT:(b + 1) * NT, :]
        tv_b = tv[b * NT:(b + 1) * NT, :]
        acc = jnp.zeros((N, D), f32)
        for g in range(HKV):                # HKV=2, static unroll
            # stack this group's query heads along the row axis
            q_stack = jnp.concatenate(
                [q_b[:, (g * GROUPS + j) * HD:(g * GROUPS + j + 1) * HD]
                 for j in range(GROUPS)], axis=0)            # (GROUPS*N, HD)
            q_stack = _rmsnorm(q_stack, qn_w)
            # K/V for this kv-head: text KV precedes image KV (matches
            # torch.cat([text_key, key], dim=2)); k-RMSNorm done once here.
            k_img = _rmsnorm(k_b[:, g * HD:(g + 1) * HD], kn_w)   # (N, HD)
            k_txt = _rmsnorm(tk_b[:, g * HD:(g + 1) * HD], kn_w)  # (NT, HD)
            k_h = jnp.concatenate([k_txt, k_img], axis=0)         # (NT+N, HD)
            v_h = jnp.concatenate([tv_b[:, g * HD:(g + 1) * HD],
                                   v_b[:, g * HD:(g + 1) * HD]], axis=0)

            s = jnp.dot(q_stack.astype(bf16), k_h.astype(bf16).T,
                        preferred_element_type=f32) * scale  # (GROUPS*N, NT+N)
            s = s - jnp.max(s, axis=-1, keepdims=True)
            p = jnp.exp(s)
            p = p * pl.reciprocal(jnp.sum(p, axis=-1, keepdims=True),
                                  approx=True)
            o = jnp.dot(p.astype(bf16), v_h.astype(bf16),
                        preferred_element_type=f32)          # (GROUPS*N, HD)

            # fold each head directly into the o_proj result
            for j in range(GROUPS):
                hh = g * GROUPS + j
                acc = acc + jnp.dot(
                    o[j * N:(j + 1) * N, :].astype(bf16),
                    ow[hh * HD:(hh + 1) * HD, :],
                    preferred_element_type=f32)              # (N, D)
        attn_rows.append(chunk(b, 2) * acc)                  # gate_msa * attn
    hidden = x + jnp.concatenate(attn_rows, axis=0)          # (BN, D)

    # ---- post-attn RMSNorm + AdaLN MLP modulation + GemmaMLP (fused gate|up) ----
    norm2 = _rmsnorm(hidden, postnorm_w_ref[...])
    norm2 = jnp.concatenate(
        [norm2[b * N:(b + 1) * N, :] * (1.0 + chunk(b, 4)) + chunk(b, 3)
         for b in range(B)], axis=0)
    gu = jnp.dot(norm2.astype(bf16), gateup_w_ref[...],
                 preferred_element_type=f32)                 # (BN, 2*I)
    act = _gelu_tanh(gu[:, :I]) * gu[:, I:]
    mlp = jnp.dot(act.astype(bf16), downw_ref[...],
                  preferred_element_type=f32)                # (BN, D)

    out_ref[...] = hidden + jnp.concatenate(
        [chunk(b, 5) * mlp[b * N:(b + 1) * N, :] for b in range(B)], axis=0)


# ------------------------------ wrapper ---------------------------------------
def prepare_params(params):
    """One-time setup: fuse same-LHS weights and pre-cast matmul weights to
    bf16 (halves the weight DMA stream; f32 accumulation stays in-kernel)."""
    (adaln_w, adaln_b, innorm_w, qn_w, kn_w, qw, kw, vw, tkw, tvw, ow,
     postnorm_w, gatew, upw, downw) = params
    bf16 = jnp.bfloat16
    return (
        adaln_w.astype(bf16),                                  # (D, 6D)
        adaln_b,                                               # f32 bias
        innorm_w, qn_w, kn_w,                                  # f32 norm weights
        jnp.concatenate([qw, kw, vw], axis=1).astype(bf16),    # (D, 256)
        jnp.concatenate([tkw, tvw], axis=1).astype(bf16),      # (D, 128)
        ow.astype(bf16),                                       # (128, D)
        postnorm_w,
        jnp.concatenate([gatew, upw], axis=1).astype(bf16),    # (D, 512)
        downw.astype(bf16),                                    # (I, D)
    )


@jax.jit
def dit_layer(hidden, temb, text, prepared):
    (adaln_w, adaln_b, innorm_w, qn_w, kn_w, qkv_w, tkv_w, ow,
     postnorm_w, gateup_w, downw) = prepared

    h_flat = hidden.reshape(BN, D)
    t_flat = text.reshape(BNT, D)

    def full(shape):
        return pl.BlockSpec(shape, lambda i, _n=len(shape): (0,) * _n)

    in_specs = [
        full((BN, D)),                      # hidden (batch-flattened)
        full((B, D)),                       # temb
        full((BNT, D)),                     # text (batch-flattened)
        full((D, 6 * D)),                   # adaln-zero W (bf16)
        full((1, 6 * D)),                   # adaln-zero b
        full((1, D)),                       # input_layernorm.norm weight
        full((1, HD)),                      # q_norm weight
        full((1, HD)),                      # k_norm weight
        full((D, (H + 2 * HKV) * HD)),      # fused q|k|v (bf16)
        full((D, 2 * HKV * HD)),            # fused text_k|text_v (bf16)
        full((H * HD, D)),                  # o_proj (bf16)
        full((1, D)),                       # post_attention_layernorm weight
        full((D, 2 * I)),                   # fused gate|up (bf16)
        full((I, D)),                       # down_proj (bf16)
    ]

    flops = 2 * (B * D * (6 * D)                            # adaln
                 + BN * D * ((H + 2 * HKV) * HD)            # fused qkv
                 + BNT * D * (2 * HKV * HD)                 # fused text kv
                 + 2 * B * HKV * (GROUPS * N) * (N + NT) * HD  # scores + PV
                 + BN * (H * HD) * D                        # o_proj
                 + BN * D * (2 * I)                         # fused gate|up
                 + BN * I * D)                              # down
    transcendentals = (B * D + B * HKV * (GROUPS * N) * (N + NT)
                       + BN * I + BN)
    bytes_accessed = (4 * (2 * BN * D + B * D + BNT * D + 7 * D + 2 * HD)
                      + 2 * (D * 6 * D + D * (H + 2 * HKV) * HD
                             + D * 2 * HKV * HD + H * HD * D
                             + D * 2 * I + I * D))

    out_flat = pl.pallas_call(
        dit_layer_kernel,
        out_shape=jax.ShapeDtypeStruct((BN, D), jnp.float32),
        grid_spec=pltpu.PrefetchScalarGridSpec(
            num_scalar_prefetch=0,
            grid=(1,),
            in_specs=in_specs,
            out_specs=pl.BlockSpec((BN, D), lambda i: (0, 0)),
        ),
        compiler_params=pltpu.CompilerParams(
            dimension_semantics=("arbitrary",)),
        cost_estimate=pl.CostEstimate(
            flops=flops, transcendentals=transcendentals,
            bytes_accessed=bytes_accessed),
    )(h_flat, temb, t_flat, adaln_w, adaln_b, innorm_w, qn_w, kn_w,
      qkv_w, tkv_w, ow, postnorm_w, gateup_w, downw)
    return out_flat.reshape(B, N, D)


# ------------------------- pure-JAX reference (f32) ---------------------------
def dit_layer_ref(hidden, temb, text, params):
    (adaln_w, adaln_b, innorm_w, qn_w, kn_w, qw, kw, vw, tkw, tvw, ow,
     postnorm_w, gatew, upw, downw) = params

    def rms(x, w):
        var = jnp.mean(x * x, axis=-1, keepdims=True)
        return (x * jax.lax.rsqrt(var + EPS)) * (1.0 + w)

    silu = temb * jax.nn.sigmoid(temb)
    emb = silu @ adaln_w + adaln_b
    sh_msa, sc_msa, g_msa, sh_mlp, sc_mlp, g_mlp = jnp.split(emb, 6, axis=1)

    norm_h = rms(hidden, innorm_w) * (1.0 + sc_msa[:, None]) + sh_msa[:, None]

    q = (norm_h @ qw).reshape(B, N, H, HD).transpose(0, 2, 1, 3)
    k = (norm_h @ kw).reshape(B, N, HKV, HD).transpose(0, 2, 1, 3)
    v = (norm_h @ vw).reshape(B, N, HKV, HD).transpose(0, 2, 1, 3)
    tk = (text @ tkw).reshape(B, NT, HKV, HD).transpose(0, 2, 1, 3)
    tv = (text @ tvw).reshape(B, NT, HKV, HD).transpose(0, 2, 1, 3)
    q = rms(q, qn_w)
    k = rms(k, kn_w)
    tk = rms(tk, kn_w)
    k = jnp.concatenate([tk, k], axis=2)
    v = jnp.concatenate([tv, v], axis=2)
    k = jnp.repeat(k, GROUPS, axis=1)
    v = jnp.repeat(v, GROUPS, axis=1)
    s = jnp.einsum('bhnd,bhmd->bhnm', q, k) / math.sqrt(HD)
    p = jax.nn.softmax(s, axis=-1)
    attn = jnp.einsum('bhnm,bhmd->bhnd', p, v).transpose(0, 2, 1, 3).reshape(B, N, H * HD)
    attn = attn @ ow
    hidden = hidden + g_msa[:, None] * attn

    norm2 = rms(hidden, postnorm_w) * (1.0 + sc_mlp[:, None]) + sh_mlp[:, None]
    c = math.sqrt(2.0 / math.pi)
    gact = norm2 @ gatew
    gact = 0.5 * gact * (1.0 + jnp.tanh(c * (gact + 0.044715 * gact ** 3)))
    mlp_out = (gact * (norm2 @ upw)) @ downw
    return hidden + g_mlp[:, None] * mlp_out


# --------------------------------- main ----------------------------------------
if __name__ == "__main__":
    key = jax.random.PRNGKey(0)
    ks = jax.random.split(key, 16)
    f32 = jnp.float32
    s = 0.02

    hidden = jax.random.normal(ks[0], (B, N, D), f32)
    temb = jax.random.normal(ks[1], (B, D), f32)
    text = jax.random.normal(ks[2], (B, NT, D), f32)

    params = (
        jax.random.normal(ks[3], (D, 6 * D), f32) * s,      # adaln W
        jax.random.normal(ks[4], (1, 6 * D), f32) * s,      # adaln b
        jnp.zeros((1, D), f32),                             # input norm weight
        jnp.zeros((1, HD), f32),                            # q_norm weight
        jnp.zeros((1, HD), f32),                            # k_norm weight
        jax.random.normal(ks[5], (D, H * HD), f32) * s,     # q_proj
        jax.random.normal(ks[6], (D, HKV * HD), f32) * s,   # k_proj
        jax.random.normal(ks[7], (D, HKV * HD), f32) * s,   # v_proj
        jax.random.normal(ks[8], (D, HKV * HD), f32) * s,   # text_k_proj
        jax.random.normal(ks[9], (D, HKV * HD), f32) * s,   # text_v_proj
        jax.random.normal(ks[10], (H * HD, D), f32) * s,    # o_proj
        jnp.zeros((1, D), f32),                             # post-attn norm weight
        jax.random.normal(ks[11], (D, I), f32) * s,         # gate_proj
        jax.random.normal(ks[12], (D, I), f32) * s,         # up_proj
        jax.random.normal(ks[13], (I, D), f32) * s,         # down_proj
    )

    # One-time weight fusion + bf16 cast (cached outside the per-call path).
    prepared = jax.block_until_ready(prepare_params(params))

    out = dit_layer(hidden, temb, text, prepared)
    out = jax.block_until_ready(out)

    ref = dit_layer_ref(hidden, temb, text, params)
    assert out.shape == (B, N, D)
    # Tolerance relaxed to 2e-2: matmul operands run in bf16 (f32 accumulation).
    assert jnp.allclose(out, ref, rtol=2e-2, atol=2e-2), "mismatch vs reference"

    print("KERNEL_OK")
</pallas_src>

<mosaic_0001>
module attributes {stable_mosaic.version = 11 : i64} {
  func.func @dit_layer_kernel(%arg0: i32, %arg1: memref<32x128xf32, #tpu.memory_space<vmem>>, %arg2: memref<2x128xf32, #tpu.memory_space<vmem>>, %arg3: memref<16x128xf32, #tpu.memory_space<vmem>>, %arg4: memref<128x768xbf16, #tpu.memory_space<vmem>>, %arg5: memref<1x768xf32, #tpu.memory_space<vmem>>, %arg6: memref<1x128xf32, #tpu.memory_space<vmem>>, %arg7: memref<1x32xf32, #tpu.memory_space<vmem>>, %arg8: memref<1x32xf32, #tpu.memory_space<vmem>>, %arg9: memref<128x256xbf16, #tpu.memory_space<vmem>>, %arg10: memref<128x128xbf16, #tpu.memory_space<vmem>>, %arg11: memref<128x128xbf16, #tpu.memory_space<vmem>>, %arg12: memref<1x128xf32, #tpu.memory_space<vmem>>, %arg13: memref<128x512xbf16, #tpu.memory_space<vmem>>, %arg14: memref<256x128xbf16, #tpu.memory_space<vmem>>, %arg15: memref<32x128xf32, #tpu.memory_space<vmem>>) attributes {dimension_semantics = [#tpu.dimension_semantics<arbitrary>], iteration_bounds = array<i64: 1>, scalar_prefetch = 0 : i64, scratch_operands = 0 : i64, tpu.core_type = #tpu.core_type<tc>, window_params = [{pipeline_mode = #tpu.pipeline_mode<synchronous>, transform_indices = @transform_0, window_bounds = array<i64: 32, 128>}, {pipeline_mode = #tpu.pipeline_mode<synchronous>, transform_indices = @transform_1, window_bounds = array<i64: 2, 128>}, {pipeline_mode = #tpu.pipeline_mode<synchronous>, transform_indices = @transform_2, window_bounds = array<i64: 16, 128>}, {pipeline_mode = #tpu.pipeline_mode<synchronous>, transform_indices = @transform_3, window_bounds = array<i64: 128, 768>}, {pipeline_mode = #tpu.pipeline_mode<synchronous>, transform_indices = @transform_4, window_bounds = array<i64: 1, 768>}, {pipeline_mode = #tpu.pipeline_mode<synchronous>, transform_indices = @transform_5, window_bounds = array<i64: 1, 128>}, {pipeline_mode = #tpu.pipeline_mode<synchronous>, transform_indices = @transform_6, window_bounds = array<i64: 1, 32>}, {pipeline_mode = #tpu.pipeline_mode<synchronous>, transform_indices = @transform_7, window_bounds = array<i64: 1, 32>}, {pipeline_mode = #tpu.pipeline_mode<synchronous>, transform_indices = @transform_8, window_bounds = array<i64: 128, 256>}, {pipeline_mode = #tpu.pipeline_mode<synchronous>, transform_indices = @transform_9, window_bounds = array<i64: 128, 128>}, {pipeline_mode = #tpu.pipeline_mode<synchronous>, transform_indices = @transform_10, window_bounds = array<i64: 128, 128>}, {pipeline_mode = #tpu.pipeline_mode<synchronous>, transform_indices = @transform_11, window_bounds = array<i64: 1, 128>}, {pipeline_mode = #tpu.pipeline_mode<synchronous>, transform_indices = @transform_12, window_bounds = array<i64: 128, 512>}, {pipeline_mode = #tpu.pipeline_mode<synchronous>, transform_indices = @transform_13, window_bounds = array<i64: 256, 128>}, {pipeline_mode = #tpu.pipeline_mode<synchronous>, transform_indices = @transform_14, window_bounds = array<i64: 32, 128>}]} {
    %c0 = arith.constant 0 : index
    %c0_0 = arith.constant 0 : index
    %0 = vector.load %arg1[%c0, %c0_0] : memref<32x128xf32, #tpu.memory_space<vmem>>, vector<32x128xf32>
    %c0_1 = arith.constant 0 : index
    %c0_2 = arith.constant 0 : index
    %1 = vector.load %arg3[%c0_1, %c0_2] : memref<16x128xf32, #tpu.memory_space<vmem>>, vector<16x128xf32>
    %c0_3 = arith.constant 0 : index
    %c0_4 = arith.constant 0 : index
    %2 = vector.load %arg2[%c0_3, %c0_4] : memref<2x128xf32, #tpu.memory_space<vmem>>, vector<2x128xf32>
    %3 = arith.negf %2 : vector<2x128xf32>
    %4 = math.exp %3 : vector<2x128xf32>
    %cst = arith.constant 1.000000e+00 : f32
    %5 = vector.broadcast %cst : f32 to vector<2x128xf32>
    %6 = arith.addf %5, %4 : vector<2x128xf32>
    %7 = arith.divf %5, %6 : vector<2x128xf32>
    %8 = arith.mulf %2, %7 : vector<2x128xf32>
    %9 = arith.truncf %8 : vector<2x128xf32> to vector<2x128xbf16>
    %c0_5 = arith.constant 0 : index
    %c0_6 = arith.constant 0 : index
    %10 = vector.load %arg4[%c0_5, %c0_6] : memref<128x768xbf16, #tpu.memory_space<vmem>>, vector<128x768xbf16>
    %cst_7 = arith.constant dense<0.000000e+00> : vector<2x768xf32>
    %11 = tpu.matmul %9, %10, %cst_7 {dimension_numbers = #tpu.dot_dimension_numbers<[1], [0], [0], [1], [0, 0, 1, 1], [], []>} : vector<2x128xbf16>, vector<128x768xbf16>, vector<2x768xf32> -> vector<2x768xf32>
    %c0_8 = arith.constant 0 : index
    %c0_9 = arith.constant 0 : index
    %12 = vector.load %arg5[%c0_8, %c0_9] : memref<1x768xf32, #tpu.memory_space<vmem>>, vector<1x768xf32>
    %13 = vector.broadcast %12 : vector<1x768xf32> to vector<2x768xf32>
    %14 = arith.addf %11, %13 : vector<2x768xf32>
    %c0_10 = arith.constant 0 : index
    %c0_11 = arith.constant 0 : index
    %15 = vector.load %arg6[%c0_10, %c0_11] : memref<1x128xf32, #tpu.memory_space<vmem>>, vector<1x128xf32>
    %16 = arith.mulf %0, %0 : vector<32x128xf32>
    %cst_12 = arith.constant dense<0.000000e+00> : vector<32xf32>
    %17 = vector.multi_reduction <add>, %16, %cst_12 [1] : vector<32x128xf32> to vector<32xf32>
    %18 = vector.shape_cast %17 : vector<32xf32> to vector<32x1xf32>
    %cst_13 = arith.constant 1.280000e+02 : f32
    %19 = vector.broadcast %cst_13 : f32 to vector<32x1xf32>
    %20 = arith.divf %18, %19 : vector<32x1xf32>
    %cst_14 = arith.constant 9.99999997E-7 : f32
    %21 = vector.broadcast %cst_14 : f32 to vector<32x1xf32>
    %22 = arith.addf %20, %21 : vector<32x1xf32>
    %23 = math.rsqrt %22 : vector<32x1xf32>
    %24 = vector.broadcast %23 : vector<32x1xf32> to vector<32x128xf32>
    %25 = arith.mulf %0, %24 : vector<32x128xf32>
    %cst_15 = arith.constant 1.000000e+00 : f32
    %26 = vector.broadcast %cst_15 : f32 to vector<1x128xf32>
    %27 = arith.addf %26, %15 : vector<1x128xf32>
    %28 = vector.broadcast %27 : vector<1x128xf32> to vector<32x128xf32>
    %29 = arith.mulf %25, %28 : vector<32x128xf32>
    %30 = vector.extract_strided_slice %29 {offsets = [0, 0], sizes = [16, 128], strides = [1, 1]} : vector<32x128xf32> to vector<16x128xf32>
    %31 = vector.extract_strided_slice %14 {offsets = [0, 128], sizes = [1, 128], strides = [1, 1]} : vector<2x768xf32> to vector<1x128xf32>
    %cst_16 = arith.constant 1.000000e+00 : f32
    %32 = vector.broadcast %cst_16 : f32 to vector<1x128xf32>
    %33 = arith.addf %32, %31 : vector<1x128xf32>
    %34 = vector.broadcast %33 : vector<1x128xf32> to vector<16x128xf32>
    %35 = arith.mulf %30, %34 : vector<16x128xf32>
    %36 = vector.extract_strided_slice %14 {offsets = [0, 0], sizes = [1, 128], strides = [1, 1]} : vector<2x768xf32> to vector<1x128xf32>
    %37 = vector.broadcast %36 : vector<1x128xf32> to vector<16x128xf32>
    %38 = arith.addf %35, %37 : vector<16x128xf32>
    %39 = vector.extract_strided_slice %29 {offsets = [16, 0], sizes = [16, 128], strides = [1, 1]} : vector<32x128xf32> to vector<16x128xf32>
    %40 = vector.extract_strided_slice %14 {offsets = [1, 128], sizes = [1, 128], strides = [1, 1]} : vector<2x768xf32> to vector<1x128xf32>
    %cst_17 = arith.constant 1.000000e+00 : f32
    %41 = vector.broadcast %cst_17 : f32 to vector<1x128xf32>
    %42 = arith.addf %41, %40 : vector<1x128xf32>
    %43 = vector.broadcast %42 : vector<1x128xf32> to vector<16x128xf32>
    %44 = arith.mulf %39, %43 : vector<16x128xf32>
    %45 = vector.extract_strided_slice %14 {offsets = [1, 0], sizes = [1, 128], strides = [1, 1]} : vector<2x768xf32> to vector<1x128xf32>
    %46 = vector.broadcast %45 : vector<1x128xf32> to vector<16x128xf32>
    %47 = arith.addf %44, %46 : vector<16x128xf32>
    %48 = tpu.concatenate %38, %47 in 0 : vector<16x128xf32>, vector<16x128xf32> -> vector<32x128xf32>
    %49 = arith.truncf %48 : vector<32x128xf32> to vector<32x128xbf16>
    %c0_18 = arith.constant 0 : index
    %c0_19 = arith.constant 0 : index
    %50 = vector.load %arg9[%c0_18, %c0_19] : memref<128x256xbf16, #tpu.memory_space<vmem>>, vector<128x256xbf16>
    %cst_20 = arith.constant dense<0.000000e+00> : vector<32x256xf32>
    %51 = tpu.matmul %49, %50, %cst_20 {dimension_numbers = #tpu.dot_dimension_numbers<[1], [0], [0], [1], [0, 0, 1, 1], [], []>} : vector<32x128xbf16>, vector<128x256xbf16>, vector<32x256xf32> -> vector<32x256xf32>
    %52 = vector.extract_strided_slice %51 {offsets = [0, 0], sizes = [32, 128], strides = [1, 1]} : vector<32x256xf32> to vector<32x128xf32>
    %53 = vector.extract_strided_slice %51 {offsets = [0, 128], sizes = [32, 64], strides = [1, 1]} : vector<32x256xf32> to vector<32x64xf32>
    %54 = vector.extract_strided_slice %51 {offsets = [0, 192], sizes = [32, 64], strides = [1, 1]} : vector<32x256xf32> to vector<32x64xf32>
    %55 = arith.truncf %1 : vector<16x128xf32> to vector<16x128xbf16>
    %c0_21 = arith.constant 0 : index
    %c0_22 = arith.constant 0 : index
    %56 = vector.load %arg10[%c0_21, %c0_22] : memref<128x128xbf16, #tpu.memory_space<vmem>>, vector<128x128xbf16>
    %cst_23 = arith.constant dense<0.000000e+00> : vector<16x128xf32>
    %57 = tpu.matmul %55, %56, %cst_23 {dimension_numbers = #tpu.dot_dimension_numbers<[1], [0], [0], [1], [0, 0, 1, 1], [], []>} : vector<16x128xbf16>, vector<128x128xbf16>, vector<16x128xf32> -> vector<16x128xf32>
    %58 = vector.extract_strided_slice %57 {offsets = [0, 0], sizes = [16, 64], strides = [1, 1]} : vector<16x128xf32> to vector<16x64xf32>
    %59 = vector.extract_strided_slice %57 {offsets = [0, 64], sizes = [16, 64], strides = [1, 1]} : vector<16x128xf32> to vector<16x64xf32>
    %c0_24 = arith.constant 0 : index
    %c0_25 = arith.constant 0 : index
    %60 = vector.load %arg7[%c0_24, %c0_25] : memref<1x32xf32, #tpu.memory_space<vmem>>, vector<1x32xf32>
    %c0_26 = arith.constant 0 : index
    %c0_27 = arith.constant 0 : index
    %61 = vector.load %arg8[%c0_26, %c0_27] : memref<1x32xf32, #tpu.memory_space<vmem>>, vector<1x32xf32>
    %c0_28 = arith.constant 0 : index
    %c0_29 = arith.constant 0 : index
    %62 = vector.load %arg11[%c0_28, %c0_29] : memref<128x128xbf16, #tpu.memory_space<vmem>>, vector<128x128xbf16>
    %63 = vector.extract_strided_slice %52 {offsets = [0, 0], sizes = [16, 128], strides = [1, 1]} : vector<32x128xf32> to vector<16x128xf32>
    %64 = vector.extract_strided_slice %53 {offsets = [0, 0], sizes = [16, 64], strides = [1, 1]} : vector<32x64xf32> to vector<16x64xf32>
    %65 = vector.extract_strided_slice %54 {offsets = [0, 0], sizes = [16, 64], strides = [1, 1]} : vector<32x64xf32> to vector<16x64xf32>
    %66 = vector.extract_strided_slice %58 {offsets = [0, 0], sizes = [8, 64], strides = [1, 1]} : vector<16x64xf32> to vector<8x64xf32>
    %67 = vector.extract_strided_slice %59 {offsets = [0, 0], sizes = [8, 64], strides = [1, 1]} : vector<16x64xf32> to vector<8x64xf32>
    %cst_30 = arith.constant 0.000000e+00 : f32
    %68 = vector.broadcast %cst_30 : f32 to vector<16x128xf32>
    %69 = vector.extract_strided_slice %63 {offsets = [0, 0], sizes = [16, 32], strides = [1, 1]} : vector<16x128xf32> to vector<16x32xf32>
    %70 = vector.extract_strided_slice %63 {offsets = [0, 32], sizes = [16, 32], strides = [1, 1]} : vector<16x128xf32> to vector<16x32xf32>
    %71 = tpu.concatenate %69, %70 in 0 : vector<16x32xf32>, vector<16x32xf32> -> vector<32x32xf32>
    %72 = arith.mulf %71, %71 : vector<32x32xf32>
    %cst_31 = arith.constant dense<0.000000e+00> : vector<32xf32>
    %73 = vector.multi_reduction <add>, %72, %cst_31 [1] : vector<32x32xf32> to vector<32xf32>
    %74 = vector.shape_cast %73 : vector<32xf32> to vector<32x1xf32>
    %cst_32 = arith.constant 3.200000e+01 : f32
    %75 = vector.broadcast %cst_32 : f32 to vector<32x1xf32>
    %76 = arith.divf %74, %75 : vector<32x1xf32>
    %cst_33 = arith.constant 9.99999997E-7 : f32
    %77 = vector.broadcast %cst_33 : f32 to vector<32x1xf32>
    %78 = arith.addf %76, %77 : vector<32x1xf32>
    %79 = math.rsqrt %78 : vector<32x1xf32>
    %80 = vector.broadcast %79 : vector<32x1xf32> to vector<32x32xf32>
    %81 = arith.mulf %71, %80 : vector<32x32xf32>
    %cst_34 = arith.constant 1.000000e+00 : f32
    %82 = vector.broadcast %cst_34 : f32 to vector<1x32xf32>
    %83 = arith.addf %82, %60 : vector<1x32xf32>
    %84 = vector.broadcast %83 : vector<1x32xf32> to vector<32x32xf32>
    %85 = arith.mulf %81, %84 : vector<32x32xf32>
    %86 = vector.extract_strided_slice %64 {offsets = [0, 0], sizes = [16, 32], strides = [1, 1]} : vector<16x64xf32> to vector<16x32xf32>
    %87 = arith.mulf %86, %86 : vector<16x32xf32>
    %cst_35 = arith.constant dense<0.000000e+00> : vector<16xf32>
    %88 = vector.multi_reduction <add>, %87, %cst_35 [1] : vector<16x32xf32> to vector<16xf32>
    %89 = vector.shape_cast %88 : vector<16xf32> to vector<16x1xf32>
    %cst_36 = arith.constant 3.200000e+01 : f32
    %90 = vector.broadcast %cst_36 : f32 to vector<16x1xf32>
    %91 = arith.divf %89, %90 : vector<16x1xf32>
    %cst_37 = arith.constant 9.99999997E-7 : f32
    %92 = vector.broadcast %cst_37 : f32 to vector<16x1xf32>
    %93 = arith.addf %91, %92 : vector<16x1xf32>
    %94 = math.rsqrt %93 : vector<16x1xf32>
    %95 = vector.broadcast %94 : vector<16x1xf32> to vector<16x32xf32>
    %96 = arith.mulf %86, %95 : vector<16x32xf32>
    %cst_38 = arith.constant 1.000000e+00 : f32
    %97 = vector.broadcast %cst_38 : f32 to vector<1x32xf32>
    %98 = arith.addf %97, %61 : vector<1x32xf32>
    %99 = vector.broadcast %98 : vector<1x32xf32> to vector<16x32xf32>
    %100 = arith.mulf %96, %99 : vector<16x32xf32>
    %101 = vector.extract_strided_slice %66 {offsets = [0, 0], sizes = [8, 32], strides = [1, 1]} : vector<8x64xf32> to vector<8x32xf32>
    %102 = arith.mulf %101, %101 : vector<8x32xf32>
    %cst_39 = arith.constant dense<0.000000e+00> : vector<8xf32>
    %103 = vector.multi_reduction <add>, %102, %cst_39 [1] : vector<8x32xf32> to vector<8xf32>
    %104 = vector.shape_cast %103 : vector<8xf32> to vector<8x1xf32>
    %cst_40 = arith.constant 3.200000e+01 : f32
    %105 = vector.broadcast %cst_40 : f32 to vector<8x1xf32>
    %106 = arith.divf %104, %105 : vector<8x1xf32>
    %cst_41 = arith.constant 9.99999997E-7 : f32
    %107 = vector.broadcast %cst_41 : f32 to vector<8x1xf32>
    %108 = arith.addf %106, %107 : vector<8x1xf32>
    %109 = math.rsqrt %108 : vector<8x1xf32>
    %110 = vector.broadcast %109 : vector<8x1xf32> to vector<8x32xf32>
    %111 = arith.mulf %101, %110 : vector<8x32xf32>
    %cst_42 = arith.constant 1.000000e+00 : f32
    %112 = vector.broadcast %cst_42 : f32 to vector<1x32xf32>
    %113 = arith.addf %112, %61 : vector<1x32xf32>
    %114 = vector.broadcast %113 : vector<1x32xf32> to vector<8x32xf32>
    %115 = arith.mulf %111, %114 : vector<8x32xf32>
    %116 = tpu.concatenate %115, %100 in 0 : vector<8x32xf32>, vector<16x32xf32> -> vector<24x32xf32>
    %117 = vector.extract_strided_slice %67 {offsets = [0, 0], sizes = [8, 32], strides = [1, 1]} : vector<8x64xf32> to vector<8x32xf32>
    %118 = vector.extract_strided_slice %65 {offsets = [0, 0], sizes = [16, 32], strides = [1, 1]} : vector<16x64xf32> to vector<16x32xf32>
    %119 = tpu.concatenate %117, %118 in 0 : vector<8x32xf32>, vector<16x32xf32> -> vector<24x32xf32>
    %120 = arith.truncf %85 : vector<32x32xf32> to vector<32x32xbf16>
    %121 = arith.truncf %116 : vector<24x32xf32> to vector<24x32xbf16>
    %122 = tpu.transpose %121, [1, 0] : vector<24x32xbf16> -> vector<32x24xbf16>
    %cst_43 = arith.constant dense<0.000000e+00> : vector<32x24xf32>
    %123 = tpu.matmul %120, %122, %cst_43 {dimension_numbers = #tpu.dot_dimension_numbers<[1], [0], [0], [1], [0, 0, 1, 1], [], []>} : vector<32x32xbf16>, vector<32x24xbf16>, vector<32x24xf32> -> vector<32x24xf32>
    %cst_44 = arith.constant 0.176776692 : f32
    %124 = vector.broadcast %cst_44 : f32 to vector<32x24xf32>
    %125 = arith.mulf %123, %124 : vector<32x24xf32>
    %cst_45 = arith.constant dense<0xFF800000> : vector<32xf32>
    %126 = vector.multi_reduction <maximumf>, %125, %cst_45 [1] : vector<32x24xf32> to vector<32xf32>
    %127 = vector.shape_cast %126 : vector<32xf32> to vector<32x1xf32>
    %128 = vector.broadcast %127 : vector<32x1xf32> to vector<32x24xf32>
    %129 = arith.subf %125, %128 : vector<32x24xf32>
    %130 = math.exp %129 : vector<32x24xf32>
    %cst_46 = arith.constant dense<0.000000e+00> : vector<32xf32>
    %131 = vector.multi_reduction <add>, %130, %cst_46 [1] : vector<32x24xf32> to vector<32xf32>
    %132 = vector.shape_cast %131 : vector<32xf32> to vector<32x1xf32>
    %133 = tpu.reciprocal %132 {approx = true} : vector<32x1xf32> -> vector<32x1xf32>
    %134 = vector.broadcast %133 : vector<32x1xf32> to vector<32x24xf32>
    %135 = arith.mulf %130, %134 : vector<32x24xf32>
    %136 = arith.truncf %135 : vector<32x24xf32> to vector<32x24xbf16>
    %137 = arith.truncf %119 : vector<24x32xf32> to vector<24x32xbf16>
    %cst_47 = arith.constant dense<0.000000e+00> : vector<32x32xf32>
    %138 = tpu.matmul %136, %137, %cst_47 {dimension_numbers = #tpu.dot_dimension_numbers<[1], [0], [0], [1], [0, 0, 1, 1], [], []>} : vector<32x24xbf16>, vector<24x32xbf16>, vector<32x32xf32> -> vector<32x32xf32>
    %139 = vector.extract_strided_slice %138 {offsets = [0, 0], sizes = [16, 32], strides = [1, 1]} : vector<32x32xf32> to vector<16x32xf32>
    %140 = arith.truncf %139 : vector<16x32xf32> to vector<16x32xbf16>
    %141 = vector.extract_strided_slice %62 {offsets = [0, 0], sizes = [32, 128], strides = [1, 1]} : vector<128x128xbf16> to vector<32x128xbf16>
    %cst_48 = arith.constant dense<0.000000e+00> : vector<16x128xf32>
    %142 = tpu.matmul %140, %141, %cst_48 {dimension_numbers = #tpu.dot_dimension_numbers<[1], [0], [0], [1], [0, 0, 1, 1], [], []>} : vector<16x32xbf16>, vector<32x128xbf16>, vector<16x128xf32> -> vector<16x128xf32>
    %143 = arith.addf %68, %142 : vector<16x128xf32>
    %144 = vector.extract_strided_slice %138 {offsets = [16, 0], sizes = [16, 32], strides = [1, 1]} : vector<32x32xf32> to vector<16x32xf32>
    %145 = arith.truncf %144 : vector<16x32xf32> to vector<16x32xbf16>
    %146 = vector.extract_strided_slice %62 {offsets = [32, 0], sizes = [32, 128], strides = [1, 1]} : vector<128x128xbf16> to vector<32x128xbf16>
    %cst_49 = arith.constant dense<0.000000e+00> : vector<16x128xf32>
    %147 = tpu.matmul %145, %146, %cst_49 {dimension_numbers = #tpu.dot_dimension_numbers<[1], [0], [0], [1], [0, 0, 1, 1], [], []>} : vector<16x32xbf16>, vector<32x128xbf16>, vector<16x128xf32> -> vector<16x128xf32>
    %148 = arith.addf %143, %147 : vector<16x128xf32>
    %149 = vector.extract_strided_slice %63 {offsets = [0, 64], sizes = [16, 32], strides = [1, 1]} : vector<16x128xf32> to vector<16x32xf32>
    %150 = vector.extract_strided_slice %63 {offsets = [0, 96], sizes = [16, 32], strides = [1, 1]} : vector<16x128xf32> to vector<16x32xf32>
    %151 = tpu.concatenate %149, %150 in 0 : vector<16x32xf32>, vector<16x32xf32> -> vector<32x32xf32>
    %152 = arith.mulf %151, %151 : vector<32x32xf32>
    %cst_50 = arith.constant dense<0.000000e+00> : vector<32xf32>
    %153 = vector.multi_reduction <add>, %152, %cst_50 [1] : vector<32x32xf32> to vector<32xf32>
    %154 = vector.shape_cast %153 : vector<32xf32> to vector<32x1xf32>
    %cst_51 = arith.constant 3.200000e+01 : f32
    %155 = vector.broadcast %cst_51 : f32 to vector<32x1xf32>
    %156 = arith.divf %154, %155 : vector<32x1xf32>
    %cst_52 = arith.constant 9.99999997E-7 : f32
    %157 = vector.broadcast %cst_52 : f32 to vector<32x1xf32>
    %158 = arith.addf %156, %157 : vector<32x1xf32>
    %159 = math.rsqrt %158 : vector<32x1xf32>
    %160 = vector.broadcast %159 : vector<32x1xf32> to vector<32x32xf32>
    %161 = arith.mulf %151, %160 : vector<32x32xf32>
    %cst_53 = arith.constant 1.000000e+00 : f32
    %162 = vector.broadcast %cst_53 : f32 to vector<1x32xf32>
    %163 = arith.addf %162, %60 : vector<1x32xf32>
    %164 = vector.broadcast %163 : vector<1x32xf32> to vector<32x32xf32>
    %165 = arith.mulf %161, %164 : vector<32x32xf32>
    %166 = vector.extract_strided_slice %64 {offsets = [0, 32], sizes = [16, 32], strides = [1, 1]} : vector<16x64xf32> to vector<16x32xf32>
    %167 = arith.mulf %166, %166 : vector<16x32xf32>
    %cst_54 = arith.constant dense<0.000000e+00> : vector<16xf32>
    %168 = vector.multi_reduction <add>, %167, %cst_54 [1] : vector<16x32xf32> to vector<16xf32>
    %169 = vector.shape_cast %168 : vector<16xf32> to vector<16x1xf32>
    %cst_55 = arith.constant 3.200000e+01 : f32
    %170 = vector.broadcast %cst_55 : f32 to vector<16x1xf32>
    %171 = arith.divf %169, %170 : vector<16x1xf32>
    %cst_56 = arith.constant 9.99999997E-7 : f32
    %172 = vector.broadcast %cst_56 : f32 to vector<16x1xf32>
    %173 = arith.addf %171, %172 : vector<16x1xf32>
    %174 = math.rsqrt %173 : vector<16x1xf32>
    %175 = vector.broadcast %174 : vector<16x1xf32> to vector<16x32xf32>
    %176 = arith.mulf %166, %175 : vector<16x32xf32>
    %cst_57 = arith.constant 1.000000e+00 : f32
    %177 = vector.broadcast %cst_57 : f32 to vector<1x32xf32>
    %178 = arith.addf %177, %61 : vector<1x32xf32>
    %179 = vector.broadcast %178 : vector<1x32xf32> to vector<16x32xf32>
    %180 = arith.mulf %176, %179 : vector<16x32xf32>
    %181 = vector.extract_strided_slice %66 {offsets = [0, 32], sizes = [8, 32], strides = [1, 1]} : vector<8x64xf32> to vector<8x32xf32>
    %182 = arith.mulf %181, %181 : vector<8x32xf32>
    %cst_58 = arith.constant dense<0.000000e+00> : vector<8xf32>
    %183 = vector.multi_reduction <add>, %182, %cst_58 [1] : vector<8x32xf32> to vector<8xf32>
    %184 = vector.shape_cast %183 : vector<8xf32> to vector<8x1xf32>
    %cst_59 = arith.constant 3.200000e+01 : f32
    %185 = vector.broadcast %cst_59 : f32 to vector<8x1xf32>
    %186 = arith.divf %184, %185 : vector<8x1xf32>
    %cst_60 = arith.constant 9.99999997E-7 : f32
    %187 = vector.broadcast %cst_60 : f32 to vector<8x1xf32>
    %188 = arith.addf %186, %187 : vector<8x1xf32>
    %189 = math.rsqrt %188 : vector<8x1xf32>
    %190 = vector.broadcast %189 : vector<8x1xf32> to vector<8x32xf32>
    %191 = arith.mulf %181, %190 : vector<8x32xf32>
    %cst_61 = arith.constant 1.000000e+00 : f32
    %192 = vector.broadcast %cst_61 : f32 to vector<1x32xf32>
    %193 = arith.addf %192, %61 : vector<1x32xf32>
    %194 = vector.broadcast %193 : vector<1x32xf32> to vector<8x32xf32>
    %195 = arith.mulf %191, %194 : vector<8x32xf32>
    %196 = tpu.concatenate %195, %180 in 0 : vector<8x32xf32>, vector<16x32xf32> -> vector<24x32xf32>
    %197 = vector.extract_strided_slice %67 {offsets = [0, 32], sizes = [8, 32], strides = [1, 1]} : vector<8x64xf32> to vector<8x32xf32>
    %198 = vector.extract_strided_slice %65 {offsets = [0, 32], sizes = [16, 32], strides = [1, 1]} : vector<16x64xf32> to vector<16x32xf32>
    %199 = tpu.concatenate %197, %198 in 0 : vector<8x32xf32>, vector<16x32xf32> -> vector<24x32xf32>
    %200 = arith.truncf %165 : vector<32x32xf32> to vector<32x32xbf16>
    %201 = arith.truncf %196 : vector<24x32xf32> to vector<24x32xbf16>
    %202 = tpu.transpose %201, [1, 0] : vector<24x32xbf16> -> vector<32x24xbf16>
    %cst_62 = arith.constant dense<0.000000e+00> : vector<32x24xf32>
    %203 = tpu.matmul %200, %202, %cst_62 {dimension_numbers = #tpu.dot_dimension_numbers<[1], [0], [0], [1], [0, 0, 1, 1], [], []>} : vector<32x32xbf16>, vector<32x24xbf16>, vector<32x24xf32> -> vector<32x24xf32>
    %cst_63 = arith.constant 0.176776692 : f32
    %204 = vector.broadcast %cst_63 : f32 to vector<32x24xf32>
    %205 = arith.mulf %203, %204 : vector<32x24xf32>
    %cst_64 = arith.constant dense<0xFF800000> : vector<32xf32>
    %206 = vector.multi_reduction <maximumf>, %205, %cst_64 [1] : vector<32x24xf32> to vector<32xf32>
    %207 = vector.shape_cast %206 : vector<32xf32> to vector<32x1xf32>
    %208 = vector.broadcast %207 : vector<32x1xf32> to vector<32x24xf32>
    %209 = arith.subf %205, %208 : vector<32x24xf32>
    %210 = math.exp %209 : vector<32x24xf32>
    %cst_65 = arith.constant dense<0.000000e+00> : vector<32xf32>
    %211 = vector.multi_reduction <add>, %210, %cst_65 [1] : vector<32x24xf32> to vector<32xf32>
    %212 = vector.shape_cast %211 : vector<32xf32> to vector<32x1xf32>
    %213 = tpu.reciprocal %212 {approx = true} : vector<32x1xf32> -> vector<32x1xf32>
    %214 = vector.broadcast %213 : vector<32x1xf32> to vector<32x24xf32>
    %215 = arith.mulf %210, %214 : vector<32x24xf32>
    %216 = arith.truncf %215 : vector<32x24xf32> to vector<32x24xbf16>
    %217 = arith.truncf %199 : vector<24x32xf32> to vector<24x32xbf16>
    %cst_66 = arith.constant dense<0.000000e+00> : vector<32x32xf32>
    %218 = tpu.matmul %216, %217, %cst_66 {dimension_numbers = #tpu.dot_dimension_numbers<[1], [0], [0], [1], [0, 0, 1, 1], [], []>} : vector<32x24xbf16>, vector<24x32xbf16>, vector<32x32xf32> -> vector<32x32xf32>
    %219 = vector.extract_strided_slice %218 {offsets = [0, 0], sizes = [16, 32], strides = [1, 1]} : vector<32x32xf32> to vector<16x32xf32>
    %220 = arith.truncf %219 : vector<16x32xf32> to vector<16x32xbf16>
    %221 = vector.extract_strided_slice %62 {offsets = [64, 0], sizes = [32, 128], strides = [1, 1]} : vector<128x128xbf16> to vector<32x128xbf16>
    %cst_67 = arith.constant dense<0.000000e+00> : vector<16x128xf32>
    %222 = tpu.matmul %220, %221, %cst_67 {dimension_numbers = #tpu.dot_dimension_numbers<[1], [0], [0], [1], [0, 0, 1, 1], [], []>} : vector<16x32xbf16>, vector<32x128xbf16>, vector<16x128xf32> -> vector<16x128xf32>
    %223 = arith.addf %148, %222 : vector<16x128xf32>
    %224 = vector.extract_strided_slice %218 {offsets = [16, 0], sizes = [16, 32], strides = [1, 1]} : vector<32x32xf32> to vector<16x32xf32>
    %225 = arith.truncf %224 : vector<16x32xf32> to vector<16x32xbf16>
    %226 = vector.extract_strided_slice %62 {offsets = [96, 0], sizes = [32, 128], strides = [1, 1]} : vector<128x128xbf16> to vector<32x128xbf16>
    %cst_68 = arith.constant dense<0.000000e+00> : vector<16x128xf32>
    %227 = tpu.matmul %225, %226, %cst_68 {dimension_numbers = #tpu.dot_dimension_numbers<[1], [0], [0], [1], [0, 0, 1, 1], [], []>} : vector<16x32xbf16>, vector<32x128xbf16>, vector<16x128xf32> -> vector<16x128xf32>
    %228 = arith.addf %223, %227 : vector<16x128xf32>
    %229 = vector.extract_strided_slice %14 {offsets = [0, 256], sizes = [1, 128], strides = [1, 1]} : vector<2x768xf32> to vector<1x128xf32>
    %230 = vector.broadcast %229 : vector<1x128xf32> to vector<16x128xf32>
    %231 = arith.mulf %230, %228 : vector<16x128xf32>
    %232 = vector.extract_strided_slice %52 {offsets = [16, 0], sizes = [16, 128], strides = [1, 1]} : vector<32x128xf32> to vector<16x128xf32>
    %233 = vector.extract_strided_slice %53 {offsets = [16, 0], sizes = [16, 64], strides = [1, 1]} : vector<32x64xf32> to vector<16x64xf32>
    %234 = vector.extract_strided_slice %54 {offsets = [16, 0], sizes = [16, 64], strides = [1, 1]} : vector<32x64xf32> to vector<16x64xf32>
    %235 = vector.extract_strided_slice %58 {offsets = [8, 0], sizes = [8, 64], strides = [1, 1]} : vector<16x64xf32> to vector<8x64xf32>
    %236 = vector.extract_strided_slice %59 {offsets = [8, 0], sizes = [8, 64], strides = [1, 1]} : vector<16x64xf32> to vector<8x64xf32>
    %cst_69 = arith.constant 0.000000e+00 : f32
    %237 = vector.broadcast %cst_69 : f32 to vector<16x128xf32>
    %238 = vector.extract_strided_slice %232 {offsets = [0, 0], sizes = [16, 32], strides = [1, 1]} : vector<16x128xf32> to vector<16x32xf32>
    %239 = vector.extract_strided_slice %232 {offsets = [0, 32], sizes = [16, 32], strides = [1, 1]} : vector<16x128xf32> to vector<16x32xf32>
    %240 = tpu.concatenate %238, %239 in 0 : vector<16x32xf32>, vector<16x32xf32> -> vector<32x32xf32>
    %241 = arith.mulf %240, %240 : vector<32x32xf32>
    %cst_70 = arith.constant dense<0.000000e+00> : vector<32xf32>
    %242 = vector.multi_reduction <add>, %241, %cst_70 [1] : vector<32x32xf32> to vector<32xf32>
    %243 = vector.shape_cast %242 : vector<32xf32> to vector<32x1xf32>
    %cst_71 = arith.constant 3.200000e+01 : f32
    %244 = vector.broadcast %cst_71 : f32 to vector<32x1xf32>
    %245 = arith.divf %243, %244 : vector<32x1xf32>
    %cst_72 = arith.constant 9.99999997E-7 : f32
    %246 = vector.broadcast %cst_72 : f32 to vector<32x1xf32>
    %247 = arith.addf %245, %246 : vector<32x1xf32>
    %248 = math.rsqrt %247 : vector<32x1xf32>
    %249 = vector.broadcast %248 : vector<32x1xf32> to vector<32x32xf32>
    %250 = arith.mulf %240, %249 : vector<32x32xf32>
    %cst_73 = arith.constant 1.000000e+00 : f32
    %251 = vector.broadcast %cst_73 : f32 to vector<1x32xf32>
    %252 = arith.addf %251, %60 : vector<1x32xf32>
    %253 = vector.broadcast %252 : vector<1x32xf32> to vector<32x32xf32>
    %254 = arith.mulf %250, %253 : vector<32x32xf32>
    %255 = vector.extract_strided_slice %233 {offsets = [0, 0], sizes = [16, 32], strides = [1, 1]} : vector<16x64xf32> to vector<16x32xf32>
    %256 = arith.mulf %255, %255 : vector<16x32xf32>
    %cst_74 = arith.constant dense<0.000000e+00> : vector<16xf32>
    %257 = vector.multi_reduction <add>, %256, %cst_74 [1] : vector<16x32xf32> to vector<16xf32>
    %258 = vector.shape_cast %257 : vector<16xf32> to vector<16x1xf32>
    %cst_75 = arith.constant 3.200000e+01 : f32
    %259 = vector.broadcast %cst_75 : f32 to vector<16x1xf32>
    %260 = arith.divf %258, %259 : vector<16x1xf32>
    %cst_76 = arith.constant 9.99999997E-7 : f32
    %261 = vector.broadcast %cst_76 : f32 to vector<16x1xf32>
    %262 = arith.addf %260, %261 : vector<16x1xf32>
    %263 = math.rsqrt %262 : vector<16x1xf32>
    %264 = vector.broadcast %263 : vector<16x1xf32> to vector<16x32xf32>
    %265 = arith.mulf %255, %264 : vector<16x32xf32>
    %cst_77 = arith.constant 1.000000e+00 : f32
    %266 = vector.broadcast %cst_77 : f32 to vector<1x32xf32>
    %267 = arith.addf %266, %61 : vector<1x32xf32>
    %268 = vector.broadcast %267 : vector<1x32xf32> to vector<16x32xf32>
    %269 = arith.mulf %265, %268 : vector<16x32xf32>
    %270 = vector.extract_strided_slice %235 {offsets = [0, 0], sizes = [8, 32], strides = [1, 1]} : vector<8x64xf32> to vector<8x32xf32>
    %271 = arith.mulf %270, %270 : vector<8x32xf32>
    %cst_78 = arith.constant dense<0.000000e+00> : vector<8xf32>
    %272 = vector.multi_reduction <add>, %271, %cst_78 [1] : vector<8x32xf32> to vector<8xf32>
    %273 = vector.shape_cast %272 : vector<8xf32> to vector<8x1xf32>
    %cst_79 = arith.constant 3.200000e+01 : f32
    %274 = vector.broadcast %cst_79 : f32 to vector<8x1xf32>
    %275 = arith.divf %273, %274 : vector<8x1xf32>
    %cst_80 = arith.constant 9.99999997E-7 : f32
    %276 = vector.broadcast %cst_80 : f32 to vector<8x1xf32>
    %277 = arith.addf %275, %276 : vector<8x1xf32>
    %278 = math.rsqrt %277 : vector<8x1xf32>
    %279 = vector.broadcast %278 : vector<8x1xf32> to vector<8x32xf32>
    %280 = arith.mulf %270, %279 : vector<8x32xf32>
    %cst_81 = arith.constant 1.000000e+00 : f32
    %281 = vector.broadcast %cst_81 : f32 to vector<1x32xf32>
    %282 = arith.addf %281, %61 : vector<1x32xf32>
    %283 = vector.broadcast %282 : vector<1x32xf32> to vector<8x32xf32>
    %284 = arith.mulf %280, %283 : vector<8x32xf32>
    %285 = tpu.concatenate %284, %269 in 0 : vector<8x32xf32>, vector<16x32xf32> -> vector<24x32xf32>
    %286 = vector.extract_strided_slice %236 {offsets = [0, 0], sizes = [8, 32], strides = [1, 1]} : vector<8x64xf32> to vector<8x32xf32>
    %287 = vector.extract_strided_slice %234 {offsets = [0, 0], sizes = [16, 32], strides = [1, 1]} : vector<16x64xf32> to vector<16x32xf32>
    %288 = tpu.concatenate %286, %287 in 0 : vector<8x32xf32>, vector<16x32xf32> -> vector<24x32xf32>
    %289 = arith.truncf %254 : vector<32x32xf32> to vector<32x32xbf16>
    %290 = arith.truncf %285 : vector<24x32xf32> to vector<24x32xbf16>
    %291 = tpu.transpose %290, [1, 0] : vector<24x32xbf16> -> vector<32x24xbf16>
    %cst_82 = arith.constant dense<0.000000e+00> : vector<32x24xf32>
    %292 = tpu.matmul %289, %291, %cst_82 {dimension_numbers = #tpu.dot_dimension_numbers<[1], [0], [0], [1], [0, 0, 1, 1], [], []>} : vector<32x32xbf16>, vector<32x24xbf16>, vector<32x24xf32> -> vector<32x24xf32>
    %cst_83 = arith.constant 0.176776692 : f32
    %293 = vector.broadcast %cst_83 : f32 to vector<32x24xf32>
    %294 = arith.mulf %292, %293 : vector<32x24xf32>
    %cst_84 = arith.constant dense<0xFF800000> : vector<32xf32>
    %295 = vector.multi_reduction <maximumf>, %294, %cst_84 [1] : vector<32x24xf32> to vector<32xf32>
    %296 = vector.shape_cast %295 : vector<32xf32> to vector<32x1xf32>
    %297 = vector.broadcast %296 : vector<32x1xf32> to vector<32x24xf32>
    %298 = arith.subf %294, %297 : vector<32x24xf32>
    %299 = math.exp %298 : vector<32x24xf32>
    %cst_85 = arith.constant dense<0.000000e+00> : vector<32xf32>
    %300 = vector.multi_reduction <add>, %299, %cst_85 [1] : vector<32x24xf32> to vector<32xf32>
    %301 = vector.shape_cast %300 : vector<32xf32> to vector<32x1xf32>
    %302 = tpu.reciprocal %301 {approx = true} : vector<32x1xf32> -> vector<32x1xf32>
    %303 = vector.broadcast %302 : vector<32x1xf32> to vector<32x24xf32>
    %304 = arith.mulf %299, %303 : vector<32x24xf32>
    %305 = arith.truncf %304 : vector<32x24xf32> to vector<32x24xbf16>
    %306 = arith.truncf %288 : vector<24x32xf32> to vector<24x32xbf16>
    %cst_86 = arith.constant dense<0.000000e+00> : vector<32x32xf32>
    %307 = tpu.matmul %305, %306, %cst_86 {dimension_numbers = #tpu.dot_dimension_numbers<[1], [0], [0], [1], [0, 0, 1, 1], [], []>} : vector<32x24xbf16>, vector<24x32xbf16>, vector<32x32xf32> -> vector<32x32xf32>
    %308 = vector.extract_strided_slice %307 {offsets = [0, 0], sizes = [16, 32], strides = [1, 1]} : vector<32x32xf32> to vector<16x32xf32>
    %309 = arith.truncf %308 : vector<16x32xf32> to vector<16x32xbf16>
    %310 = vector.extract_strided_slice %62 {offsets = [0, 0], sizes = [32, 128], strides = [1, 1]} : vector<128x128xbf16> to vector<32x128xbf16>
    %cst_87 = arith.constant dense<0.000000e+00> : vector<16x128xf32>
    %311 = tpu.matmul %309, %310, %cst_87 {dimension_numbers = #tpu.dot_dimension_numbers<[1], [0], [0], [1], [0, 0, 1, 1], [], []>} : vector<16x32xbf16>, vector<32x128xbf16>, vector<16x128xf32> -> vector<16x128xf32>
    %312 = arith.addf %237, %311 : vector<16x128xf32>
    %313 = vector.extract_strided_slice %307 {offsets = [16, 0], sizes = [16, 32], strides = [1, 1]} : vector<32x32xf32> to vector<16x32xf32>
    %314 = arith.truncf %313 : vector<16x32xf32> to vector<16x32xbf16>
    %315 = vector.extract_strided_slice %62 {offsets = [32, 0], sizes = [32, 128], strides = [1, 1]} : vector<128x128xbf16> to vector<32x128xbf16>
    %cst_88 = arith.constant dense<0.000000e+00> : vector<16x128xf32>
    %316 = tpu.matmul %314, %315, %cst_88 {dimension_numbers = #tpu.dot_dimension_numbers<[1], [0], [0], [1], [0, 0, 1, 1], [], []>} : vector<16x32xbf16>, vector<32x128xbf16>, vector<16x128xf32> -> vector<16x128xf32>
    %317 = arith.addf %312, %316 : vector<16x128xf32>
    %318 = vector.extract_strided_slice %232 {offsets = [0, 64], sizes = [16, 32], strides = [1, 1]} : vector<16x128xf32> to vector<16x32xf32>
    %319 = vector.extract_strided_slice %232 {offsets = [0, 96], sizes = [16, 32], strides = [1, 1]} : vector<16x128xf32> to vector<16x32xf32>
    %320 = tpu.concatenate %318, %319 in 0 : vector<16x32xf32>, vector<16x32xf32> -> vector<32x32xf32>
    %321 = arith.mulf %320, %320 : vector<32x32xf32>
    %cst_89 = arith.constant dense<0.000000e+00> : vector<32xf32>
    %322 = vector.multi_reduction <add>, %321, %cst_89 [1] : vector<32x32xf32> to vector<32xf32>
    %323 = vector.shape_cast %322 : vector<32xf32> to vector<32x1xf32>
    %cst_90 = arith.constant 3.200000e+01 : f32
    %324 = vector.broadcast %cst_90 : f32 to vector<32x1xf32>
    %325 = arith.divf %323, %324 : vector<32x1xf32>
    %cst_91 = arith.constant 9.99999997E-7 : f32
    %326 = vector.broadcast %cst_91 : f32 to vector<32x1xf32>
    %327 = arith.addf %325, %326 : vector<32x1xf32>
    %328 = math.rsqrt %327 : vector<32x1xf32>
    %329 = vector.broadcast %328 : vector<32x1xf32> to vector<32x32xf32>
    %330 = arith.mulf %320, %329 : vector<32x32xf32>
    %cst_92 = arith.constant 1.000000e+00 : f32
    %331 = vector.broadcast %cst_92 : f32 to vector<1x32xf32>
    %332 = arith.addf %331, %60 : vector<1x32xf32>
    %333 = vector.broadcast %332 : vector<1x32xf32> to vector<32x32xf32>
    %334 = arith.mulf %330, %333 : vector<32x32xf32>
    %335 = vector.extract_strided_slice %233 {offsets = [0, 32], sizes = [16, 32], strides = [1, 1]} : vector<16x64xf32> to vector<16x32xf32>
    %336 = arith.mulf %335, %335 : vector<16x32xf32>
    %cst_93 = arith.constant dense<0.000000e+00> : vector<16xf32>
    %337 = vector.multi_reduction <add>, %336, %cst_93 [1] : vector<16x32xf32> to vector<16xf32>
    %338 = vector.shape_cast %337 : vector<16xf32> to vector<16x1xf32>
    %cst_94 = arith.constant 3.200000e+01 : f32
    %339 = vector.broadcast %cst_94 : f32 to vector<16x1xf32>
    %340 = arith.divf %338, %339 : vector<16x1xf32>
    %cst_95 = arith.constant 9.99999997E-7 : f32
    %341 = vector.broadcast %cst_95 : f32 to vector<16x1xf32>
    %342 = arith.addf %340, %341 : vector<16x1xf32>
    %343 = math.rsqrt %342 : vector<16x1xf32>
    %344 = vector.broadcast %343 : vector<16x1xf32> to vector<16x32xf32>
    %345 = arith.mulf %335, %344 : vector<16x32xf32>
    %cst_96 = arith.constant 1.000000e+00 : f32
    %346 = vector.broadcast %cst_96 : f32 to vector<1x32xf32>
    %347 = arith.addf %346, %61 : vector<1x32xf32>
    %348 = vector.broadcast %347 : vector<1x32xf32> to vector<16x32xf32>
    %349 = arith.mulf %345, %348 : vector<16x32xf32>
    %350 = vector.extract_strided_slice %235 {offsets = [0, 32], sizes = [8, 32], strides = [1, 1]} : vector<8x64xf32> to vector<8x32xf32>
    %351 = arith.mulf %350, %350 : vector<8x32xf32>
    %cst_97 = arith.constant dense<0.000000e+00> : vector<8xf32>
    %352 = vector.multi_reduction <add>, %351, %cst_97 [1] : vector<8x32xf32> to vector<8xf32>
    %353 = vector.shape_cast %352 : vector<8xf32> to vector<8x1xf32>
    %cst_98 = arith.constant 3.200000e+01 : f32
    %354 = vector.broadcast %cst_98 : f32 to vector<8x1xf32>
    %355 = arith.divf %353, %354 : vector<8x1xf32>
    %cst_99 = arith.constant 9.99999997E-7 : f32
    %356 = vector.broadcast %cst_99 : f32 to vector<8x1xf32>
    %357 = arith.addf %355, %356 : vector<8x1xf32>
    %358 = math.rsqrt %357 : vector<8x1xf32>
    %359 = vector.broadcast %358 : vector<8x1xf32> to vector<8x32xf32>
    %360 = arith.mulf %350, %359 : vector<8x32xf32>
    %cst_100 = arith.constant 1.000000e+00 : f32
    %361 = vector.broadcast %cst_100 : f32 to vector<1x32xf32>
    %362 = arith.addf %361, %61 : vector<1x32xf32>
    %363 = vector.broadcast %362 : vector<1x32xf32> to vector<8x32xf32>
    %364 = arith.mulf %360, %363 : vector<8x32xf32>
    %365 = tpu.concatenate %364, %349 in 0 : vector<8x32xf32>, vector<16x32xf32> -> vector<24x32xf32>
    %366 = vector.extract_strided_slice %236 {offsets = [0, 32], sizes = [8, 32], strides = [1, 1]} : vector<8x64xf32> to vector<8x32xf32>
    %367 = vector.extract_strided_slice %234 {offsets = [0, 32], sizes = [16, 32], strides = [1, 1]} : vector<16x64xf32> to vector<16x32xf32>
    %368 = tpu.concatenate %366, %367 in 0 : vector<8x32xf32>, vector<16x32xf32> -> vector<24x32xf32>
    %369 = arith.truncf %334 : vector<32x32xf32> to vector<32x32xbf16>
    %370 = arith.truncf %365 : vector<24x32xf32> to vector<24x32xbf16>
    %371 = tpu.transpose %370, [1, 0] : vector<24x32xbf16> -> vector<32x24xbf16>
    %cst_101 = arith.constant dense<0.000000e+00> : vector<32x24xf32>
    %372 = tpu.matmul %369, %371, %cst_101 {dimension_numbers = #tpu.dot_dimension_numbers<[1], [0], [0], [1], [0, 0, 1, 1], [], []>} : vector<32x32xbf16>, vector<32x24xbf16>, vector<32x24xf32> -> vector<32x24xf32>
    %cst_102 = arith.constant 0.176776692 : f32
    %373 = vector.broadcast %cst_102 : f32 to vector<32x24xf32>
    %374 = arith.mulf %372, %373 : vector<32x24xf32>
    %cst_103 = arith.constant dense<0xFF800000> : vector<32xf32>
    %375 = vector.multi_reduction <maximumf>, %374, %cst_103 [1] : vector<32x24xf32> to vector<32xf32>
    %376 = vector.shape_cast %375 : vector<32xf32> to vector<32x1xf32>
    %377 = vector.broadcast %376 : vector<32x1xf32> to vector<32x24xf32>
    %378 = arith.subf %374, %377 : vector<32x24xf32>
    %379 = math.exp %378 : vector<32x24xf32>
    %cst_104 = arith.constant dense<0.000000e+00> : vector<32xf32>
    %380 = vector.multi_reduction <add>, %379, %cst_104 [1] : vector<32x24xf32> to vector<32xf32>
    %381 = vector.shape_cast %380 : vector<32xf32> to vector<32x1xf32>
    %382 = tpu.reciprocal %381 {approx = true} : vector<32x1xf32> -> vector<32x1xf32>
    %383 = vector.broadcast %382 : vector<32x1xf32> to vector<32x24xf32>
    %384 = arith.mulf %379, %383 : vector<32x24xf32>
    %385 = arith.truncf %384 : vector<32x24xf32> to vector<32x24xbf16>
    %386 = arith.truncf %368 : vector<24x32xf32> to vector<24x32xbf16>
    %cst_105 = arith.constant dense<0.000000e+00> : vector<32x32xf32>
    %387 = tpu.matmul %385, %386, %cst_105 {dimension_numbers = #tpu.dot_dimension_numbers<[1], [0], [0], [1], [0, 0, 1, 1], [], []>} : vector<32x24xbf16>, vector<24x32xbf16>, vector<32x32xf32> -> vector<32x32xf32>
    %388 = vector.extract_strided_slice %387 {offsets = [0, 0], sizes = [16, 32], strides = [1, 1]} : vector<32x32xf32> to vector<16x32xf32>
    %389 = arith.truncf %388 : vector<16x32xf32> to vector<16x32xbf16>
    %390 = vector.extract_strided_slice %62 {offsets = [64, 0], sizes = [32, 128], strides = [1, 1]} : vector<128x128xbf16> to vector<32x128xbf16>
    %cst_106 = arith.constant dense<0.000000e+00> : vector<16x128xf32>
    %391 = tpu.matmul %389, %390, %cst_106 {dimension_numbers = #tpu.dot_dimension_numbers<[1], [0], [0], [1], [0, 0, 1, 1], [], []>} : vector<16x32xbf16>, vector<32x128xbf16>, vector<16x128xf32> -> vector<16x128xf32>
    %392 = arith.addf %317, %391 : vector<16x128xf32>
    %393 = vector.extract_strided_slice %387 {offsets = [16, 0], sizes = [16, 32], strides = [1, 1]} : vector<32x32xf32> to vector<16x32xf32>
    %394 = arith.truncf %393 : vector<16x32xf32> to vector<16x32xbf16>
    %395 = vector.extract_strided_slice %62 {offsets = [96, 0], sizes = [32, 128], strides = [1, 1]} : vector<128x128xbf16> to vector<32x128xbf16>
    %cst_107 = arith.constant dense<0.000000e+00> : vector<16x128xf32>
    %396 = tpu.matmul %394, %395, %cst_107 {dimension_numbers = #tpu.dot_dimension_numbers<[1], [0], [0], [1], [0, 0, 1, 1], [], []>} : vector<16x32xbf16>, vector<32x128xbf16>, vector<16x128xf32> -> vector<16x128xf32>
    %397 = arith.addf %392, %396 : vector<16x128xf32>
    %398 = vector.extract_strided_slice %14 {offsets = [1, 256], sizes = [1, 128], strides = [1, 1]} : vector<2x768xf32> to vector<1x128xf32>
    %399 = vector.broadcast %398 : vector<1x128xf32> to vector<16x128xf32>
    %400 = arith.mulf %399, %397 : vector<16x128xf32>
    %401 = tpu.concatenate %231, %400 in 0 : vector<16x128xf32>, vector<16x128xf32> -> vector<32x128xf32>
    %402 = arith.addf %0, %401 : vector<32x128xf32>
    %c0_108 = arith.constant 0 : index
    %c0_109 = arith.constant 0 : index
    %403 = vector.load %arg12[%c0_108, %c0_109] : memref<1x128xf32, #tpu.memory_space<vmem>>, vector<1x128xf32>
    %404 = arith.mulf %402, %402 : vector<32x128xf32>
    %cst_110 = arith.constant dense<0.000000e+00> : vector<32xf32>
    %405 = vector.multi_reduction <add>, %404, %cst_110 [1] : vector<32x128xf32> to vector<32xf32>
    %406 = vector.shape_cast %405 : vector<32xf32> to vector<32x1xf32>
    %cst_111 = arith.constant 1.280000e+02 : f32
    %407 = vector.broadcast %cst_111 : f32 to vector<32x1xf32>
    %408 = arith.divf %406, %407 : vector<32x1xf32>
    %cst_112 = arith.constant 9.99999997E-7 : f32
    %409 = vector.broadcast %cst_112 : f32 to vector<32x1xf32>
    %410 = arith.addf %408, %409 : vector<32x1xf32>
    %411 = math.rsqrt %410 : vector<32x1xf32>
    %412 = vector.broadcast %411 : vector<32x1xf32> to vector<32x128xf32>
    %413 = arith.mulf %402, %412 : vector<32x128xf32>
    %cst_113 = arith.constant 1.000000e+00 : f32
    %414 = vector.broadcast %cst_113 : f32 to vector<1x128xf32>
    %415 = arith.addf %414, %403 : vector<1x128xf32>
    %416 = vector.broadcast %415 : vector<1x128xf32> to vector<32x128xf32>
    %417 = arith.mulf %413, %416 : vector<32x128xf32>
    %418 = vector.extract_strided_slice %417 {offsets = [0, 0], sizes = [16, 128], strides = [1, 1]} : vector<32x128xf32> to vector<16x128xf32>
    %419 = vector.extract_strided_slice %14 {offsets = [0, 512], sizes = [1, 128], strides = [1, 1]} : vector<2x768xf32> to vector<1x128xf32>
    %cst_114 = arith.constant 1.000000e+00 : f32
    %420 = vector.broadcast %cst_114 : f32 to vector<1x128xf32>
    %421 = arith.addf %420, %419 : vector<1x128xf32>
    %422 = vector.broadcast %421 : vector<1x128xf32> to vector<16x128xf32>
    %423 = arith.mulf %418, %422 : vector<16x128xf32>
    %424 = vector.extract_strided_slice %14 {offsets = [0, 384], sizes = [1, 128], strides = [1, 1]} : vector<2x768xf32> to vector<1x128xf32>
    %425 = vector.broadcast %424 : vector<1x128xf32> to vector<16x128xf32>
    %426 = arith.addf %423, %425 : vector<16x128xf32>
    %427 = vector.extract_strided_slice %417 {offsets = [16, 0], sizes = [16, 128], strides = [1, 1]} : vector<32x128xf32> to vector<16x128xf32>
    %428 = vector.extract_strided_slice %14 {offsets = [1, 512], sizes = [1, 128], strides = [1, 1]} : vector<2x768xf32> to vector<1x128xf32>
    %cst_115 = arith.constant 1.000000e+00 : f32
    %429 = vector.broadcast %cst_115 : f32 to vector<1x128xf32>
    %430 = arith.addf %429, %428 : vector<1x128xf32>
    %431 = vector.broadcast %430 : vector<1x128xf32> to vector<16x128xf32>
    %432 = arith.mulf %427, %431 : vector<16x128xf32>
    %433 = vector.extract_strided_slice %14 {offsets = [1, 384], sizes = [1, 128], strides = [1, 1]} : vector<2x768xf32> to vector<1x128xf32>
    %434 = vector.broadcast %433 : vector<1x128xf32> to vector<16x128xf32>
    %435 = arith.addf %432, %434 : vector<16x128xf32>
    %436 = tpu.concatenate %426, %435 in 0 : vector<16x128xf32>, vector<16x128xf32> -> vector<32x128xf32>
    %437 = arith.truncf %436 : vector<32x128xf32> to vector<32x128xbf16>
    %c0_116 = arith.constant 0 : index
    %c0_117 = arith.constant 0 : index
    %438 = vector.load %arg13[%c0_116, %c0_117] : memref<128x512xbf16, #tpu.memory_space<vmem>>, vector<128x512xbf16>
    %cst_118 = arith.constant dense<0.000000e+00> : vector<32x512xf32>
    %439 = tpu.matmul %437, %438, %cst_118 {dimension_numbers = #tpu.dot_dimension_numbers<[1], [0], [0], [1], [0, 0, 1, 1], [], []>} : vector<32x128xbf16>, vector<128x512xbf16>, vector<32x512xf32> -> vector<32x512xf32>
    %440 = vector.extract_strided_slice %439 {offsets = [0, 0], sizes = [32, 256], strides = [1, 1]} : vector<32x512xf32> to vector<32x256xf32>
    %cst_119 = arith.constant 5.000000e-01 : f32
    %441 = vector.broadcast %cst_119 : f32 to vector<32x256xf32>
    %442 = arith.mulf %441, %440 : vector<32x256xf32>
    %cst_120 = arith.constant 4.471500e-02 : f32
    %443 = vector.broadcast %cst_120 : f32 to vector<32x256xf32>
    %444 = arith.mulf %443, %440 : vector<32x256xf32>
    %445 = arith.mulf %444, %440 : vector<32x256xf32>
    %446 = arith.mulf %445, %440 : vector<32x256xf32>
    %447 = arith.addf %440, %446 : vector<32x256xf32>
    %cst_121 = arith.constant 0.797884583 : f32
    %448 = vector.broadcast %cst_121 : f32 to vector<32x256xf32>
    %449 = arith.mulf %448, %447 : vector<32x256xf32>
    %450 = math.tanh %449 : vector<32x256xf32>
    %cst_122 = arith.constant 1.000000e+00 : f32
    %451 = vector.broadcast %cst_122 : f32 to vector<32x256xf32>
    %452 = arith.addf %451, %450 : vector<32x256xf32>
    %453 = arith.mulf %442, %452 : vector<32x256xf32>
    %454 = vector.extract_strided_slice %439 {offsets = [0, 256], sizes = [32, 256], strides = [1, 1]} : vector<32x512xf32> to vector<32x256xf32>
    %455 = arith.mulf %453, %454 : vector<32x256xf32>
    %456 = arith.truncf %455 : vector<32x256xf32> to vector<32x256xbf16>
    %c0_123 = arith.constant 0 : index
    %c0_124 = arith.constant 0 : index
    %457 = vector.load %arg14[%c0_123, %c0_124] : memref<256x128xbf16, #tpu.memory_space<vmem>>, vector<256x128xbf16>
    %cst_125 = arith.constant dense<0.000000e+00> : vector<32x128xf32>
    %458 = tpu.matmul %456, %457, %cst_125 {dimension_numbers = #tpu.dot_dimension_numbers<[1], [0], [0], [1], [0, 0, 1, 1], [], []>} : vector<32x256xbf16>, vector<256x128xbf16>, vector<32x128xf32> -> vector<32x128xf32>
    %459 = vector.extract_strided_slice %14 {offsets = [0, 640], sizes = [1, 128], strides = [1, 1]} : vector<2x768xf32> to vector<1x128xf32>
    %460 = vector.extract_strided_slice %458 {offsets = [0, 0], sizes = [16, 128], strides = [1, 1]} : vector<32x128xf32> to vector<16x128xf32>
    %461 = vector.broadcast %459 : vector<1x128xf32> to vector<16x128xf32>
    %462 = arith.mulf %461, %460 : vector<16x128xf32>
    %463 = vector.extract_strided_slice %14 {offsets = [1, 640], sizes = [1, 128], strides = [1, 1]} : vector<2x768xf32> to vector<1x128xf32>
    %464 = vector.extract_strided_slice %458 {offsets = [16, 0], sizes = [16, 128], strides = [1, 1]} : vector<32x128xf32> to vector<16x128xf32>
    %465 = vector.broadcast %463 : vector<1x128xf32> to vector<16x128xf32>
    %466 = arith.mulf %465, %464 : vector<16x128xf32>
    %467 = tpu.concatenate %462, %466 in 0 : vector<16x128xf32>, vector<16x128xf32> -> vector<32x128xf32>
    %468 = arith.addf %402, %467 : vector<32x128xf32>
    %c0_126 = arith.constant 0 : index
    %c0_127 = arith.constant 0 : index
    %469 = vector.load %arg15[%c0_126, %c0_127] : memref<32x128xf32, #tpu.memory_space<vmem>>, vector<32x128xf32>
    tpu.vector_store %arg15[%c0_126, %c0_127], %468 {strides = array<i32>} : memref<32x128xf32, #tpu.memory_space<vmem>>, vector<32x128xf32>,
    return
  }
  func.func @transform_0(%arg0: i32) -> (i32, i32) {
    %c0_i32 = arith.constant 0 : i32
    %c0_i32_0 = arith.constant 0 : i32
    %c0_i32_1 = arith.constant 0 : i32
    return %c0_i32, %c0_i32_0 : i32, i32
  }
  func.func @transform_1(%arg0: i32) -> (i32, i32) {
    %c0_i32 = arith.constant 0 : i32
    %c0_i32_0 = arith.constant 0 : i32
    %c0_i32_1 = arith.constant 0 : i32
    return %c0_i32, %c0_i32_0 : i32, i32
  }
  func.func @transform_2(%arg0: i32) -> (i32, i32) {
    %c0_i32 = arith.constant 0 : i32
    %c0_i32_0 = arith.constant 0 : i32
    %c0_i32_1 = arith.constant 0 : i32
    return %c0_i32, %c0_i32_0 : i32, i32
  }
  func.func @transform_3(%arg0: i32) -> (i32, i32) {
    %c0_i32 = arith.constant 0 : i32
    %c0_i32_0 = arith.constant 0 : i32
    %c0_i32_1 = arith.constant 0 : i32
    return %c0_i32, %c0_i32_0 : i32, i32
  }
  func.func @transform_4(%arg0: i32) -> (i32, i32) {
    %c0_i32 = arith.constant 0 : i32
    %c0_i32_0 = arith.constant 0 : i32
    %c0_i32_1 = arith.constant 0 : i32
    return %c0_i32, %c0_i32_0 : i32, i32
  }
  func.func @transform_5(%arg0: i32) -> (i32, i32) {
    %c0_i32 = arith.constant 0 : i32
    %c0_i32_0 = arith.constant 0 : i32
    %c0_i32_1 = arith.constant 0 : i32
    return %c0_i32, %c0_i32_0 : i32, i32
  }
  func.func @transform_6(%arg0: i32) -> (i32, i32) {
    %c0_i32 = arith.constant 0 : i32
    %c0_i32_0 = arith.constant 0 : i32
    %c0_i32_1 = arith.constant 0 : i32
    return %c0_i32, %c0_i32_0 : i32, i32
  }
  func.func @transform_7(%arg0: i32) -> (i32, i32) {
    %c0_i32 = arith.constant 0 : i32
    %c0_i32_0 = arith.constant 0 : i32
    %c0_i32_1 = arith.constant 0 : i32
    return %c0_i32, %c0_i32_0 : i32, i32
  }
  func.func @transform_8(%arg0: i32) -> (i32, i32) {
    %c0_i32 = arith.constant 0 : i32
    %c0_i32_0 = arith.constant 0 : i32
    %c0_i32_1 = arith.constant 0 : i32
    return %c0_i32, %c0_i32_0 : i32, i32
  }
  func.func @transform_9(%arg0: i32) -> (i32, i32) {
    %c0_i32 = arith.constant 0 : i32
    %c0_i32_0 = arith.constant 0 : i32
    %c0_i32_1 = arith.constant 0 : i32
    return %c0_i32, %c0_i32_0 : i32, i32
  }
  func.func @transform_10(%arg0: i32) -> (i32, i32) {
    %c0_i32 = arith.constant 0 : i32
    %c0_i32_0 = arith.constant 0 : i32
    %c0_i32_1 = arith.constant 0 : i32
    return %c0_i32, %c0_i32_0 : i32, i32
  }
  func.func @transform_11(%arg0: i32) -> (i32, i32) {
    %c0_i32 = arith.constant 0 : i32
    %c0_i32_0 = arith.constant 0 : i32
    %c0_i32_1 = arith.constant 0 : i32
    return %c0_i32, %c0_i32_0 : i32, i32
  }
  func.func @transform_12(%arg0: i32) -> (i32, i32) {
    %c0_i32 = arith.constant 0 : i32
    %c0_i32_0 = arith.constant 0 : i32
    %c0_i32_1 = arith.constant 0 : i32
    return %c0_i32, %c0_i32_0 : i32, i32
  }
  func.func @transform_13(%arg0: i32) -> (i32, i32) {
    %c0_i32 = arith.constant 0 : i32
    %c0_i32_0 = arith.constant 0 : i32
    %c0_i32_1 = arith.constant 0 : i32
    return %c0_i32, %c0_i32_0 : i32, i32
  }
  func.func @transform_14(%arg0: i32) -> (i32, i32) {
    %c0_i32 = arith.constant 0 : i32
    %c0_i32_0 = arith.constant 0 : i32
    %c0_i32_1 = arith.constant 0 : i32
    return %c0_i32, %c0_i32_0 : i32, i32
  }
}

</mosaic_0001>

<llo_original>
// kernel: dit_layer.1
$region0: #{dit_layer.1}
  #allocation0 [shape = 'u32[]', space=smem, size = 0x4, offset = 0x4, fixed_abs, tag = 'smem constant byte address 0x4 - core index']
  #allocation1 [shape = 'u32[144,128]{1,0:T(1,128)}', space=vmem, size = 0x12000, scoped, tag = 'internal scratch']
  %s0 = inlined_call_operand.hbm [shape: f32[32,128], index: 0, kind: input, shape index: {}]
  %s1 = inlined_call_operand.vmem [shape: f32[2,128], index: 1, kind: input, shape index: {}]
  %s2 = inlined_call_operand.hbm [shape: f32[16,128], index: 2, kind: input, shape index: {}]
  %s3 = inlined_call_operand.hbm [shape: bf16[128,768], index: 3, kind: input, shape index: {}]
  %s4 = inlined_call_operand.vmem [shape: f32[1,768], index: 4, kind: input, shape index: {}]
  %s5 = inlined_call_operand.vmem [shape: f32[1,128], index: 5, kind: input, shape index: {}]
  %s6 = inlined_call_operand.vmem [shape: f32[1,32], index: 6, kind: input, shape index: {}]
  %s7 = inlined_call_operand.vmem [shape: f32[1,32], index: 7, kind: input, shape index: {}]
  %s8 = inlined_call_operand.hbm [shape: bf16[128,256], index: 8, kind: input, shape index: {}]
  %s9 = inlined_call_operand.hbm [shape: bf16[128,128], index: 9, kind: input, shape index: {}]
  %s10 = inlined_call_operand.hbm [shape: bf16[128,128], index: 10, kind: input, shape index: {}]
  %s11 = inlined_call_operand.vmem [shape: f32[1,128], index: 11, kind: input, shape index: {}]
  %s12 = inlined_call_operand.hbm [shape: bf16[128,512], index: 12, kind: input, shape index: {}]
  %s13 = inlined_call_operand.hbm [shape: bf16[256,128], index: 13, kind: input, shape index: {}]
  %s14 = inlined_call_operand.hbm [shape: f32[32,128], index: 14, kind: output, shape index: {}]
  %s15 = sld [smem:[#allocation0]]
  $region98: #{dit_layer.1} parent=0
    _
  %s17 = ssub.s32 1, %s15
  %s18 = scalar_select 0, %s17, %s15
  $region1: #{dit_layer.1} parent=0
    #allocation2 [shape = 'u8[16384]{0}', space=vmem, size = 0x4000, scoped, tag = 'input window, operand 0, single buffered']
    #allocation3 [shape = 's32[1]{0}', space=sflag, size = 0x4, scoped, tag = 'scoped memory for dit_layer.1']
    #allocation4 [shape = 's32[1]{0}', space=sflag, size = 0x4, scoped, tag = 'scoped memory for dit_layer.1']
    #allocation5 [shape = 'u8[8192]{0}', space=vmem, size = 0x2000, scoped, tag = 'input window, operand 2, single buffered']
    #allocation6 [shape = 's32[1]{0}', space=sflag, size = 0x4, scoped, tag = 'scoped memory for dit_layer.1']
    #allocation7 [shape = 'u8[196608]{0}', space=vmem, size = 0x30000, scoped, tag = 'input window, operand 3, single buffered']
    #allocation8 [shape = 'u8[65536]{0}', space=vmem, size = 0x10000, scoped, tag = 'input window, operand 8, single buffered']
    #allocation9 [shape = 's32[1]{0}', space=sflag, size = 0x4, scoped, tag = 'scoped memory for dit_layer.1']
    #allocation10 [shape = 'u8[32768]{0}', space=vmem, size = 0x8000, scoped, tag = 'input window, operand 9, single buffered']
    #allocation11 [shape = 'u8[32768]{0}', space=vmem, size = 0x8000, scoped, tag = 'input window, operand 10, single buffered']
    #allocation12 [shape = 's32[1]{0}', space=sflag, size = 0x4, scoped, tag = 'scoped memory for dit_layer.1']
    #allocation13 [shape = 'u8[131072]{0}', space=vmem, size = 0x20000, scoped, tag = 'input window, operand 12, single buffered']
    #allocation14 [shape = 'u8[65536]{0}', space=vmem, size = 0x10000, scoped, tag = 'input window, operand 13, single buffered']
    #allocation15 [shape = 's32[1]{0}', space=sflag, size = 0x4, scoped, tag = 'scoped memory for dit_layer.1']
    #allocation16 [shape = 'u8[16384]{0}', space=vmem, size = 0x4000, scoped, tag = 'output window, operand 0, single buffered']
    %19 = vsyncpa [#allocation3], 0
    %20 = vsyncpa [#allocation6], 0
    %21 = vsyncpa [#allocation9], 0
    %22 = vsyncpa [#allocation12], 0
    %23 = vsyncpa [#allocation15], 0
    %24 = vsyncpa [#allocation4], 0
    // Predicated region
    $region2: #{dit_layer.1} parent=1 // pred_check
      _
    $region3: #{dit_layer.1} parent=1 // pred_check_branch
      %26 = sbr.rel (0) target = $region5
    $region4: #{dit_layer.1} parent=1 // pred_region
      %s28 = ssub.s32 512, 512
      %29 = vsyncadd [#allocation3], %s28
      %s30 = sshll.u32 [#allocation2], 4
      %s31 = int_to_ptr.vmem [resolvable:$true] %s30
      %36 = dma.hbm_to_vmem [thread:$0]  %s0, 512, %s31, [#allocation3], 128, 128, 8
    $region5: #{dit_layer.1} parent=1 // pred_fallthru
      _
    // Predicated region
    $region6: #{dit_layer.1} parent=1 // pred_check
      _
    $region7: #{dit_layer.1} parent=1 // pred_check_branch
      %38 = sbr.rel (0) target = $region9
    $region8: #{dit_layer.1} parent=1 // pred_region
      _
    $region9: #{dit_layer.1} parent=1 // pred_fallthru
      _
    // Predicated region
    $region10: #{dit_layer.1} parent=1 // pred_check
      _
    $region11: #{dit_layer.1} parent=1 // pred_check_branch
      %40 = sbr.rel (0) target = $region13
    $region12: #{dit_layer.1} parent=1 // pred_region
      %s42 = ssub.s32 256, 256
      %43 = vsyncadd [#allocation6], %s42
      %s44 = sshll.u32 [#allocation5], 4
      %s45 = int_to_ptr.vmem [resolvable:$true] %s44
      %50 = dma.hbm_to_vmem [thread:$0]  %s2, 256, %s45, [#allocation6], 128, 128, 8
    $region13: #{dit_layer.1} parent=1 // pred_fallthru
      _
    // Predicated region
    $region14: #{dit_layer.1} parent=1 // pred_check
      _
    $region15: #{dit_layer.1} parent=1 // pred_check_branch
      %52 = sbr.rel (0) target = $region17
    $region16: #{dit_layer.1} parent=1 // pred_region
      %s54 = ssub.s32 6144, 6144
      %55 = vsyncadd [#allocation6], %s54
      %s56 = sshll.u32 [#allocation7], 4
      %s57 = int_to_ptr.vmem [resolvable:$true] %s56
      %62 = dma.hbm_to_vmem [thread:$0]  %s3, 6144, %s57, [#allocation6], 384, 384, 24
    $region17: #{dit_layer.1} parent=1 // pred_fallthru
      _
    // Predicated region
    $region18: #{dit_layer.1} parent=1 // pred_check
      _
    $region19: #{dit_layer.1} parent=1 // pred_check_branch
      %64 = sbr.rel (0) target = $region21
    $region20: #{dit_layer.1} parent=1 // pred_region
      _
    $region21: #{dit_layer.1} parent=1 // pred_fallthru
      _
    // Predicated region
    $region22: #{dit_layer.1} parent=1 // pred_check
      _
    $region23: #{dit_layer.1} parent=1 // pred_check_branch
      %66 = sbr.rel (0) target = $region25
    $region24: #{dit_layer.1} parent=1 // pred_region
      _
    $region25: #{dit_layer.1} parent=1 // pred_fallthru
      _
    // Predicated region
    $region26: #{dit_layer.1} parent=1 // pred_check
      _
    $region27: #{dit_layer.1} parent=1 // pred_check_branch
      %68 = sbr.rel (0) target = $region29
    $region28: #{dit_layer.1} parent=1 // pred_region
      _
    $region29: #{dit_layer.1} parent=1 // pred_fallthru
      _
    // Predicated region
    $region30: #{dit_layer.1} parent=1 // pred_check
      _
    $region31: #{dit_layer.1} parent=1 // pred_check_branch
      %70 = sbr.rel (0) target = $region33
    $region32: #{dit_layer.1} parent=1 // pred_region
      _
    $region33: #{dit_layer.1} parent=1 // pred_fallthru
      _
    // Predicated region
    $region34: #{dit_layer.1} parent=1 // pred_check
      _
    $region35: #{dit_layer.1} parent=1 // pred_check_branch
      %72 = sbr.rel (0) target = $region37
    $region36: #{dit_layer.1} parent=1 // pred_region
      %s74 = ssub.s32 2048, 2048
      %75 = vsyncadd [#allocation9], %s74
      %s76 = sshll.u32 [#allocation8], 4
      %s77 = int_to_ptr.vmem [resolvable:$true] %s76
      %82 = dma.hbm_to_vmem [thread:$0]  %s8, 2048, %s77, [#allocation9], 128, 128, 8
    $region37: #{dit_layer.1} parent=1 // pred_fallthru
      _
    // Predicated region
    $region38: #{dit_layer.1} parent=1 // pred_check
      _
    $region39: #{dit_layer.1} parent=1 // pred_check_branch
      %84 = sbr.rel (0) target = $region41
    $region40: #{dit_layer.1} parent=1 // pred_region
      %s86 = ssub.s32 1024, 1024
      %87 = vsyncadd [#allocation9], %s86
      %s88 = sshll.u32 [#allocation10], 4
      %s89 = int_to_ptr.vmem [resolvable:$true] %s88
      %94 = dma.hbm_to_vmem [thread:$0]  %s9, 1024, %s89, [#allocation9], 64, 64, 4
    $region41: #{dit_layer.1} parent=1 // pred_fallthru
      _
    // Predicated region
    $region42: #{dit_layer.1} parent=1 // pred_check
      _
    $region43: #{dit_layer.1} parent=1 // pred_check_branch
      %96 = sbr.rel (0) target = $region45
    $region44: #{dit_layer.1} parent=1 // pred_region
      %s98 = ssub.s32 1024, 1024
      %99 = vsyncadd [#allocation12], %s98
      %s100 = sshll.u32 [#allocation11], 4
      %s101 = int_to_ptr.vmem [resolvable:$true] %s100
      %106 = dma.hbm_to_vmem [thread:$0]  %s10, 1024, %s101, [#allocation12], 64, 64, 4
    $region45: #{dit_layer.1} parent=1 // pred_fallthru
      _
    // Predicated region
    $region46: #{dit_layer.1} parent=1 // pred_check
      _
    $region47: #{dit_layer.1} parent=1 // pred_check_branch
      %108 = sbr.rel (0) target = $region49
    $region48: #{dit_layer.1} parent=1 // pred_region
      _
    $region49: #{dit_layer.1} parent=1 // pred_fallthru
      _
    // Predicated region
    $region50: #{dit_layer.1} parent=1 // pred_check
      _
    $region51: #{dit_layer.1} parent=1 // pred_check_branch
      %110 = sbr.rel (0) target = $region53
    $region52: #{dit_layer.1} parent=1 // pred_region
      %s112 = ssub.s32 4096, 4096
      %113 = vsyncadd [#allocation12], %s112
      %s114 = sshll.u32 [#allocation13], 4
      %s115 = int_to_ptr.vmem [resolvable:$true] %s114
      %120 = dma.hbm_to_vmem [thread:$0]  %s12, 4096, %s115, [#allocation12], 256, 256, 16
    $region53: #{dit_layer.1} parent=1 // pred_fallthru
      _
    // Predicated region
    $region54: #{dit_layer.1} parent=1 // pred_check
      _
    $region55: #{dit_layer.1} parent=1 // pred_check_branch
      %122 = sbr.rel (0) target = $region57
    $region56: #{dit_layer.1} parent=1 // pred_region
      %s124 = ssub.s32 2048, 2048
      %125 = vsyncadd [#allocation15], %s124
      %s126 = sshll.u32 [#allocation14], 4
      %s127 = int_to_ptr.vmem [resolvable:$true] %s126
      %132 = dma.hbm_to_vmem [thread:$0]  %s13, 2048, %s127, [#allocation15], 64, 64, 4
    $region57: #{dit_layer.1} parent=1 // pred_fallthru
      _
    // Predicated region
    $region58: #{dit_layer.1} parent=1 // pred_check
      _
    $region59: #{dit_layer.1} parent=1 // pred_check_branch
      %134 = sbr.rel (0) target = $region61
    $region60: #{dit_layer.1} parent=1 // pred_region
      %135 = dma.done [#allocation3], 512
    $region61: #{dit_layer.1} parent=1 // pred_fallthru
      _
    // Predicated region
    $region62: #{dit_layer.1} parent=1 // pred_check
      _
    $region63: #{dit_layer.1} parent=1 // pred_check_branch
      %137 = sbr.rel (0) target = $region65
    $region64: #{dit_layer.1} parent=1 // pred_region
      %138 = dma.done [#allocation6], 256
    $region65: #{dit_layer.1} parent=1 // pred_fallthru
      _
    // Predicated region
    $region66: #{dit_layer.1} parent=1 // pred_check
      _
    $region67: #{dit_layer.1} parent=1 // pred_check_branch
      %140 = sbr.rel (0) target = $region69
    $region68: #{dit_layer.1} parent=1 // pred_region
      %141 = dma.done [#allocation6], 6144
    $region69: #{dit_layer.1} parent=1 // pred_fallthru
      _
    // Predicated region
    $region70: #{dit_layer.1} parent=1 // pred_check
      _
    $region71: #{dit_layer.1} parent=1 // pred_check_branch
      %143 = sbr.rel (0) target = $region73
    $region72: #{dit_layer.1} parent=1 // pred_region
      %144 = dma.done [#allocation9], 2048
    $region73: #{dit_layer.1} parent=1 // pred_fallthru
      _
    // Predicated region
    $region74: #{dit_layer.1} parent=1 // pred_check
      _
    $region75: #{dit_layer.1} parent=1 // pred_check_branch
      %146 = sbr.rel (0) target = $region77
    $region76: #{dit_layer.1} parent=1 // pred_region
      %147 = dma.done [#allocation9], 1024
    $region77: #{dit_layer.1} parent=1 // pred_fallthru
      _
    // Predicated region
    $region78: #{dit_layer.1} parent=1 // pred_check
      _
    $region79: #{dit_layer.1} parent=1 // pred_check_branch
      %149 = sbr.rel (0) target = $region81
    $region80: #{dit_layer.1} parent=1 // pred_region
      %150 = dma.done [#allocation12], 1024
    $region81: #{dit_layer.1} parent=1 // pred_fallthru
      _
    // Predicated region
    $region82: #{dit_layer.1} parent=1 // pred_check
      _
    $region83: #{dit_layer.1} parent=1 // pred_check_branch
      %152 = sbr.rel (0) target = $region85
    $region84: #{dit_layer.1} parent=1 // pred_region
      %153 = dma.done [#allocation12], 4096
    $region85: #{dit_layer.1} parent=1 // pred_fallthru
      _
    // Predicated region
    $region86: #{dit_layer.1} parent=1 // pred_check
      _
    $region87: #{dit_layer.1} parent=1 // pred_check_branch
      %155 = sbr.rel (0) target = $region89
    $region88: #{dit_layer.1} parent=1 // pred_region
      %156 = dma.done [#allocation15], 2048
    $region89: #{dit_layer.1} parent=1 // pred_fallthru
      _
    %v158 = vld [vmem:[#allocation2] sm:$0xff]
    %v159 = vld [vmem:[#allocation2 + $0x8] sm:$0xff]
    %v160 = vld [vmem:[#allocation2 + $0x10] sm:$0xff]
    %v161 = vld [vmem:[#allocation2 + $0x18] sm:$0xff]
    %v162 = vld [vmem:[#allocation5] sm:$0xff]
    %v163 = vld [vmem:[#allocation5 + $0x8] sm:$0xff]
    %v164 = vld [vmem:[%s1] sm:$0x3]
    %v165 = vxor.u32 %v164, 2147483648
    %v166 = vmul.f32 %v165, 1.442695
    %v167 = vpow.pop %v166
    %v168 = vadd.f32 %v167, 1.0
    %v169 = vrcp.pop %v168
    %v170 = vmul.f32 1.0, %v169
    %v171 = vmul.f32 %v164, %v170
    %v172 = vpack.c.bf16 %v171, %v171
    %v173 = vld [vmem:[#allocation7] sm:$0xff]
    %v174 = vld [vmem:[#allocation7 + $0x8] sm:$0xff]
    %v175 = vld [vmem:[#allocation7 + $0x10] sm:$0xff]
    %v176 = vld [vmem:[#allocation7 + $0x18] sm:$0xff]
    %v177 = vld [vmem:[#allocation7 + $0x20] sm:$0xff]
    %v178 = vld [vmem:[#allocation7 + $0x28] sm:$0xff]
    %v179 = vld [vmem:[#allocation7 + $0x30] sm:$0xff]
    %v180 = vld [vmem:[#allocation7 + $0x38] sm:$0xff]
    %v181 = vld [vmem:[#allocation7 + $0x40] sm:$0xff]
    %v182 = vld [vmem:[#allocation7 + $0x48] sm:$0xff]
    %v183 = vld [vmem:[#allocation7 + $0x50] sm:$0xff]
    %v184 = vld [vmem:[#allocation7 + $0x58] sm:$0xff]
    %v185 = vld [vmem:[#allocation7 + $0x60] sm:$0xff]
    %v186 = vld [vmem:[#allocation7 + $0x68] sm:$0xff]
    %v187 = vld [vmem:[#allocation7 + $0x70] sm:$0xff]
    %v188 = vld [vmem:[#allocation7 + $0x78] sm:$0xff]
    %v189 = vld [vmem:[#allocation7 + $0x80] sm:$0xff]
    %v190 = vld [vmem:[#allocation7 + $0x88] sm:$0xff]
    %v191 = vld [vmem:[#allocation7 + $0x90] sm:$0xff]
    %v192 = vld [vmem:[#allocation7 + $0x98] sm:$0xff]
    %v193 = vld [vmem:[#allocation7 + $0xa0] sm:$0xff]
    %v194 = vld [vmem:[#allocation7 + $0xa8] sm:$0xff]
    %v195 = vld [vmem:[#allocation7 + $0xb0] sm:$0xff]
    %v196 = vld [vmem:[#allocation7 + $0xb8] sm:$0xff]
    %v197 = vld [vmem:[#allocation7 + $0xc0] sm:$0xff]
    %v198 = vld [vmem:[#allocation7 + $0xc8] sm:$0xff]
    %v199 = vld [vmem:[#allocation7 + $0xd0] sm:$0xff]
    %v200 = vld [vmem:[#allocation7 + $0xd8] sm:$0xff]
    %v201 = vld [vmem:[#allocation7 + $0xe0] sm:$0xff]
    %v202 = vld [vmem:[#allocation7 + $0xe8] sm:$0xff]
    %v203 = vld [vmem:[#allocation7 + $0xf0] sm:$0xff]
    %v204 = vld [vmem:[#allocation7 + $0xf8] sm:$0xff]
    %v205 = vld [vmem:[#allocation7 + $0x100] sm:$0xff]
    %v206 = vld [vmem:[#allocation7 + $0x108] sm:$0xff]
    %v207 = vld [vmem:[#allocation7 + $0x110] sm:$0xff]
    %v208 = vld [vmem:[#allocation7 + $0x118] sm:$0xff]
    %v209 = vld [vmem:[#allocation7 + $0x120] sm:$0xff]
    %v210 = vld [vmem:[#allocation7 + $0x128] sm:$0xff]
    %v211 = vld [vmem:[#allocation7 + $0x130] sm:$0xff]
    %v212 = vld [vmem:[#allocation7 + $0x138] sm:$0xff]
    %v213 = vld [vmem:[#allocation7 + $0x140] sm:$0xff]
    %v214 = vld [vmem:[#allocation7 + $0x148] sm:$0xff]
    %v215 = vld [vmem:[#allocation7 + $0x150] sm:$0xff]
    %v216 = vld [vmem:[#allocation7 + $0x158] sm:$0xff]
    %v217 = vld [vmem:[#allocation7 + $0x160] sm:$0xff]
    %v218 = vld [vmem:[#allocation7 + $0x168] sm:$0xff]
    %v219 = vld [vmem:[#allocation7 + $0x170] sm:$0xff]
    %v220 = vld [vmem:[#allocation7 + $0x178] sm:$0xff]
    %v221 = vld [vmem:[%s4] sm:$0x3f]
    %v223 = vlaneseq
    %v224 = vshrl.u32 %v223, 7
    %v225 = vsub.s32 0, %v224
    %v226 = vrot.slane %v221, %v225
    %v227 = vlaneseq
    %v228 = vshrl.u32 %v227, 7
    %v229 = vsub.s32 1, %v228
    %v230 = vrot.slane %v221, %v229
    %v231 = vlaneseq
    %v232 = vshrl.u32 %v231, 7
    %v233 = vsub.s32 2, %v232
    %v234 = vrot.slane %v221, %v233
    %v235 = vlaneseq
    %v236 = vshrl.u32 %v235, 7
    %v237 = vsub.s32 3, %v236
    %v238 = vrot.slane %v221, %v237
    %v239 = vlaneseq
    %v240 = vshrl.u32 %v239, 7
    %v241 = vsub.s32 4, %v240
    %v242 = vrot.slane %v221, %v241
    %v243 = vlaneseq
    %v244 = vshrl.u32 %v243, 7
    %v245 = vsub.s32 5, %v244
    %v246 = vrot.slane %v221, %v245
    %v301 = vunpack.c.l.b16 %v173
    %v302 = vunpack.c.h.b16 %v173
    %v303 = vunpack.c.l.b16 %v174
    %v304 = vunpack.c.h.b16 %v174
    %v305 = vunpack.c.l.b16 %v175
    %v306 = vunpack.c.h.b16 %v175
    %v307 = vunpack.c.l.b16 %v176
    %v308 = vunpack.c.h.b16 %v176
    %v309 = vunpack.c.l.b16 %v177
    %v310 = vunpack.c.h.b16 %v177
    %v311 = vunpack.c.l.b16 %v178
    %v312 = vunpack.c.h.b16 %v178
    %v313 = vunpack.c.l.b16 %v179
    %v314 = vunpack.c.h.b16 %v179
    %v315 = vunpack.c.l.b16 %v180
    %v316 = vunpack.c.h.b16 %v180
    %v317 = vunpack.c.l.b16 %v181
    %v318 = vunpack.c.h.b16 %v181
    %v319 = vunpack.c.l.b16 %v182
    %v320 = vunpack.c.h.b16 %v182
    %v321 = vunpack.c.l.b16 %v183
    %v322 = vunpack.c.h.b16 %v183
    %v323 = vunpack.c.l.b16 %v184
    %v324 = vunpack.c.h.b16 %v184
    %v325 = vunpack.c.l.b16 %v185
    %v326 = vunpack.c.h.b16 %v185
    %v327 = vunpack.c.l.b16 %v186
    %v328 = vunpack.c.h.b16 %v186
    %v329 = vunpack.c.l.b16 %v187
    %v330 = vunpack.c.h.b16 %v187
    %v331 = vunpack.c.l.b16 %v188
    %v332 = vunpack.c.h.b16 %v188
    %v333 = vunpack.c.l.b16 %v189
    %v334 = vunpack.c.h.b16 %v189
    %v335 = vunpack.c.l.b16 %v190
    %v336 = vunpack.c.h.b16 %v190
    %v337 = vunpack.c.l.b16 %v191
    %v338 = vunpack.c.h.b16 %v191
    %v339 = vunpack.c.l.b16 %v192
    %v340 = vunpack.c.h.b16 %v192
    %v341 = vunpack.c.l.b16 %v193
    %v342 = vunpack.c.h.b16 %v193
    %v343 = vunpack.c.l.b16 %v194
    %v344 = vunpack.c.h.b16 %v194
    %v345 = vunpack.c.l.b16 %v195
    %v346 = vunpack.c.h.b16 %v195
    %v347 = vunpack.c.l.b16 %v196
    %v348 = vunpack.c.h.b16 %v196
    %v349 = vunpack.c.l.b16 %v197
    %v350 = vunpack.c.h.b16 %v197
    %v351 = vunpack.c.l.b16 %v198
    %v352 = vunpack.c.h.b16 %v198
    %v353 = vunpack.c.l.b16 %v199
    %v354 = vunpack.c.h.b16 %v199
    %v355 = vunpack.c.l.b16 %v200
    %v356 = vunpack.c.h.b16 %v200
    %v357 = vunpack.c.l.b16 %v201
    %v358 = vunpack.c.h.b16 %v201
    %v359 = vunpack.c.l.b16 %v202
    %v360 = vunpack.c.h.b16 %v202
    %v361 = vunpack.c.l.b16 %v203
    %v362 = vunpack.c.h.b16 %v203
    %v363 = vunpack.c.l.b16 %v204
    %v364 = vunpack.c.h.b16 %v204
    %v365 = vunpack.c.l.b16 %v205
    %v366 = vunpack.c.h.b16 %v205
    %v367 = vunpack.c.l.b16 %v206
    %v368 = vunpack.c.h.b16 %v206
    %v369 = vunpack.c.l.b16 %v207
    %v370 = vunpack.c.h.b16 %v207
    %v371 = vunpack.c.l.b16 %v208
    %v372 = vunpack.c.h.b16 %v208
    %v373 = vunpack.c.l.b16 %v209
    %v374 = vunpack.c.h.b16 %v209
    %v375 = vunpack.c.l.b16 %v210
    %v376 = vunpack.c.h.b16 %v210
    %v377 = vunpack.c.l.b16 %v211
    %v378 = vunpack.c.h.b16 %v211
    %v379 = vunpack.c.l.b16 %v212
    %v380 = vunpack.c.h.b16 %v212
    %v381 = vunpack.c.l.b16 %v213
    %v382 = vunpack.c.h.b16 %v213
    %v383 = vunpack.c.l.b16 %v214
    %v384 = vunpack.c.h.b16 %v214
    %v385 = vunpack.c.l.b16 %v215
    %v386 = vunpack.c.h.b16 %v215
    %v387 = vunpack.c.l.b16 %v216
    %v388 = vunpack.c.h.b16 %v216
    %v389 = vunpack.c.l.b16 %v217
    %v390 = vunpack.c.h.b16 %v217
    %v391 = vunpack.c.l.b16 %v218
    %v392 = vunpack.c.h.b16 %v218
    %v393 = vunpack.c.l.b16 %v219
    %v394 = vunpack.c.h.b16 %v219
    %v395 = vunpack.c.l.b16 %v220
    %v396 = vunpack.c.h.b16 %v220
    %v397 = vpack.c.b16 %v307, %v301
    %v398 = vpack.c.b16 %v308, %v302
    %v399 = vpack.c.b16 %v309, %v303
    %v400 = vpack.c.b16 %v310, %v304
    %v401 = vpack.c.b16 %v311, %v305
    %v402 = vpack.c.b16 %v312, %v306
    %v403 = vpack.c.b16 %v319, %v313
    %v404 = vpack.c.b16 %v320, %v314
    %v405 = vpack.c.b16 %v321, %v315
    %v406 = vpack.c.b16 %v322, %v316
    %v407 = vpack.c.b16 %v323, %v317
    %v408 = vpack.c.b16 %v324, %v318
    %v409 = vpack.c.b16 %v331, %v325
    %v410 = vpack.c.b16 %v332, %v326
    %v411 = vpack.c.b16 %v333, %v327
    %v412 = vpack.c.b16 %v334, %v328
    %v413 = vpack.c.b16 %v335, %v329
    %v414 = vpack.c.b16 %v336, %v330
    %v415 = vpack.c.b16 %v343, %v337
    %v416 = vpack.c.b16 %v344, %v338
    %v417 = vpack.c.b16 %v345, %v339
    %v418 = vpack.c.b16 %v346, %v340
    %v419 = vpack.c.b16 %v347, %v341
    %v420 = vpack.c.b16 %v348, %v342
    %v421 = vpack.c.b16 %v355, %v349
    %v422 = vpack.c.b16 %v356, %v350
    %v423 = vpack.c.b16 %v357, %v351
    %v424 = vpack.c.b16 %v358, %v352
    %v425 = vpack.c.b16 %v359, %v353
    %v426 = vpack.c.b16 %v360, %v354
    %v427 = vpack.c.b16 %v367, %v361
    %v428 = vpack.c.b16 %v368, %v362
    %v429 = vpack.c.b16 %v369, %v363
    %v430 = vpack.c.b16 %v370, %v364
    %v431 = vpack.c.b16 %v371, %v365
    %v432 = vpack.c.b16 %v372, %v366
    %v433 = vpack.c.b16 %v379, %v373
    %v434 = vpack.c.b16 %v380, %v374
    %v435 = vpack.c.b16 %v381, %v375
    %v436 = vpack.c.b16 %v382, %v376
    %v437 = vpack.c.b16 %v383, %v377
    %v438 = vpack.c.b16 %v384, %v378
    %v439 = vpack.c.b16 %v391, %v385
    %v440 = vpack.c.b16 %v392, %v386
    %v441 = vpack.c.b16 %v393, %v387
    %v442 = vpack.c.b16 %v394, %v388
    %v443 = vpack.c.b16 %v395, %v389
    %v444 = vpack.c.b16 %v396, %v390
    %493 = vmatprep.subr.bf16.mxu0 %v398
    %494 = vmatpush1.bf16.msra.mxu0 %v397
    %495 = vmatprep.subr.bf16.mxu0 %v404
    %496 = vmatpush1.bf16.msra.mxu0 %v403
    %497 = vmatprep.subr.bf16.mxu0 %v410
    %498 = vmatpush1.bf16.msra.mxu0 %v409
    %499 = vmatprep.subr.bf16.mxu0 %v416
    %500 = vmatpush1.bf16.msra.mxu0 %v415
    %501 = vmatprep.subr.bf16.mxu0 %v422
    %502 = vmatpush1.bf16.msra.mxu0 %v421
    %503 = vmatprep.subr.bf16.mxu0 %v428
    %504 = vmatpush1.bf16.msra.mxu0 %v427
    %505 = vmatprep.subr.bf16.mxu0 %v434
    %506 = vmatpush1.bf16.msra.mxu0 %v433
    %507 = vmatprep.subr.bf16.mxu0 %v440
    %508 = vmatpush1.bf16.msra.mxu0 %v439
    %509 = vmatprep.subr.bf16.mxu0 0
    %510 = vmatpush1.bf16.msra.mxu0 0
    %511 = vmatprep.subr.bf16.mxu0 0
    %512 = vmatpush1.bf16.msra.mxu0 0
    %513 = vmatprep.subr.bf16.mxu0 0
    %514 = vmatpush1.bf16.msra.mxu0 0
    %515 = vmatprep.subr.bf16.mxu0 0
    %516 = vmatpush1.bf16.msra.mxu0 0
    %517 = vmatprep.subr.bf16.mxu0 0
    %518 = vmatpush1.bf16.msra.mxu0 0
    %519 = vmatprep.subr.bf16.mxu0 0
    %520 = vmatpush1.bf16.msra.mxu0 0
    %521 = vmatprep.subr.bf16.mxu0 0
    %522 = vmatpush1.bf16.msra.mxu0 0
    %523 = vmatprep.subr.bf16.mxu0 0
    %524 = vmatpush1.bf16.msra.mxu0 0
    %525 = vmatprep.mubr.bf16.mxu0 0
    %526 = vmatmul.mubr.bf16.gmra.mrb[0].mxu0 %v172
    %v527 = vpop.f32.mrb[0].mxu0
    %v528 = vadd.f32 %v226, %v527
    %v529 = vpop.f32.mrb[0].mxu0
    %v530 = vadd.f32 %v230, %v529
    %v531 = vpop.f32.mrb[0].mxu0
    %v532 = vpop.f32.mrb[0].mxu0
    %533 = vdwg.mxu0
    %534 = vmatprep.subr.bf16.mxu0 %v400
    %535 = vmatpush1.bf16.msra.mxu0 %v399
    %536 = vmatprep.subr.bf16.mxu0 %v406
    %537 = vmatpush1.bf16.msra.mxu0 %v405
    %538 = vmatprep.subr.bf16.mxu0 %v412
    %539 = vmatpush1.bf16.msra.mxu0 %v411
    %540 = vmatprep.subr.bf16.mxu0 %v418
    %541 = vmatpush1.bf16.msra.mxu0 %v417
    %542 = vmatprep.subr.bf16.mxu0 %v424
    %543 = vmatpush1.bf16.msra.mxu0 %v423
    %544 = vmatprep.subr.bf16.mxu0 %v430
    %545 = vmatpush1.bf16.msra.mxu0 %v429
    %546 = vmatprep.subr.bf16.mxu0 %v436
    %547 = vmatpush1.bf16.msra.mxu0 %v435
    %548 = vmatprep.subr.bf16.mxu0 %v442
    %549 = vmatpush1.bf16.msra.mxu0 %v441
    %550 = vmatprep.subr.bf16.mxu0 0
    %551 = vmatpush1.bf16.msra.mxu0 0
    %552 = vmatprep.subr.bf16.mxu0 0
    %553 = vmatpush1.bf16.msra.mxu0 0
    %554 = vmatprep.subr.bf16.mxu0 0
    %555 = vmatpush1.bf16.msra.mxu0 0
    %556 = vmatprep.subr.bf16.mxu0 0
    %557 = vmatpush1.bf16.msra.mxu0 0
    %558 = vmatprep.subr.bf16.mxu0 0
    %559 = vmatpush1.bf16.msra.mxu0 0
    %560 = vmatprep.subr.bf16.mxu0 0
    %561 = vmatpush1.bf16.msra.mxu0 0
    %562 = vmatprep.subr.bf16.mxu0 0
    %563 = vmatpush1.bf16.msra.mxu0 0
    %564 = vmatprep.subr.bf16.mxu0 0
    %565 = vmatpush1.bf16.msra.mxu0 0
    %566 = vmatprep.mubr.bf16.mxu0 0
    %567 = vmatmul.mubr.bf16.gmra.mrb[0].mxu0 %v172
    %v568 = vpop.f32.mrb[0].mxu0
    %v569 = vadd.f32 %v234, %v568
    %v570 = vpop.f32.mrb[0].mxu0
    %v571 = vadd.f32 %v238, %v570
    %v572 = vpop.f32.mrb[0].mxu0
    %v573 = vpop.f32.mrb[0].mxu0
    %574 = vdwg.mxu0
    %575 = vmatprep.subr.bf16.mxu0 %v402
    %576 = vmatpush1.bf16.msra.mxu0 %v401
    %577 = vmatprep.subr.bf16.mxu0 %v408
    %578 = vmatpush1.bf16.msra.mxu0 %v407
    %579 = vmatprep.subr.bf16.mxu0 %v414
    %580 = vmatpush1.bf16.msra.mxu0 %v413
    %581 = vmatprep.subr.bf16.mxu0 %v420
    %582 = vmatpush1.bf16.msra.mxu0 %v419
    %583 = vmatprep.subr.bf16.mxu0 %v426
    %584 = vmatpush1.bf16.msra.mxu0 %v425
    %585 = vmatprep.subr.bf16.mxu0 %v432
    %586 = vmatpush1.bf16.msra.mxu0 %v431
    %587 = vmatprep.subr.bf16.mxu0 %v438
    %588 = vmatpush1.bf16.msra.mxu0 %v437
    %589 = vmatprep.subr.bf16.mxu0 %v444
    %590 = vmatpush1.bf16.msra.mxu0 %v443
    %591 = vmatprep.subr.bf16.mxu0 0
    %592 = vmatpush1.bf16.msra.mxu0 0
    %593 = vmatprep.subr.bf16.mxu0 0
    %594 = vmatpush1.bf16.msra.mxu0 0
    %595 = vmatprep.subr.bf16.mxu0 0
    %596 = vmatpush1.bf16.msra.mxu0 0
    %597 = vmatprep.subr.bf16.mxu0 0
    %598 = vmatpush1.bf16.msra.mxu0 0
    %599 = vmatprep.subr.bf16.mxu0 0
    %600 = vmatpush1.bf16.msra.mxu0 0
    %601 = vmatprep.subr.bf16.mxu0 0
    %602 = vmatpush1.bf16.msra.mxu0 0
    %603 = vmatprep.subr.bf16.mxu0 0
    %604 = vmatpush1.bf16.msra.mxu0 0
    %605 = vmatprep.subr.bf16.mxu0 0
    %606 = vmatpush1.bf16.msra.mxu0 0
    %607 = vmatprep.mubr.bf16.mxu0 0
    %608 = vmatmul.mubr.bf16.gmra.mrb[0].mxu0 %v172
    %v609 = vpop.f32.mrb[0].mxu0
    %v610 = vadd.f32 %v242, %v609
    %v611 = vpop.f32.mrb[0].mxu0
    %v612 = vadd.f32 %v246, %v611
    %v613 = vpop.f32.mrb[0].mxu0
    %v614 = vpop.f32.mrb[0].mxu0
    %615 = vdwg.mxu0
    %v616 = vld [vmem:[%s5] sm:$0x1]
    %v617 = vmul.f32 %v158, %v158
    %v618 = vmul.f32 %v159, %v159
    %v619 = vmul.f32 %v160, %v160
    %v620 = vmul.f32 %v161, %v161
    %621 = vadd.xlane.f32.xlu0 %v617
    %v622 = vpop.xlane.xlu0 %621
    %623 = vadd.xlane.f32.xlu0 %v618
    %v624 = vpop.xlane.xlu0 %623
    %625 = vadd.xlane.f32.xlu0 %v619
    %v626 = vpop.xlane.xlu0 %625
    %627 = vadd.xlane.f32.xlu0 %v620
    %v628 = vpop.xlane.xlu0 %627
    %v629 = vrcp.pop 128.0
    %v630 = vmul.f32 %v622, %v629
    %v631 = vmul.f32 %v624, %v629
    %v632 = vmul.f32 %v626, %v629
    %v633 = vmul.f32 %v628, %v629
    %v634 = vadd.f32 %v630, 1e-06
    %v635 = vadd.f32 %v631, 1e-06
    %v636 = vadd.f32 %v632, 1e-06
    %v637 = vadd.f32 %v633, 1e-06
    %v638 = vrsqrt.pop %v634
    %v639 = vrsqrt.pop %v635
    %v640 = vrsqrt.pop %v636
    %v641 = vrsqrt.pop %v637
    %v642 = vmul.f32 %v158, %v638
    %v643 = vmul.f32 %v159, %v639
    %v644 = vmul.f32 %v160, %v640
    %v645 = vmul.f32 %v161, %v641
    %v646 = vadd.f32 %v616, 1.0
    %v648 = vlaneseq
    %v649 = vshrl.u32 %v648, 7
    %v650 = vsub.s32 0, %v649
    %v651 = vrot.slane %v646, %v650
    %v653 = vmul.f32 %v642, %v651
    %v654 = vmul.f32 %v643, %v651
    %v655 = vmul.f32 %v644, %v651
    %v656 = vmul.f32 %v645, %v651
    %v657 = vadd.f32 %v530, 1.0
    %v658 = vlaneseq
    %v659 = vshrl.u32 %v658, 7
    %v660 = vsub.s32 0, %v659
    %v661 = vrot.slane %v657, %v660
    %v662 = vmul.f32 %v653, %v661
    %v663 = vmul.f32 %v654, %v661
    %v664 = vlaneseq
    %v665 = vshrl.u32 %v664, 7
    %v666 = vsub.s32 0, %v665
    %v667 = vrot.slane %v528, %v666
    %v668 = vadd.f32 %v662, %v667
    %v669 = vadd.f32 %v663, %v667
    %v670 = vlaneseq
    %v671 = vshrl.u32 %v670, 7
    %v672 = vsub.s32 1, %v671
    %v673 = vrot.slane %v657, %v672
    %v674 = vmul.f32 %v655, %v673
    %v675 = vmul.f32 %v656, %v673
    %v676 = vlaneseq
    %v677 = vshrl.u32 %v676, 7
    %v678 = vsub.s32 1, %v677
    %v679 = vrot.slane %v528, %v678
    %v680 = vadd.f32 %v674, %v679
    %v681 = vadd.f32 %v675, %v679
    %v682 = vpack.c.bf16 %v669, %v668
    %v683 = vpack.c.bf16 %v681, %v680
    %v684 = vld [vmem:[#allocation8] sm:$0xff]
    %v685 = vld [vmem:[#allocation8 + $0x8] sm:$0xff]
    %v686 = vld [vmem:[#allocation8 + $0x10] sm:$0xff]
    %v687 = vld [vmem:[#allocation8 + $0x18] sm:$0xff]
    %v688 = vld [vmem:[#allocation8 + $0x20] sm:$0xff]
    %v689 = vld [vmem:[#allocation8 + $0x28] sm:$0xff]
    %v690 = vld [vmem:[#allocation8 + $0x30] sm:$0xff]
    %v691 = vld [vmem:[#allocation8 + $0x38] sm:$0xff]
    %v692 = vld [vmem:[#allocation8 + $0x40] sm:$0xff]
    %v693 = vld [vmem:[#allocation8 + $0x48] sm:$0xff]
    %v694 = vld [vmem:[#allocation8 + $0x50] sm:$0xff]
    %v695 = vld [vmem:[#allocation8 + $0x58] sm:$0xff]
    %v696 = vld [vmem:[#allocation8 + $0x60] sm:$0xff]
    %v697 = vld [vmem:[#allocation8 + $0x68] sm:$0xff]
    %v698 = vld [vmem:[#allocation8 + $0x70] sm:$0xff]
    %v699 = vld [vmem:[#allocation8 + $0x78] sm:$0xff]
    %v716 = vunpack.c.l.b16 %v684
    %v717 = vunpack.c.h.b16 %v684
    %v718 = vunpack.c.l.b16 %v685
    %v719 = vunpack.c.h.b16 %v685
    %v720 = vunpack.c.l.b16 %v686
    %v721 = vunpack.c.h.b16 %v686
    %v722 = vunpack.c.l.b16 %v687
    %v723 = vunpack.c.h.b16 %v687
    %v724 = vunpack.c.l.b16 %v688
    %v725 = vunpack.c.h.b16 %v688
    %v726 = vunpack.c.l.b16 %v689
    %v727 = vunpack.c.h.b16 %v689
    %v728 = vunpack.c.l.b16 %v690
    %v729 = vunpack.c.h.b16 %v690
    %v730 = vunpack.c.l.b16 %v691
    %v731 = vunpack.c.h.b16 %v691
    %v732 = vunpack.c.l.b16 %v692
    %v733 = vunpack.c.h.b16 %v692
    %v734 = vunpack.c.l.b16 %v693
    %v735 = vunpack.c.h.b16 %v693
    %v736 = vunpack.c.l.b16 %v694
    %v737 = vunpack.c.h.b16 %v694
    %v738 = vunpack.c.l.b16 %v695
    %v739 = vunpack.c.h.b16 %v695
    %v740 = vunpack.c.l.b16 %v696
    %v741 = vunpack.c.h.b16 %v696
    %v742 = vunpack.c.l.b16 %v697
    %v743 = vunpack.c.h.b16 %v697
    %v744 = vunpack.c.l.b16 %v698
    %v745 = vunpack.c.h.b16 %v698
    %v746 = vunpack.c.l.b16 %v699
    %v747 = vunpack.c.h.b16 %v699
    %v748 = vpack.c.b16 %v718, %v716
    %v749 = vpack.c.b16 %v719, %v717
    %v750 = vpack.c.b16 %v722, %v720
    %v751 = vpack.c.b16 %v723, %v721
    %v752 = vpack.c.b16 %v726, %v724
    %v753 = vpack.c.b16 %v727, %v725
    %v754 = vpack.c.b16 %v730, %v728
    %v755 = vpack.c.b16 %v731, %v729
    %v756 = vpack.c.b16 %v734, %v732
    %v757 = vpack.c.b16 %v735, %v733
    %v758 = vpack.c.b16 %v738, %v736
    %v759 = vpack.c.b16 %v739, %v737
    %v760 = vpack.c.b16 %v742, %v740
    %v761 = vpack.c.b16 %v743, %v741
    %v762 = vpack.c.b16 %v746, %v744
    %v763 = vpack.c.b16 %v747, %v745
    %780 = vmatprep.subr.bf16.mxu0 %v749
    %781 = vmatpush1.bf16.msra.mxu0 %v748
    %782 = vmatprep.subr.bf16.mxu0 %v751
    %783 = vmatpush1.bf16.msra.mxu0 %v750
    %784 = vmatprep.subr.bf16.mxu0 %v753
    %785 = vmatpush1.bf16.msra.mxu0 %v752
    %786 = vmatprep.subr.bf16.mxu0 %v755
    %787 = vmatpush1.bf16.msra.mxu0 %v754
    %788 = vmatprep.subr.bf16.mxu0 %v757
    %789 = vmatpush1.bf16.msra.mxu0 %v756
    %790 = vmatprep.subr.bf16.mxu0 %v759
    %791 = vmatpush1.bf16.msra.mxu0 %v758
    %792 = vmatprep.subr.bf16.mxu0 %v761
    %793 = vmatpush1.bf16.msra.mxu0 %v760
    %794 = vmatprep.subr.bf16.mxu0 %v763
    %795 = vmatpush1.bf16.msra.mxu0 %v762
    %796 = vmatprep.subr.bf16.mxu0 0
    %797 = vmatpush1.bf16.msra.mxu0 0
    %798 = vmatprep.subr.bf16.mxu0 0
    %799 = vmatpush1.bf16.msra.mxu0 0
    %800 = vmatprep.subr.bf16.mxu0 0
    %801 = vmatpush1.bf16.msra.mxu0 0
    %802 = vmatprep.subr.bf16.mxu0 0
    %803 = vmatpush1.bf16.msra.mxu0 0
    %804 = vmatprep.subr.bf16.mxu0 0
    %805 = vmatpush1.bf16.msra.mxu0 0
    %806 = vmatprep.subr.bf16.mxu0 0
    %807 = vmatpush1.bf16.msra.mxu0 0
    %808 = vmatprep.subr.bf16.mxu0 0
    %809 = vmatpush1.bf16.msra.mxu0 0
    %810 = vmatprep.subr.bf16.mxu0 0
    %811 = vmatpush1.bf16.msra.mxu0 0
    %812 = vmatprep.mubr.bf16.mxu0 0
    %813 = vmatmul.mubr.bf16.gmra.mrb[0].mxu0 %v682
    %v814 = vpop.f32.mrb[0].mxu0
    %v815 = vadd.f32 0.0, %v814
    %v816 = vpop.f32.mrb[0].mxu0
    %v817 = vadd.f32 0.0, %v816
    %v818 = vpop.f32.mrb[0].mxu0
    %v819 = vadd.f32 0.0, %v818
    %v820 = vpop.f32.mrb[0].mxu0
    %v821 = vadd.f32 0.0, %v820
    %822 = vmatprep.mubr.bf16.mxu0 0
    %823 = vmatmul.mubr.bf16.gmra.mrb[0].mxu0 %v683
    %v824 = vpop.f32.mrb[0].mxu0
    %v825 = vadd.f32 0.0, %v824
    %v826 = vpop.f32.mrb[0].mxu0
    %v827 = vadd.f32 0.0, %v826
    %v828 = vpop.f32.mrb[0].mxu0
    %v829 = vadd.f32 0.0, %v828
    %v830 = vpop.f32.mrb[0].mxu0
    %v831 = vadd.f32 0.0, %v830
    %832 = vdwg.mxu0
    %v833 = vpack.c.bf16 %v163, %v162
    %v834 = vld [vmem:[#allocation10] sm:$0xf]
    %v835 = vld [vmem:[#allocation10 + $0x4] sm:$0xf]
    %v836 = vld [vmem:[#allocation10 + $0x8] sm:$0xf]
    %v837 = vld [vmem:[#allocation10 + $0xc] sm:$0xf]
    %v838 = vld [vmem:[#allocation10 + $0x10] sm:$0xf]
    %v839 = vld [vmem:[#allocation10 + $0x14] sm:$0xf]
    %v840 = vld [vmem:[#allocation10 + $0x18] sm:$0xf]
    %v841 = vld [vmem:[#allocation10 + $0x1c] sm:$0xf]
    %v842 = vld [vmem:[#allocation10 + $0x20] sm:$0xf]
    %v843 = vld [vmem:[#allocation10 + $0x24] sm:$0xf]
    %v844 = vld [vmem:[#allocation10 + $0x28] sm:$0xf]
    %v845 = vld [vmem:[#allocation10 + $0x2c] sm:$0xf]
    %v846 = vld [vmem:[#allocation10 + $0x30] sm:$0xf]
    %v847 = vld [vmem:[#allocation10 + $0x34] sm:$0xf]
    %v848 = vld [vmem:[#allocation10 + $0x38] sm:$0xf]
    %v849 = vld [vmem:[#allocation10 + $0x3c] sm:$0xf]
    %v866 = vunpack.c.l.b16 %v834
    %v867 = vunpack.c.l.b16 %v835
    %v868 = vunpack.c.l.b16 %v836
    %v869 = vunpack.c.l.b16 %v837
    %v870 = vunpack.c.l.b16 %v838
    %v871 = vunpack.c.l.b16 %v839
    %v872 = vunpack.c.l.b16 %v840
    %v873 = vunpack.c.l.b16 %v841
    %v874 = vunpack.c.l.b16 %v842
    %v875 = vunpack.c.l.b16 %v843
    %v876 = vunpack.c.l.b16 %v844
    %v877 = vunpack.c.l.b16 %v845
    %v878 = vunpack.c.l.b16 %v846
    %v879 = vunpack.c.l.b16 %v847
    %v880 = vunpack.c.l.b16 %v848
    %v881 = vunpack.c.l.b16 %v849
    %v882 = vpack.c.b16 %v867, %v866
    %v883 = vpack.c.b16 %v869, %v868
    %v884 = vpack.c.b16 %v871, %v870
    %v885 = vpack.c.b16 %v873, %v872
    %v886 = vpack.c.b16 %v875, %v874
    %v887 = vpack.c.b16 %v877, %v876
    %v888 = vpack.c.b16 %v879, %v878
    %v889 = vpack.c.b16 %v881, %v880
    %898 = vmatprep.subr.bf16.mxu0 0
    %899 = vmatpush1.bf16.msra.mxu0 %v882
    %900 = vmatprep.subr.bf16.mxu0 0
    %901 = vmatpush1.bf16.msra.mxu0 %v883
    %902 = vmatprep.subr.bf16.mxu0 0
    %903 = vmatpush1.bf16.msra.mxu0 %v884
    %904 = vmatprep.subr.bf16.mxu0 0
    %905 = vmatpush1.bf16.msra.mxu0 %v885
    %906 = vmatprep.subr.bf16.mxu0 0
    %907 = vmatpush1.bf16.msra.mxu0 %v886
    %908 = vmatprep.subr.bf16.mxu0 0
    %909 = vmatpush1.bf16.msra.mxu0 %v887
    %910 = vmatprep.subr.bf16.mxu0 0
    %911 = vmatpush1.bf16.msra.mxu0 %v888
    %912 = vmatprep.subr.bf16.mxu0 0
    %913 = vmatpush1.bf16.msra.mxu0 %v889
    %914 = vmatprep.subr.bf16.mxu0 0
    %915 = vmatpush1.bf16.msra.mxu0 0
    %916 = vmatprep.subr.bf16.mxu0 0
    %917 = vmatpush1.bf16.msra.mxu0 0
    %918 = vmatprep.subr.bf16.mxu0 0
    %919 = vmatpush1.bf16.msra.mxu0 0
    %920 = vmatprep.subr.bf16.mxu0 0
    %921 = vmatpush1.bf16.msra.mxu0 0
    %922 = vmatprep.subr.bf16.mxu0 0
    %923 = vmatpush1.bf16.msra.mxu0 0
    %924 = vmatprep.subr.bf16.mxu0 0
    %925 = vmatpush1.bf16.msra.mxu0 0
    %926 = vmatprep.subr.bf16.mxu0 0
    %927 = vmatpush1.bf16.msra.mxu0 0
    %928 = vmatprep.subr.bf16.mxu0 0
    %929 = vmatpush1.bf16.msra.mxu0 0
    %930 = vmatprep.mubr.bf16.mxu0 0
    %931 = vmatmul.mubr.bf16.gmra.mrb[0].mxu0 %v833
    %v932 = vpop.f32.mrb[0].mxu0
    %v933 = vadd.f32 0.0, %v932
    %v934 = vpop.f32.mrb[0].mxu0
    %v935 = vpop.f32.mrb[0].mxu0
    %v936 = vadd.f32 0.0, %v935
    %v937 = vpop.f32.mrb[0].mxu0
    %938 = vdwg.mxu0
    %v939 = vld [vmem:[%s6] sm:$0x1]
    %v940 = vld [vmem:[%s7] sm:$0x1]
    %v941 = vld [vmem:[#allocation11] sm:$0xf]
    %v942 = vld [vmem:[#allocation11 + $0x4] sm:$0xf]
    %v943 = vld [vmem:[#allocation11 + $0x8] sm:$0xf]
    %v944 = vld [vmem:[#allocation11 + $0xc] sm:$0xf]
    %v945 = vld [vmem:[#allocation11 + $0x10] sm:$0xf]
    %v946 = vld [vmem:[#allocation11 + $0x14] sm:$0xf]
    %v947 = vld [vmem:[#allocation11 + $0x18] sm:$0xf]
    %v948 = vld [vmem:[#allocation11 + $0x1c] sm:$0xf]
    %v949 = vld [vmem:[#allocation11 + $0x20] sm:$0xf]
    %v950 = vld [vmem:[#allocation11 + $0x24] sm:$0xf]
    %v951 = vld [vmem:[#allocation11 + $0x28] sm:$0xf]
    %v952 = vld [vmem:[#allocation11 + $0x2c] sm:$0xf]
    %v953 = vld [vmem:[#allocation11 + $0x30] sm:$0xf]
    %v954 = vld [vmem:[#allocation11 + $0x34] sm:$0xf]
    %v955 = vld [vmem:[#allocation11 + $0x38] sm:$0xf]
    %v956 = vld [vmem:[#allocation11 + $0x3c] sm:$0xf]
    %959 = vrot.lane.b32.xlu0 %v815, 96
    %v960 = vpop.permute.xlu0 %959
    %961 = vrot.lane.b32.xlu0 %v819, 96
    %v962 = vpop.permute.xlu0 %961
    %v965 = vmul.f32 %v815, %v815
    %v966 = vmul.f32 %v819, %v819
    %v967 = vmul.f32 %v960, %v960
    %v968 = vmul.f32 %v962, %v962
    %vm969 = vcmask 261120
    %v970 = vsel %vm969, %v965, 0.0
    %971 = vadd.xlane.f32.xlu0 %v970
    %v972 = vpop.xlane.xlu0 %971
    %v973 = vsel %vm969, %v966, 0.0
    %974 = vadd.xlane.f32.xlu0 %v973
    %v975 = vpop.xlane.xlu0 %974
    %v976 = vsel %vm969, %v967, 0.0
    %977 = vadd.xlane.f32.xlu0 %v976
    %v978 = vpop.xlane.xlu0 %977
    %v979 = vsel %vm969, %v968, 0.0
    %980 = vadd.xlane.f32.xlu0 %v979
    %v981 = vpop.xlane.xlu0 %980
    %v982 = vrcp.pop 32.0
    %v983 = vmul.f32 %v972, %v982
    %v984 = vmul.f32 %v975, %v982
    %v985 = vmul.f32 %v978, %v982
    %v986 = vmul.f32 %v981, %v982
    %v987 = vadd.f32 %v983, 1e-06
    %v988 = vadd.f32 %v984, 1e-06
    %v989 = vadd.f32 %v985, 1e-06
    %v990 = vadd.f32 %v986, 1e-06
    %v991 = vrsqrt.pop %v987
    %v992 = vrsqrt.pop %v988
    %v993 = vrsqrt.pop %v989
    %v994 = vrsqrt.pop %v990
    %v995 = vmul.f32 %v815, %v991
    %v996 = vmul.f32 %v819, %v992
    %v997 = vmul.f32 %v960, %v993
    %v998 = vmul.f32 %v962, %v994
    %v999 = vadd.f32 %v939, 1.0
    %v1001 = vlaneseq
    %v1002 = vshrl.u32 %v1001, 7
    %v1003 = vsub.s32 0, %v1002
    %v1004 = vrot.slane %v999, %v1003
    %v1006 = vmul.f32 %v995, %v1004
    %v1007 = vmul.f32 %v996, %v1004
    %v1008 = vmul.f32 %v997, %v1004
    %v1009 = vmul.f32 %v998, %v1004
    %v1010 = vmul.f32 %v817, %v817
    %v1011 = vmul.f32 %v821, %v821
    %v1012 = vsel %vm969, %v1010, 0.0
    %1013 = vadd.xlane.f32.xlu0 %v1012
    %v1014 = vpop.xlane.xlu0 %1013
    %v1015 = vsel %vm969, %v1011, 0.0
    %1016 = vadd.xlane.f32.xlu0 %v1015
    %v1017 = vpop.xlane.xlu0 %1016
    %v1018 = vmul.f32 %v1014, %v982
    %v1019 = vmul.f32 %v1017, %v982
    %v1020 = vadd.f32 %v1018, 1e-06
    %v1021 = vadd.f32 %v1019, 1e-06
    %v1022 = vrsqrt.pop %v1020
    %v1023 = vrsqrt.pop %v1021
    %v1024 = vmul.f32 %v817, %v1022
    %v1025 = vmul.f32 %v821, %v1023
    %v1026 = vadd.f32 %v940, 1.0
    %v1028 = vlaneseq
    %v1029 = vshrl.u32 %v1028, 7
    %v1030 = vsub.s32 0, %v1029
    %v1031 = vrot.slane %v1026, %v1030
    %v1033 = vmul.f32 %v1024, %v1031
    %v1034 = vmul.f32 %v1025, %v1031
    %v1035 = vmul.f32 %v933, %v933
    %v1036 = vsel %vm969, %v1035, 0.0
    %1037 = vadd.xlane.f32.xlu0 %v1036
    %v1038 = vpop.xlane.xlu0 %1037
    %v1039 = vmul.f32 %v1038, %v982
    %v1040 = vadd.f32 %v1039, 1e-06
    %v1041 = vrsqrt.pop %v1040
    %v1042 = vmul.f32 %v933, %v1041
    %v1043 = vmul.f32 %v1042, %v1031
    %v1044 = vpack.c.bf16 %v1007, %v1006
    %v1045 = vpack.c.bf16 %v1009, %v1008
    %v1046 = vpack.c.bf16 %v1033, %v1043
    %v1047 = vpack.c.bf16 %v1034, %v1034
    %v1049 = vsel %vm969, %v1044, 0
    %v1052 = vsel %vm969, %v1045, 0
    %v1055 = vsel %vm969, %v1046, 0
    %v1058 = vsel %vm969, %v1047, 0
    %1060 = vmatprep.subr.bf16.mxu0 0
    %1061 = vmatpush1.bf16.xpose.msra.mxu0 %v1055
    %1062 = vmatprep.subr.bf16.mxu0 0
    %1063 = vmatpush1.bf16.xpose.msra.mxu0 %v1058
    %1064 = vmatprep.subr.bf16.mxu0 0
    %1065 = vmatpush1.bf16.xpose.msra.mxu0 0
    %1066 = vmatprep.subr.bf16.mxu0 0
    %1067 = vmatpush1.bf16.xpose.msra.mxu0 0
    %1068 = vmatprep.subr.bf16.mxu0 0
    %1069 = vmatpush1.bf16.xpose.msra.mxu0 0
    %1070 = vmatprep.subr.bf16.mxu0 0
    %1071 = vmatpush1.bf16.xpose.msra.mxu0 0
    %1072 = vmatprep.subr.bf16.mxu0 0
    %1073 = vmatpush1.bf16.xpose.msra.mxu0 0
    %1074 = vmatprep.subr.bf16.mxu0 0
    %1075 = vmatpush1.bf16.xpose.msra.mxu0 0
    %1076 = vmatprep.subr.bf16.mxu0 0
    %1077 = vmatpush1.bf16.xpose.msra.mxu0 0
    %1078 = vmatprep.subr.bf16.mxu0 0
    %1079 = vmatpush1.bf16.xpose.msra.mxu0 0
    %1080 = vmatprep.subr.bf16.mxu0 0
    %1081 = vmatpush1.bf16.xpose.msra.mxu0 0
    %1082 = vmatprep.subr.bf16.mxu0 0
    %1083 = vmatpush1.bf16.xpose.msra.mxu0 0
    %1084 = vmatprep.subr.bf16.mxu0 0
    %1085 = vmatpush1.bf16.xpose.msra.mxu0 0
    %1086 = vmatprep.subr.bf16.mxu0 0
    %1087 = vmatpush1.bf16.xpose.msra.mxu0 0
    %1088 = vmatprep.subr.bf16.mxu0 0
    %1089 = vmatpush1.bf16.xpose.msra.mxu0 0
    %1090 = vmatprep.subr.bf16.mxu0 0
    %1091 = vmatpush1.bf16.xpose.msra.mxu0 0
    %1092 = vmatprep.mubr.bf16.mxu0 0
    %1093 = vmatmul.mubr.bf16.gmra.mrb[0].mxu0 %v1049
    %v1094 = vpop.f32.mrb[0].mxu0
    %v1095 = vadd.f32 0.0, %v1094
    %v1096 = vpop.f32.mrb[0].mxu0
    %v1097 = vpop.f32.mrb[0].mxu0
    %v1098 = vadd.f32 0.0, %v1097
    %v1099 = vpop.f32.mrb[0].mxu0
    %1100 = vmatprep.mubr.bf16.mxu0 0
    %1101 = vmatmul.mubr.bf16.gmra.mrb[0].mxu0 %v1052
    %v1102 = vpop.f32.mrb[0].mxu0
    %v1103 = vadd.f32 0.0, %v1102
    %v1104 = vpop.f32.mrb[0].mxu0
    %v1105 = vpop.f32.mrb[0].mxu0
    %v1106 = vadd.f32 0.0, %v1105
    %v1107 = vpop.f32.mrb[0].mxu0
    %1108 = vdwg.mxu0
    %v1109 = vmul.f32 %v1095, 0.17677669
    %v1110 = vmul.f32 %v1098, 0.17677669
    %v1111 = vmul.f32 %v1103, 0.17677669
    %v1112 = vmul.f32 %v1106, 0.17677669
    %vm1113 = vcmask 195584
    %v1114 = vsel %vm1113, %v1109, -inf
    %1115 = vmax.xlane.f32.xlu0 %v1114
    %v1116 = vpop.xlane.xlu0 %1115
    %v1117 = vsel %vm1113, %v1110, -inf
    %1118 = vmax.xlane.f32.xlu0 %v1117
    %v1119 = vpop.xlane.xlu0 %1118
    %v1120 = vsel %vm1113, %v1111, -inf
    %1121 = vmax.xlane.f32.xlu0 %v1120
    %v1122 = vpop.xlane.xlu0 %1121
    %v1123 = vsel %vm1113, %v1112, -inf
    %1124 = vmax.xlane.f32.xlu0 %v1123
    %v1125 = vpop.xlane.xlu0 %1124
    %v1126 = vsub.f32 %v1109, %v1116
    %v1127 = vsub.f32 %v1110, %v1119
    %v1128 = vsub.f32 %v1111, %v1122
    %v1129 = vsub.f32 %v1112, %v1125
    %v1130 = vmul.f32 %v1126, 1.442695
    %v1131 = vpow.pop %v1130
    %v1132 = vmul.f32 %v1127, 1.442695
    %v1133 = vpow.pop %v1132
    %v1134 = vmul.f32 %v1128, 1.442695
    %v1135 = vpow.pop %v1134
    %v1136 = vmul.f32 %v1129, 1.442695
    %v1137 = vpow.pop %v1136
    %v1138 = vsel %vm1113, %v1131, 0.0
    %1139 = vadd.xlane.f32.xlu0 %v1138
    %v1140 = vpop.xlane.xlu0 %1139
    %v1141 = vsel %vm1113, %v1133, 0.0
    %1142 = vadd.xlane.f32.xlu0 %v1141
    %v1143 = vpop.xlane.xlu0 %1142
    %v1144 = vsel %vm1113, %v1135, 0.0
    %1145 = vadd.xlane.f32.xlu0 %v1144
    %v1146 = vpop.xlane.xlu0 %1145
    %v1147 = vsel %vm1113, %v1137, 0.0
    %1148 = vadd.xlane.f32.xlu0 %v1147
    %v1149 = vpop.xlane.xlu0 %1148
    %v1150 = vrcp.pop %v1140
    %v1151 = vrcp.pop %v1143
    %v1152 = vrcp.pop %v1146
    %v1153 = vrcp.pop %v1149
    %v1154 = vmul.f32 %v1131, %v1150
    %v1155 = vmul.f32 %v1133, %v1151
    %v1156 = vmul.f32 %v1135, %v1152
    %v1157 = vmul.f32 %v1137, %v1153
    %v1158 = vpack.c.bf16 %v1155, %v1154
    %v1159 = vpack.c.bf16 %v1157, %v1156
    %v1160 = vpack.c.bf16 %v817, %v933
    %v1161 = vpack.c.bf16 %v821, %v821
    %1164 = vrot.lane.b32.xlu0 %v1160, 64
    %v1165 = vpop.permute.xlu0 %1164
    %1166 = vrot.lane.b32.xlu0 %v1161, 64
    %v1167 = vpop.permute.xlu0 %1166
    %v1170 = vsel %vm1113, %v1158, 0
    %v1173 = vsel %vm1113, %v1159, 0
    %vm1175 = vcmask 1043456
    %v1177 = vsel %vm1175, %v1167, 0
    %1179 = vmatprep.subr.bf16.mxu0 0
    %1180 = vmatpush1.bf16.msra.mxu0 %v1165
    %1181 = vmatprep.subr.bf16.mxu0 0
    %1182 = vmatpush1.bf16.msra.mxu0 %v1177
    %1183 = vmatprep.subr.bf16.mxu0 0
    %1184 = vmatpush1.bf16.msra.mxu0 0
    %1185 = vmatprep.subr.bf16.mxu0 0
    %1186 = vmatpush1.bf16.msra.mxu0 0
    %1187 = vmatprep.subr.bf16.mxu0 0
    %1188 = vmatpush1.bf16.msra.mxu0 0
    %1189 = vmatprep.subr.bf16.mxu0 0
    %1190 = vmatpush1.bf16.msra.mxu0 0
    %1191 = vmatprep.subr.bf16.mxu0 0
    %1192 = vmatpush1.bf16.msra.mxu0 0
    %1193 = vmatprep.subr.bf16.mxu0 0
    %1194 = vmatpush1.bf16.msra.mxu0 0
    %1195 = vmatprep.subr.bf16.mxu0 0
    %1196 = vmatpush1.bf16.msra.mxu0 0
    %1197 = vmatprep.subr.bf16.mxu0 0
    %1198 = vmatpush1.bf16.msra.mxu0 0
    %1199 = vmatprep.subr.bf16.mxu0 0
    %1200 = vmatpush1.bf16.msra.mxu0 0
    %1201 = vmatprep.subr.bf16.mxu0 0
    %1202 = vmatpush1.bf16.msra.mxu0 0
    %1203 = vmatprep.subr.bf16.mxu0 0
    %1204 = vmatpush1.bf16.msra.mxu0 0
    %1205 = vmatprep.subr.bf16.mxu0 0
    %1206 = vmatpush1.bf16.msra.mxu0 0
    %1207 = vmatprep.subr.bf16.mxu0 0
    %1208 = vmatpush1.bf16.msra.mxu0 0
    %1209 = vmatprep.subr.bf16.mxu0 0
    %1210 = vmatpush1.bf16.msra.mxu0 0
    %1211 = vmatprep.mubr.bf16.mxu0 0
    %1212 = vmatmul.mubr.bf16.gmra.mrb[0].mxu0 %v1170
    %v1213 = vpop.f32.mrb[0].mxu0
    %v1214 = vadd.f32 0.0, %v1213
    %v1215 = vpop.f32.mrb[0].mxu0
    %v1216 = vpop.f32.mrb[0].mxu0
    %v1217 = vadd.f32 0.0, %v1216
    %v1218 = vpop.f32.mrb[0].mxu0
    %1219 = vmatprep.mubr.bf16.mxu0 0
    %1220 = vmatmul.mubr.bf16.gmra.mrb[0].mxu0 %v1173
    %v1221 = vpop.f32.mrb[0].mxu0
    %v1222 = vadd.f32 0.0, %v1221
    %v1223 = vpop.f32.mrb[0].mxu0
    %v1224 = vpop.f32.mrb[0].mxu0
    %v1225 = vadd.f32 0.0, %v1224
    %v1226 = vpop.f32.mrb[0].mxu0
    %1227 = vdwg.mxu0
    %v1228 = vpack.c.bf16 %v1217, %v1214
    %v1229 = vpack.c.bf16 %v1225, %v1222
    %v1234 = vunpack.c.l.b16 %v945
    %v1235 = vunpack.c.l.b16 %v946
    %v1236 = vunpack.c.l.b16 %v947
    %v1237 = vunpack.c.l.b16 %v948
    %v1238 = vpack.c.b16 %v1235, %v1234
    %v1239 = vpack.c.b16 %v1237, %v1236
    %v1243 = vsel %vm969, %v1229, 0
    %1245 = vmatprep.subr.bf16.mxu0 0
    %1246 = vmatpush1.bf16.msra.mxu0 %v1238
    %1247 = vmatprep.subr.bf16.mxu0 0
    %1248 = vmatpush1.bf16.msra.mxu0 %v1239
    %1249 = vmatprep.subr.bf16.mxu0 0
    %1250 = vmatpush1.bf16.msra.mxu0 0
    %1251 = vmatprep.subr.bf16.mxu0 0
    %1252 = vmatpush1.bf16.msra.mxu0 0
    %1253 = vmatprep.subr.bf16.mxu0 0
    %1254 = vmatpush1.bf16.msra.mxu0 0
    %1255 = vmatprep.subr.bf16.mxu0 0
    %1256 = vmatpush1.bf16.msra.mxu0 0
    %1257 = vmatprep.subr.bf16.mxu0 0
    %1258 = vmatpush1.bf16.msra.mxu0 0
    %1259 = vmatprep.subr.bf16.mxu0 0
    %1260 = vmatpush1.bf16.msra.mxu0 0
    %1261 = vmatprep.subr.bf16.mxu0 0
    %1262 = vmatpush1.bf16.msra.mxu0 0
    %1263 = vmatprep.subr.bf16.mxu0 0
    %1264 = vmatpush1.bf16.msra.mxu0 0
    %1265 = vmatprep.subr.bf16.mxu0 0
    %1266 = vmatpush1.bf16.msra.mxu0 0
    %1267 = vmatprep.subr.bf16.mxu0 0
    %1268 = vmatpush1.bf16.msra.mxu0 0
    %1269 = vmatprep.subr.bf16.mxu0 0
    %1270 = vmatpush1.bf16.msra.mxu0 0
    %1271 = vmatprep.subr.bf16.mxu0 0
    %1272 = vmatpush1.bf16.msra.mxu0 0
    %1273 = vmatprep.subr.bf16.mxu0 0
    %1274 = vmatpush1.bf16.msra.mxu0 0
    %1275 = vmatprep.subr.bf16.mxu0 0
    %1276 = vmatpush1.bf16.msra.mxu0 0
    %1277 = vmatprep.mubr.bf16.mxu0 0
    %1278 = vmatmul.mubr.bf16.gmra.mrb[0].mxu0 %v1243
    %v1279 = vpop.f32.mrb[0].mxu0
    %v1280 = vadd.f32 0.0, %v1279
    %v1281 = vpop.f32.mrb[0].mxu0
    %v1282 = vpop.f32.mrb[0].mxu0
    %v1283 = vadd.f32 0.0, %v1282
    %v1284 = vpop.f32.mrb[0].mxu0
    %1285 = vdwg.mxu0
    %v1290 = vunpack.c.l.b16 %v941
    %v1291 = vunpack.c.l.b16 %v942
    %v1292 = vunpack.c.l.b16 %v943
    %v1293 = vunpack.c.l.b16 %v944
    %v1294 = vpack.c.b16 %v1291, %v1290
    %v1295 = vpack.c.b16 %v1293, %v1292
    %v1299 = vsel %vm969, %v1228, 0
    %1301 = vmatprep.subr.bf16.mxu0 0
    %1302 = vmatpush1.bf16.msra.mxu0 %v1294
    %1303 = vmatprep.subr.bf16.mxu0 0
    %1304 = vmatpush1.bf16.msra.mxu0 %v1295
    %1305 = vmatprep.subr.bf16.mxu0 0
    %1306 = vmatpush1.bf16.msra.mxu0 0
    %1307 = vmatprep.subr.bf16.mxu0 0
    %1308 = vmatpush1.bf16.msra.mxu0 0
    %1309 = vmatprep.subr.bf16.mxu0 0
    %1310 = vmatpush1.bf16.msra.mxu0 0
    %1311 = vmatprep.subr.bf16.mxu0 0
    %1312 = vmatpush1.bf16.msra.mxu0 0
    %1313 = vmatprep.subr.bf16.mxu0 0
    %1314 = vmatpush1.bf16.msra.mxu0 0
    %1315 = vmatprep.subr.bf16.mxu0 0
    %1316 = vmatpush1.bf16.msra.mxu0 0
    %1317 = vmatprep.subr.bf16.mxu0 0
    %1318 = vmatpush1.bf16.msra.mxu0 0
    %1319 = vmatprep.subr.bf16.mxu0 0
    %1320 = vmatpush1.bf16.msra.mxu0 0
    %1321 = vmatprep.subr.bf16.mxu0 0
    %1322 = vmatpush1.bf16.msra.mxu0 0
    %1323 = vmatprep.subr.bf16.mxu0 0
    %1324 = vmatpush1.bf16.msra.mxu0 0
    %1325 = vmatprep.subr.bf16.mxu0 0
    %1326 = vmatpush1.bf16.msra.mxu0 0
    %1327 = vmatprep.subr.bf16.mxu0 0
    %1328 = vmatpush1.bf16.msra.mxu0 0
    %1329 = vmatprep.subr.bf16.mxu0 0
    %1330 = vmatpush1.bf16.msra.mxu0 0
    %1331 = vmatprep.subr.bf16.mxu0 0
    %1332 = vmatpush1.bf16.msra.mxu0 0
    %1333 = vmatprep.mubr.bf16.mxu0 0
    %1334 = vmatmul.mubr.bf16.gmra.mrb[0].mxu0 %v1299
    %v1335 = vpop.f32.mrb[0].mxu0
    %v1336 = vadd.f32 %v1280, %v1335
    %v1337 = vpop.f32.mrb[0].mxu0
    %v1338 = vpop.f32.mrb[0].mxu0
    %v1339 = vadd.f32 %v1283, %v1338
    %v1340 = vpop.f32.mrb[0].mxu0
    %1341 = vdwg.mxu0
    %1346 = vrot.lane.b32.xlu0 %v965, 64
    %v1347 = vpop.permute.xlu0 %1346
    %1348 = vrot.lane.b32.xlu0 %v966, 64
    %v1349 = vpop.permute.xlu0 %1348
    %1350 = vrot.lane.b32.xlu0 %v967, 64
    %v1351 = vpop.permute.xlu0 %1350
    %1352 = vrot.lane.b32.xlu0 %v968, 64
    %v1353 = vpop.permute.xlu0 %1352
    %v1358 = vsel %vm969, %v1347, 0.0
    %1359 = vadd.xlane.f32.xlu0 %v1358
    %v1360 = vpop.xlane.xlu0 %1359
    %v1361 = vsel %vm969, %v1349, 0.0
    %1362 = vadd.xlane.f32.xlu0 %v1361
    %v1363 = vpop.xlane.xlu0 %1362
    %v1364 = vsel %vm969, %v1351, 0.0
    %1365 = vadd.xlane.f32.xlu0 %v1364
    %v1366 = vpop.xlane.xlu0 %1365
    %v1367 = vsel %vm969, %v1353, 0.0
    %1368 = vadd.xlane.f32.xlu0 %v1367
    %v1369 = vpop.xlane.xlu0 %1368
    %v1370 = vmul.f32 %v1360, %v982
    %v1371 = vmul.f32 %v1363, %v982
    %v1372 = vmul.f32 %v1366, %v982
    %v1373 = vmul.f32 %v1369, %v982
    %v1374 = vadd.f32 %v1370, 1e-06
    %v1375 = vadd.f32 %v1371, 1e-06
    %v1376 = vadd.f32 %v1372, 1e-06
    %v1377 = vadd.f32 %v1373, 1e-06
    %v1378 = vrsqrt.pop %v1374
    %v1379 = vrsqrt.pop %v1375
    %v1380 = vrsqrt.pop %v1376
    %v1381 = vrsqrt.pop %v1377
    %v1382 = vmul.f32 %v815, %v1378
    %v1383 = vmul.f32 %v819, %v1379
    %v1384 = vmul.f32 %v960, %v1380
    %v1385 = vmul.f32 %v962, %v1381
    %1386 = vrot.lane.b32.xlu0 %v1004, 64
    %v1387 = vpop.permute.xlu0 %1386
    %v1389 = vmul.f32 %v1382, %v1387
    %v1390 = vmul.f32 %v1383, %v1387
    %v1391 = vmul.f32 %v1384, %v1387
    %v1392 = vmul.f32 %v1385, %v1387
    %1395 = vrot.lane.b32.xlu0 %v1010, 96
    %v1396 = vpop.permute.xlu0 %1395
    %1397 = vrot.lane.b32.xlu0 %v1011, 96
    %v1398 = vpop.permute.xlu0 %1397
    %v1401 = vsel %vm969, %v1396, 0.0
    %1402 = vadd.xlane.f32.xlu0 %v1401
    %v1403 = vpop.xlane.xlu0 %1402
    %v1404 = vsel %vm969, %v1398, 0.0
    %1405 = vadd.xlane.f32.xlu0 %v1404
    %v1406 = vpop.xlane.xlu0 %1405
    %v1407 = vmul.f32 %v1403, %v982
    %v1408 = vmul.f32 %v1406, %v982
    %v1409 = vadd.f32 %v1407, 1e-06
    %v1410 = vadd.f32 %v1408, 1e-06
    %v1411 = vrsqrt.pop %v1409
    %v1412 = vrsqrt.pop %v1410
    %v1413 = vmul.f32 %v817, %v1411
    %v1414 = vmul.f32 %v821, %v1412
    %1415 = vrot.lane.b32.xlu0 %v1031, 32
    %v1416 = vpop.permute.xlu0 %1415
    %v1418 = vmul.f32 %v1413, %v1416
    %v1419 = vmul.f32 %v1414, %v1416
    %1421 = vrot.lane.b32.xlu0 %v1035, 96
    %v1422 = vpop.permute.xlu0 %1421
    %v1424 = vsel %vm969, %v1422, 0.0
    %1425 = vadd.xlane.f32.xlu0 %v1424
    %v1426 = vpop.xlane.xlu0 %1425
    %v1427 = vmul.f32 %v1426, %v982
    %v1428 = vadd.f32 %v1427, 1e-06
    %v1429 = vrsqrt.pop %v1428
    %v1430 = vmul.f32 %v933, %v1429
    %v1431 = vmul.f32 %v1430, %v1416
    %v1432 = vpack.c.bf16 %v1390, %v1389
    %v1433 = vpack.c.bf16 %v1392, %v1391
    %v1434 = vpack.c.bf16 %v1418, %v1431
    %v1435 = vpack.c.bf16 %v1419, %v1419
    %1438 = vrot.lane.b32.xlu0 %v1432, 64
    %v1439 = vpop.permute.xlu0 %1438
    %1440 = vrot.lane.b32.xlu0 %v1433, 64
    %v1441 = vpop.permute.xlu0 %1440
    %1444 = vrot.lane.b32.xlu0 %v1434, 96
    %v1445 = vpop.permute.xlu0 %1444
    %1446 = vrot.lane.b32.xlu0 %v1435, 96
    %v1447 = vpop.permute.xlu0 %1446
    %v1449 = vsel %vm969, %v1439, 0
    %v1452 = vsel %vm969, %v1441, 0
    %v1455 = vsel %vm969, %v1445, 0
    %v1458 = vsel %vm969, %v1447, 0
    %1460 = vmatprep.subr.bf16.mxu0 0
    %1461 = vmatpush1.bf16.xpose.msra.mxu0 %v1455
    %1462 = vmatprep.subr.bf16.mxu0 0
    %1463 = vmatpush1.bf16.xpose.msra.mxu0 %v1458
    %1464 = vmatprep.subr.bf16.mxu0 0
    %1465 = vmatpush1.bf16.xpose.msra.mxu0 0
    %1466 = vmatprep.subr.bf16.mxu0 0
    %1467 = vmatpush1.bf16.xpose.msra.mxu0 0
    %1468 = vmatprep.subr.bf16.mxu0 0
    %1469 = vmatpush1.bf16.xpose.msra.mxu0 0
    %1470 = vmatprep.subr.bf16.mxu0 0
    %1471 = vmatpush1.bf16.xpose.msra.mxu0 0
    %1472 = vmatprep.subr.bf16.mxu0 0
    %1473 = vmatpush1.bf16.xpose.msra.mxu0 0
    %1474 = vmatprep.subr.bf16.mxu0 0
    %1475 = vmatpush1.bf16.xpose.msra.mxu0 0
    %1476 = vmatprep.subr.bf16.mxu0 0
    %1477 = vmatpush1.bf16.xpose.msra.mxu0 0
    %1478 = vmatprep.subr.bf16.mxu0 0
    %1479 = vmatpush1.bf16.xpose.msra.mxu0 0
    %1480 = vmatprep.subr.bf16.mxu0 0
    %1481 = vmatpush1.bf16.xpose.msra.mxu0 0
    %1482 = vmatprep.subr.bf16.mxu0 0
    %1483 = vmatpush1.bf16.xpose.msra.mxu0 0
    %1484 = vmatprep.subr.bf16.mxu0 0
    %1485 = vmatpush1.bf16.xpose.msra.mxu0 0
    %1486 = vmatprep.subr.bf16.mxu0 0
    %1487 = vmatpush1.bf16.xpose.msra.mxu0 0
    %1488 = vmatprep.subr.bf16.mxu0 0
    %1489 = vmatpush1.bf16.xpose.msra.mxu0 0
    %1490 = vmatprep.subr.bf16.mxu0 0
    %1491 = vmatpush1.bf16.xpose.msra.mxu0 0
    %1492 = vmatprep.mubr.bf16.mxu0 0
    %1493 = vmatmul.mubr.bf16.gmra.mrb[0].mxu0 %v1449
    %v1494 = vpop.f32.mrb[0].mxu0
    %v1495 = vadd.f32 0.0, %v1494
    %v1496 = vpop.f32.mrb[0].mxu0
    %v1497 = vpop.f32.mrb[0].mxu0
    %v1498 = vadd.f32 0.0, %v1497
    %v1499 = vpop.f32.mrb[0].mxu0
    %1500 = vmatprep.mubr.bf16.mxu0 0
    %1501 = vmatmul.mubr.bf16.gmra.mrb[0].mxu0 %v1452
    %v1502 = vpop.f32.mrb[0].mxu0
    %v1503 = vadd.f32 0.0, %v1502
    %v1504 = vpop.f32.mrb[0].mxu0
    %v1505 = vpop.f32.mrb[0].mxu0
    %v1506 = vadd.f32 0.0, %v1505
    %v1507 = vpop.f32.mrb[0].mxu0
    %1508 = vdwg.mxu0
    %v1509 = vmul.f32 %v1495, 0.17677669
    %v1510 = vmul.f32 %v1498, 0.17677669
    %v1511 = vmul.f32 %v1503, 0.17677669
    %v1512 = vmul.f32 %v1506, 0.17677669
    %v1513 = vsel %vm1113, %v1509, -inf
    %1514 = vmax.xlane.f32.xlu0 %v1513
    %v1515 = vpop.xlane.xlu0 %1514
    %v1516 = vsel %vm1113, %v1510, -inf
    %1517 = vmax.xlane.f32.xlu0 %v1516
    %v1518 = vpop.xlane.xlu0 %1517
    %v1519 = vsel %vm1113, %v1511, -inf
    %1520 = vmax.xlane.f32.xlu0 %v1519
    %v1521 = vpop.xlane.xlu0 %1520
    %v1522 = vsel %vm1113, %v1512, -inf
    %1523 = vmax.xlane.f32.xlu0 %v1522
    %v1524 = vpop.xlane.xlu0 %1523
    %v1525 = vsub.f32 %v1509, %v1515
    %v1526 = vsub.f32 %v1510, %v1518
    %v1527 = vsub.f32 %v1511, %v1521
    %v1528 = vsub.f32 %v1512, %v1524
    %v1529 = vmul.f32 %v1525, 1.442695
    %v1530 = vpow.pop %v1529
    %v1531 = vmul.f32 %v1526, 1.442695
    %v1532 = vpow.pop %v1531
    %v1533 = vmul.f32 %v1527, 1.442695
    %v1534 = vpow.pop %v1533
    %v1535 = vmul.f32 %v1528, 1.442695
    %v1536 = vpow.pop %v1535
    %v1537 = vsel %vm1113, %v1530, 0.0
    %1538 = vadd.xlane.f32.xlu0 %v1537
    %v1539 = vpop.xlane.xlu0 %1538
    %v1540 = vsel %vm1113, %v1532, 0.0
    %1541 = vadd.xlane.f32.xlu0 %v1540
    %v1542 = vpop.xlane.xlu0 %1541
    %v1543 = vsel %vm1113, %v1534, 0.0
    %1544 = vadd.xlane.f32.xlu0 %v1543
    %v1545 = vpop.xlane.xlu0 %1544
    %v1546 = vsel %vm1113, %v1536, 0.0
    %1547 = vadd.xlane.f32.xlu0 %v1546
    %v1548 = vpop.xlane.xlu0 %1547
    %v1549 = vrcp.pop %v1539
    %v1550 = vrcp.pop %v1542
    %v1551 = vrcp.pop %v1545
    %v1552 = vrcp.pop %v1548
    %v1553 = vmul.f32 %v1530, %v1549
    %v1554 = vmul.f32 %v1532, %v1550
    %v1555 = vmul.f32 %v1534, %v1551
    %v1556 = vmul.f32 %v1536, %v1552
    %v1557 = vpack.c.bf16 %v1554, %v1553
    %v1558 = vpack.c.bf16 %v1556, %v1555
    %1559 = vrot.lane.b32.xlu0 %v1160, 32
    %v1560 = vpop.permute.xlu0 %1559
    %1561 = vrot.lane.b32.xlu0 %v1161, 32
    %v1562 = vpop.permute.xlu0 %1561
    %v1565 = vsel %vm1113, %v1557, 0
    %v1568 = vsel %vm1113, %v1558, 0
    %v1571 = vsel %vm1175, %v1562, 0
    %1573 = vmatprep.subr.bf16.mxu0 0
    %1574 = vmatpush1.bf16.msra.mxu0 %v1560
    %1575 = vmatprep.subr.bf16.mxu0 0
    %1576 = vmatpush1.bf16.msra.mxu0 %v1571
    %1577 = vmatprep.subr.bf16.mxu0 0
    %1578 = vmatpush1.bf16.msra.mxu0 0
    %1579 = vmatprep.subr.bf16.mxu0 0
    %1580 = vmatpush1.bf16.msra.mxu0 0
    %1581 = vmatprep.subr.bf16.mxu0 0
    %1582 = vmatpush1.bf16.msra.mxu0 0
    %1583 = vmatprep.subr.bf16.mxu0 0
    %1584 = vmatpush1.bf16.msra.mxu0 0
    %1585 = vmatprep.subr.bf16.mxu0 0
    %1586 = vmatpush1.bf16.msra.mxu0 0
    %1587 = vmatprep.subr.bf16.mxu0 0
    %1588 = vmatpush1.bf16.msra.mxu0 0
    %1589 = vmatprep.subr.bf16.mxu0 0
    %1590 = vmatpush1.bf16.msra.mxu0 0
    %1591 = vmatprep.subr.bf16.mxu0 0
    %1592 = vmatpush1.bf16.msra.mxu0 0
    %1593 = vmatprep.subr.bf16.mxu0 0
    %1594 = vmatpush1.bf16.msra.mxu0 0
    %1595 = vmatprep.subr.bf16.mxu0 0
    %1596 = vmatpush1.bf16.msra.mxu0 0
    %1597 = vmatprep.subr.bf16.mxu0 0
    %1598 = vmatpush1.bf16.msra.mxu0 0
    %1599 = vmatprep.subr.bf16.mxu0 0
    %1600 = vmatpush1.bf16.msra.mxu0 0
    %1601 = vmatprep.subr.bf16.mxu0 0
    %1602 = vmatpush1.bf16.msra.mxu0 0
    %1603 = vmatprep.subr.bf16.mxu0 0
    %1604 = vmatpush1.bf16.msra.mxu0 0
    %1605 = vmatprep.mubr.bf16.mxu0 0
    %1606 = vmatmul.mubr.bf16.gmra.mrb[0].mxu0 %v1565
    %v1607 = vpop.f32.mrb[0].mxu0
    %v1608 = vadd.f32 0.0, %v1607
    %v1609 = vpop.f32.mrb[0].mxu0
    %v1610 = vpop.f32.mrb[0].mxu0
    %v1611 = vadd.f32 0.0, %v1610
    %v1612 = vpop.f32.mrb[0].mxu0
    %1613 = vmatprep.mubr.bf16.mxu0 0
    %1614 = vmatmul.mubr.bf16.gmra.mrb[0].mxu0 %v1568
    %v1615 = vpop.f32.mrb[0].mxu0
    %v1616 = vadd.f32 0.0, %v1615
    %v1617 = vpop.f32.mrb[0].mxu0
    %v1618 = vpop.f32.mrb[0].mxu0
    %v1619 = vadd.f32 0.0, %v1618
    %v1620 = vpop.f32.mrb[0].mxu0
    %1621 = vdwg.mxu0
    %v1622 = vpack.c.bf16 %v1611, %v1608
    %v1627 = vunpack.c.l.b16 %v949
    %v1628 = vunpack.c.l.b16 %v950
    %v1629 = vunpack.c.l.b16 %v951
    %v1630 = vunpack.c.l.b16 %v952
    %v1631 = vpack.c.b16 %v1628, %v1627
    %v1632 = vpack.c.b16 %v1630, %v1629
    %v1636 = vsel %vm969, %v1622, 0
    %1638 = vmatprep.subr.bf16.mxu0 0
    %1639 = vmatpush1.bf16.msra.mxu0 %v1631
    %1640 = vmatprep.subr.bf16.mxu0 0
    %1641 = vmatpush1.bf16.msra.mxu0 %v1632
    %1642 = vmatprep.subr.bf16.mxu0 0
    %1643 = vmatpush1.bf16.msra.mxu0 0
    %1644 = vmatprep.subr.bf16.mxu0 0
    %1645 = vmatpush1.bf16.msra.mxu0 0
    %1646 = vmatprep.subr.bf16.mxu0 0
    %1647 = vmatpush1.bf16.msra.mxu0 0
    %1648 = vmatprep.subr.bf16.mxu0 0
    %1649 = vmatpush1.bf16.msra.mxu0 0
    %1650 = vmatprep.subr.bf16.mxu0 0
    %1651 = vmatpush1.bf16.msra.mxu0 0
    %1652 = vmatprep.subr.bf16.mxu0 0
    %1653 = vmatpush1.bf16.msra.mxu0 0
    %1654 = vmatprep.subr.bf16.mxu0 0
    %1655 = vmatpush1.bf16.msra.mxu0 0
    %1656 = vmatprep.subr.bf16.mxu0 0
    %1657 = vmatpush1.bf16.msra.mxu0 0
    %1658 = vmatprep.subr.bf16.mxu0 0
    %1659 = vmatpush1.bf16.msra.mxu0 0
    %1660 = vmatprep.subr.bf16.mxu0 0
    %1661 = vmatpush1.bf16.msra.mxu0 0
    %1662 = vmatprep.subr.bf16.mxu0 0
    %1663 = vmatpush1.bf16.msra.mxu0 0
    %1664 = vmatprep.subr.bf16.mxu0 0
    %1665 = vmatpush1.bf16.msra.mxu0 0
    %1666 = vmatprep.subr.bf16.mxu0 0
    %1667 = vmatpush1.bf16.msra.mxu0 0
    %1668 = vmatprep.subr.bf16.mxu0 0
    %1669 = vmatpush1.bf16.msra.mxu0 0
    %1670 = vmatprep.mubr.bf16.mxu0 0
    %1671 = vmatmul.mubr.bf16.gmra.mrb[0].mxu0 %v1636
    %v1672 = vpop.f32.mrb[0].mxu0
    %v1673 = vadd.f32 0.0, %v1672
    %v1674 = vpop.f32.mrb[0].mxu0
    %v1675 = vpop.f32.mrb[0].mxu0
    %v1676 = vadd.f32 0.0, %v1675
    %v1677 = vpop.f32.mrb[0].mxu0
    %1678 = vdwg.mxu0
    %v1679 = vadd.f32 %v1336, %v1673
    %v1680 = vadd.f32 %v1339, %v1676
    %v1681 = vpack.c.bf16 %v1619, %v1616
    %v1686 = vunpack.c.l.b16 %v953
    %v1687 = vunpack.c.l.b16 %v954
    %v1688 = vunpack.c.l.b16 %v955
    %v1689 = vunpack.c.l.b16 %v956
    %v1690 = vpack.c.b16 %v1687, %v1686
    %v1691 = vpack.c.b16 %v1689, %v1688
    %v1695 = vsel %vm969, %v1681, 0
    %1697 = vmatprep.subr.bf16.mxu0 0
    %1698 = vmatpush1.bf16.msra.mxu0 %v1690
    %1699 = vmatprep.subr.bf16.mxu0 0
    %1700 = vmatpush1.bf16.msra.mxu0 %v1691
    %1701 = vmatprep.subr.bf16.mxu0 0
    %1702 = vmatpush1.bf16.msra.mxu0 0
    %1703 = vmatprep.subr.bf16.mxu0 0
    %1704 = vmatpush1.bf16.msra.mxu0 0
    %1705 = vmatprep.subr.bf16.mxu0 0
    %1706 = vmatpush1.bf16.msra.mxu0 0
    %1707 = vmatprep.subr.bf16.mxu0 0
    %1708 = vmatpush1.bf16.msra.mxu0 0
    %1709 = vmatprep.subr.bf16.mxu0 0
    %1710 = vmatpush1.bf16.msra.mxu0 0
    %1711 = vmatprep.subr.bf16.mxu0 0
    %1712 = vmatpush1.bf16.msra.mxu0 0
    %1713 = vmatprep.subr.bf16.mxu0 0
    %1714 = vmatpush1.bf16.msra.mxu0 0
    %1715 = vmatprep.subr.bf16.mxu0 0
    %1716 = vmatpush1.bf16.msra.mxu0 0
    %1717 = vmatprep.subr.bf16.mxu0 0
    %1718 = vmatpush1.bf16.msra.mxu0 0
    %1719 = vmatprep.subr.bf16.mxu0 0
    %1720 = vmatpush1.bf16.msra.mxu0 0
    %1721 = vmatprep.subr.bf16.mxu0 0
    %1722 = vmatpush1.bf16.msra.mxu0 0
    %1723 = vmatprep.subr.bf16.mxu0 0
    %1724 = vmatpush1.bf16.msra.mxu0 0
    %1725 = vmatprep.subr.bf16.mxu0 0
    %1726 = vmatpush1.bf16.msra.mxu0 0
    %1727 = vmatprep.subr.bf16.mxu0 0
    %1728 = vmatpush1.bf16.msra.mxu0 0
    %1729 = vmatprep.mubr.bf16.mxu0 0
    %1730 = vmatmul.mubr.bf16.gmra.mrb[0].mxu0 %v1695
    %v1731 = vpop.f32.mrb[0].mxu0
    %v1732 = vadd.f32 0.0, %v1731
    %v1733 = vpop.f32.mrb[0].mxu0
    %v1734 = vpop.f32.mrb[0].mxu0
    %v1735 = vadd.f32 0.0, %v1734
    %v1736 = vpop.f32.mrb[0].mxu0
    %1737 = vdwg.mxu0
    %v1738 = vadd.f32 %v1679, %v1732
    %v1739 = vadd.f32 %v1680, %v1735
    %v1740 = vlaneseq
    %v1741 = vshrl.u32 %v1740, 7
    %v1742 = vsub.s32 0, %v1741
    %v1743 = vrot.slane %v569, %v1742
    %v1744 = vmul.f32 %v1743, %v1738
    %v1745 = vmul.f32 %v1743, %v1739
    %1748 = vrot.lane.b32.xlu0 %v825, 96
    %v1749 = vpop.permute.xlu0 %1748
    %1750 = vrot.lane.b32.xlu0 %v829, 96
    %v1751 = vpop.permute.xlu0 %1750
    %v1754 = vmul.f32 %v825, %v825
    %v1755 = vmul.f32 %v829, %v829
    %v1756 = vmul.f32 %v1749, %v1749
    %v1757 = vmul.f32 %v1751, %v1751
    %v1758 = vsel %vm969, %v1754, 0.0
    %1759 = vadd.xlane.f32.xlu0 %v1758
    %v1760 = vpop.xlane.xlu0 %1759
    %v1761 = vsel %vm969, %v1755, 0.0
    %1762 = vadd.xlane.f32.xlu0 %v1761
    %v1763 = vpop.xlane.xlu0 %1762
    %v1764 = vsel %vm969, %v1756, 0.0
    %1765 = vadd.xlane.f32.xlu0 %v1764
    %v1766 = vpop.xlane.xlu0 %1765
    %v1767 = vsel %vm969, %v1757, 0.0
    %1768 = vadd.xlane.f32.xlu0 %v1767
    %v1769 = vpop.xlane.xlu0 %1768
    %v1770 = vmul.f32 %v1760, %v982
    %v1771 = vmul.f32 %v1763, %v982
    %v1772 = vmul.f32 %v1766, %v982
    %v1773 = vmul.f32 %v1769, %v982
    %v1774 = vadd.f32 %v1770, 1e-06
    %v1775 = vadd.f32 %v1771, 1e-06
    %v1776 = vadd.f32 %v1772, 1e-06
    %v1777 = vadd.f32 %v1773, 1e-06
    %v1778 = vrsqrt.pop %v1774
    %v1779 = vrsqrt.pop %v1775
    %v1780 = vrsqrt.pop %v1776
    %v1781 = vrsqrt.pop %v1777
    %v1782 = vmul.f32 %v825, %v1778
    %v1783 = vmul.f32 %v829, %v1779
    %v1784 = vmul.f32 %v1749, %v1780
    %v1785 = vmul.f32 %v1751, %v1781
    %v1786 = vmul.f32 %v1782, %v1004
    %v1787 = vmul.f32 %v1783, %v1004
    %v1788 = vmul.f32 %v1784, %v1004
    %v1789 = vmul.f32 %v1785, %v1004
    %v1790 = vmul.f32 %v827, %v827
    %v1791 = vmul.f32 %v831, %v831
    %v1792 = vsel %vm969, %v1790, 0.0
    %1793 = vadd.xlane.f32.xlu0 %v1792
    %v1794 = vpop.xlane.xlu0 %1793
    %v1795 = vsel %vm969, %v1791, 0.0
    %1796 = vadd.xlane.f32.xlu0 %v1795
    %v1797 = vpop.xlane.xlu0 %1796
    %v1798 = vmul.f32 %v1794, %v982
    %v1799 = vmul.f32 %v1797, %v982
    %v1800 = vadd.f32 %v1798, 1e-06
    %v1801 = vadd.f32 %v1799, 1e-06
    %v1802 = vrsqrt.pop %v1800
    %v1803 = vrsqrt.pop %v1801
    %v1804 = vmul.f32 %v827, %v1802
    %v1805 = vmul.f32 %v831, %v1803
    %v1806 = vmul.f32 %v1804, %v1031
    %v1807 = vmul.f32 %v1805, %v1031
    %v1808 = vmul.f32 %v936, %v936
    %v1809 = vsel %vm969, %v1808, 0.0
    %1810 = vadd.xlane.f32.xlu0 %v1809
    %v1811 = vpop.xlane.xlu0 %1810
    %v1812 = vmul.f32 %v1811, %v982
    %v1813 = vadd.f32 %v1812, 1e-06
    %v1814 = vrsqrt.pop %v1813
    %v1815 = vmul.f32 %v936, %v1814
    %v1816 = vmul.f32 %v1815, %v1031
    %v1817 = vpack.c.bf16 %v1787, %v1786
    %v1818 = vpack.c.bf16 %v1789, %v1788
    %v1819 = vpack.c.bf16 %v1806, %v1816
    %v1820 = vpack.c.bf16 %v1807, %v1807
    %v1822 = vsel %vm969, %v1817, 0
    %v1825 = vsel %vm969, %v1818, 0
    %v1828 = vsel %vm969, %v1819, 0
    %v1831 = vsel %vm969, %v1820, 0
    %1833 = vmatprep.subr.bf16.mxu0 0
    %1834 = vmatpush1.bf16.xpose.msra.mxu0 %v1828
    %1835 = vmatprep.subr.bf16.mxu0 0
    %1836 = vmatpush1.bf16.xpose.msra.mxu0 %v1831
    %1837 = vmatprep.subr.bf16.mxu0 0
    %1838 = vmatpush1.bf16.xpose.msra.mxu0 0
    %1839 = vmatprep.subr.bf16.mxu0 0
    %1840 = vmatpush1.bf16.xpose.msra.mxu0 0
    %1841 = vmatprep.subr.bf16.mxu0 0
    %1842 = vmatpush1.bf16.xpose.msra.mxu0 0
    %1843 = vmatprep.subr.bf16.mxu0 0
    %1844 = vmatpush1.bf16.xpose.msra.mxu0 0
    %1845 = vmatprep.subr.bf16.mxu0 0
    %1846 = vmatpush1.bf16.xpose.msra.mxu0 0
    %1847 = vmatprep.subr.bf16.mxu0 0
    %1848 = vmatpush1.bf16.xpose.msra.mxu0 0
    %1849 = vmatprep.subr.bf16.mxu0 0
    %1850 = vmatpush1.bf16.xpose.msra.mxu0 0
    %1851 = vmatprep.subr.bf16.mxu0 0
    %1852 = vmatpush1.bf16.xpose.msra.mxu0 0
    %1853 = vmatprep.subr.bf16.mxu0 0
    %1854 = vmatpush1.bf16.xpose.msra.mxu0 0
    %1855 = vmatprep.subr.bf16.mxu0 0
    %1856 = vmatpush1.bf16.xpose.msra.mxu0 0
    %1857 = vmatprep.subr.bf16.mxu0 0
    %1858 = vmatpush1.bf16.xpose.msra.mxu0 0
    %1859 = vmatprep.subr.bf16.mxu0 0
    %1860 = vmatpush1.bf16.xpose.msra.mxu0 0
    %1861 = vmatprep.subr.bf16.mxu0 0
    %1862 = vmatpush1.bf16.xpose.msra.mxu0 0
    %1863 = vmatprep.subr.bf16.mxu0 0
    %1864 = vmatpush1.bf16.xpose.msra.mxu0 0
    %1865 = vmatprep.mubr.bf16.mxu0 0
    %1866 = vmatmul.mubr.bf16.gmra.mrb[0].mxu0 %v1822
    %v1867 = vpop.f32.mrb[0].mxu0
    %v1868 = vadd.f32 0.0, %v1867
    %v1869 = vpop.f32.mrb[0].mxu0
    %v1870 = vpop.f32.mrb[0].mxu0
    %v1871 = vadd.f32 0.0, %v1870
    %v1872 = vpop.f32.mrb[0].mxu0
    %1873 = vmatprep.mubr.bf16.mxu0 0
    %1874 = vmatmul.mubr.bf16.gmra.mrb[0].mxu0 %v1825
    %v1875 = vpop.f32.mrb[0].mxu0
    %v1876 = vadd.f32 0.0, %v1875
    %v1877 = vpop.f32.mrb[0].mxu0
    %v1878 = vpop.f32.mrb[0].mxu0
    %v1879 = vadd.f32 0.0, %v1878
    %v1880 = vpop.f32.mrb[0].mxu0
    %1881 = vdwg.mxu0
    %v1882 = vmul.f32 %v1868, 0.17677669
    %v1883 = vmul.f32 %v1871, 0.17677669
    %v1884 = vmul.f32 %v1876, 0.17677669
    %v1885 = vmul.f32 %v1879, 0.17677669
    %v1886 = vsel %vm1113, %v1882, -inf
    %1887 = vmax.xlane.f32.xlu0 %v1886
    %v1888 = vpop.xlane.xlu0 %1887
    %v1889 = vsel %vm1113, %v1883, -inf
    %1890 = vmax.xlane.f32.xlu0 %v1889
    %v1891 = vpop.xlane.xlu0 %1890
    %v1892 = vsel %vm1113, %v1884, -inf
    %1893 = vmax.xlane.f32.xlu0 %v1892
    %v1894 = vpop.xlane.xlu0 %1893
    %v1895 = vsel %vm1113, %v1885, -inf
    %1896 = vmax.xlane.f32.xlu0 %v1895
    %v1897 = vpop.xlane.xlu0 %1896
    %v1898 = vsub.f32 %v1882, %v1888
    %v1899 = vsub.f32 %v1883, %v1891
    %v1900 = vsub.f32 %v1884, %v1894
    %v1901 = vsub.f32 %v1885, %v1897
    %v1902 = vmul.f32 %v1898, 1.442695
    %v1903 = vpow.pop %v1902
    %v1904 = vmul.f32 %v1899, 1.442695
    %v1905 = vpow.pop %v1904
    %v1906 = vmul.f32 %v1900, 1.442695
    %v1907 = vpow.pop %v1906
    %v1908 = vmul.f32 %v1901, 1.442695
    %v1909 = vpow.pop %v1908
    %v1910 = vsel %vm1113, %v1903, 0.0
    %1911 = vadd.xlane.f32.xlu0 %v1910
    %v1912 = vpop.xlane.xlu0 %1911
    %v1913 = vsel %vm1113, %v1905, 0.0
    %1914 = vadd.xlane.f32.xlu0 %v1913
    %v1915 = vpop.xlane.xlu0 %1914
    %v1916 = vsel %vm1113, %v1907, 0.0
    %1917 = vadd.xlane.f32.xlu0 %v1916
    %v1918 = vpop.xlane.xlu0 %1917
    %v1919 = vsel %vm1113, %v1909, 0.0
    %1920 = vadd.xlane.f32.xlu0 %v1919
    %v1921 = vpop.xlane.xlu0 %1920
    %v1922 = vrcp.pop %v1912
    %v1923 = vrcp.pop %v1915
    %v1924 = vrcp.pop %v1918
    %v1925 = vrcp.pop %v1921
    %v1926 = vmul.f32 %v1903, %v1922
    %v1927 = vmul.f32 %v1905, %v1923
    %v1928 = vmul.f32 %v1907, %v1924
    %v1929 = vmul.f32 %v1909, %v1925
    %v1930 = vpack.c.bf16 %v1927, %v1926
    %v1931 = vpack.c.bf16 %v1929, %v1928
    %v1932 = vpack.c.bf16 %v827, %v936
    %v1933 = vpack.c.bf16 %v831, %v831
    %1936 = vrot.lane.b32.xlu0 %v1932, 64
    %v1937 = vpop.permute.xlu0 %1936
    %1938 = vrot.lane.b32.xlu0 %v1933, 64
    %v1939 = vpop.permute.xlu0 %1938
    %v1942 = vsel %vm1113, %v1930, 0
    %v1945 = vsel %vm1113, %v1931, 0
    %v1948 = vsel %vm1175, %v1939, 0
    %1950 = vmatprep.subr.bf16.mxu0 0
    %1951 = vmatpush1.bf16.msra.mxu0 %v1937
    %1952 = vmatprep.subr.bf16.mxu0 0
    %1953 = vmatpush1.bf16.msra.mxu0 %v1948
    %1954 = vmatprep.subr.bf16.mxu0 0
    %1955 = vmatpush1.bf16.msra.mxu0 0
    %1956 = vmatprep.subr.bf16.mxu0 0
    %1957 = vmatpush1.bf16.msra.mxu0 0
    %1958 = vmatprep.subr.bf16.mxu0 0
    %1959 = vmatpush1.bf16.msra.mxu0 0
    %1960 = vmatprep.subr.bf16.mxu0 0
    %1961 = vmatpush1.bf16.msra.mxu0 0
    %1962 = vmatprep.subr.bf16.mxu0 0
    %1963 = vmatpush1.bf16.msra.mxu0 0
    %1964 = vmatprep.subr.bf16.mxu0 0
    %1965 = vmatpush1.bf16.msra.mxu0 0
    %1966 = vmatprep.subr.bf16.mxu0 0
    %1967 = vmatpush1.bf16.msra.mxu0 0
    %1968 = vmatprep.subr.bf16.mxu0 0
    %1969 = vmatpush1.bf16.msra.mxu0 0
    %1970 = vmatprep.subr.bf16.mxu0 0
    %1971 = vmatpush1.bf16.msra.mxu0 0
    %1972 = vmatprep.subr.bf16.mxu0 0
    %1973 = vmatpush1.bf16.msra.mxu0 0
    %1974 = vmatprep.subr.bf16.mxu0 0
    %1975 = vmatpush1.bf16.msra.mxu0 0
    %1976 = vmatprep.subr.bf16.mxu0 0
    %1977 = vmatpush1.bf16.msra.mxu0 0
    %1978 = vmatprep.subr.bf16.mxu0 0
    %1979 = vmatpush1.bf16.msra.mxu0 0
    %1980 = vmatprep.subr.bf16.mxu0 0
    %1981 = vmatpush1.bf16.msra.mxu0 0
    %1982 = vmatprep.mubr.bf16.mxu0 0
    %1983 = vmatmul.mubr.bf16.gmra.mrb[0].mxu0 %v1942
    %v1984 = vpop.f32.mrb[0].mxu0
    %v1985 = vadd.f32 0.0, %v1984
    %v1986 = vpop.f32.mrb[0].mxu0
    %v1987 = vpop.f32.mrb[0].mxu0
    %v1988 = vadd.f32 0.0, %v1987
    %v1989 = vpop.f32.mrb[0].mxu0
    %1990 = vmatprep.mubr.bf16.mxu0 0
    %1991 = vmatmul.mubr.bf16.gmra.mrb[0].mxu0 %v1945
    %v1992 = vpop.f32.mrb[0].mxu0
    %v1993 = vadd.f32 0.0, %v1992
    %v1994 = vpop.f32.mrb[0].mxu0
    %v1995 = vpop.f32.mrb[0].mxu0
    %v1996 = vadd.f32 0.0, %v1995
    %v1997 = vpop.f32.mrb[0].mxu0
    %1998 = vdwg.mxu0
    %v1999 = vpack.c.bf16 %v1988, %v1985
    %v2000 = vpack.c.bf16 %v1996, %v1993
    %v2002 = vsel %vm969, %v2000, 0
    %2004 = vmatprep.subr.bf16.mxu0 0
    %2005 = vmatpush1.bf16.msra.mxu0 %v1238
    %2006 = vmatprep.subr.bf16.mxu0 0
    %2007 = vmatpush1.bf16.msra.mxu0 %v1239
    %2008 = vmatprep.subr.bf16.mxu0 0
    %2009 = vmatpush1.bf16.msra.mxu0 0
    %2010 = vmatprep.subr.bf16.mxu0 0
    %2011 = vmatpush1.bf16.msra.mxu0 0
    %2012 = vmatprep.subr.bf16.mxu0 0
    %2013 = vmatpush1.bf16.msra.mxu0 0
    %2014 = vmatprep.subr.bf16.mxu0 0
    %2015 = vmatpush1.bf16.msra.mxu0 0
    %2016 = vmatprep.subr.bf16.mxu0 0
    %2017 = vmatpush1.bf16.msra.mxu0 0
    %2018 = vmatprep.subr.bf16.mxu0 0
    %2019 = vmatpush1.bf16.msra.mxu0 0
    %2020 = vmatprep.subr.bf16.mxu0 0
    %2021 = vmatpush1.bf16.msra.mxu0 0
    %2022 = vmatprep.subr.bf16.mxu0 0
    %2023 = vmatpush1.bf16.msra.mxu0 0
    %2024 = vmatprep.subr.bf16.mxu0 0
    %2025 = vmatpush1.bf16.msra.mxu0 0
    %2026 = vmatprep.subr.bf16.mxu0 0
    %2027 = vmatpush1.bf16.msra.mxu0 0
    %2028 = vmatprep.subr.bf16.mxu0 0
    %2029 = vmatpush1.bf16.msra.mxu0 0
    %2030 = vmatprep.subr.bf16.mxu0 0
    %2031 = vmatpush1.bf16.msra.mxu0 0
    %2032 = vmatprep.subr.bf16.mxu0 0
    %2033 = vmatpush1.bf16.msra.mxu0 0
    %2034 = vmatprep.subr.bf16.mxu0 0
    %2035 = vmatpush1.bf16.msra.mxu0 0
    %2036 = vmatprep.mubr.bf16.mxu0 0
    %2037 = vmatmul.mubr.bf16.gmra.mrb[0].mxu0 %v2002
    %v2038 = vpop.f32.mrb[0].mxu0
    %v2039 = vadd.f32 0.0, %v2038
    %v2040 = vpop.f32.mrb[0].mxu0
    %v2041 = vpop.f32.mrb[0].mxu0
    %v2042 = vadd.f32 0.0, %v2041
    %v2043 = vpop.f32.mrb[0].mxu0
    %2044 = vdwg.mxu0
    %v2046 = vsel %vm969, %v1999, 0
    %2048 = vmatprep.subr.bf16.mxu0 0
    %2049 = vmatpush1.bf16.msra.mxu0 %v1294
    %2050 = vmatprep.subr.bf16.mxu0 0
    %2051 = vmatpush1.bf16.msra.mxu0 %v1295
    %2052 = vmatprep.subr.bf16.mxu0 0
    %2053 = vmatpush1.bf16.msra.mxu0 0
    %2054 = vmatprep.subr.bf16.mxu0 0
    %2055 = vmatpush1.bf16.msra.mxu0 0
    %2056 = vmatprep.subr.bf16.mxu0 0
    %2057 = vmatpush1.bf16.msra.mxu0 0
    %2058 = vmatprep.subr.bf16.mxu0 0
    %2059 = vmatpush1.bf16.msra.mxu0 0
    %2060 = vmatprep.subr.bf16.mxu0 0
    %2061 = vmatpush1.bf16.msra.mxu0 0
    %2062 = vmatprep.subr.bf16.mxu0 0
    %2063 = vmatpush1.bf16.msra.mxu0 0
    %2064 = vmatprep.subr.bf16.mxu0 0
    %2065 = vmatpush1.bf16.msra.mxu0 0
    %2066 = vmatprep.subr.bf16.mxu0 0
    %2067 = vmatpush1.bf16.msra.mxu0 0
    %2068 = vmatprep.subr.bf16.mxu0 0
    %2069 = vmatpush1.bf16.msra.mxu0 0
    %2070 = vmatprep.subr.bf16.mxu0 0
    %2071 = vmatpush1.bf16.msra.mxu0 0
    %2072 = vmatprep.subr.bf16.mxu0 0
    %2073 = vmatpush1.bf16.msra.mxu0 0
    %2074 = vmatprep.subr.bf16.mxu0 0
    %2075 = vmatpush1.bf16.msra.mxu0 0
    %2076 = vmatprep.subr.bf16.mxu0 0
    %2077 = vmatpush1.bf16.msra.mxu0 0
    %2078 = vmatprep.subr.bf16.mxu0 0
    %2079 = vmatpush1.bf16.msra.mxu0 0
    %2080 = vmatprep.mubr.bf16.mxu0 0
    %2081 = vmatmul.mubr.bf16.gmra.mrb[0].mxu0 %v2046
    %v2082 = vpop.f32.mrb[0].mxu0
    %v2083 = vadd.f32 %v2039, %v2082
    %v2084 = vpop.f32.mrb[0].mxu0
    %v2085 = vpop.f32.mrb[0].mxu0
    %v2086 = vadd.f32 %v2042, %v2085
    %v2087 = vpop.f32.mrb[0].mxu0
    %2088 = vdwg.mxu0
    %2093 = vrot.lane.b32.xlu0 %v1754, 64
    %v2094 = vpop.permute.xlu0 %2093
    %2095 = vrot.lane.b32.xlu0 %v1755, 64
    %v2096 = vpop.permute.xlu0 %2095
    %2097 = vrot.lane.b32.xlu0 %v1756, 64
    %v2098 = vpop.permute.xlu0 %2097
    %2099 = vrot.lane.b32.xlu0 %v1757, 64
    %v2100 = vpop.permute.xlu0 %2099
    %v2105 = vsel %vm969, %v2094, 0.0
    %2106 = vadd.xlane.f32.xlu0 %v2105
    %v2107 = vpop.xlane.xlu0 %2106
    %v2108 = vsel %vm969, %v2096, 0.0
    %2109 = vadd.xlane.f32.xlu0 %v2108
    %v2110 = vpop.xlane.xlu0 %2109
    %v2111 = vsel %vm969, %v2098, 0.0
    %2112 = vadd.xlane.f32.xlu0 %v2111
    %v2113 = vpop.xlane.xlu0 %2112
    %v2114 = vsel %vm969, %v2100, 0.0
    %2115 = vadd.xlane.f32.xlu0 %v2114
    %v2116 = vpop.xlane.xlu0 %2115
    %v2117 = vmul.f32 %v2107, %v982
    %v2118 = vmul.f32 %v2110, %v982
    %v2119 = vmul.f32 %v2113, %v982
    %v2120 = vmul.f32 %v2116, %v982
    %v2121 = vadd.f32 %v2117, 1e-06
    %v2122 = vadd.f32 %v2118, 1e-06
    %v2123 = vadd.f32 %v2119, 1e-06
    %v2124 = vadd.f32 %v2120, 1e-06
    %v2125 = vrsqrt.pop %v2121
    %v2126 = vrsqrt.pop %v2122
    %v2127 = vrsqrt.pop %v2123
    %v2128 = vrsqrt.pop %v2124
    %v2129 = vmul.f32 %v825, %v2125
    %v2130 = vmul.f32 %v829, %v2126
    %v2131 = vmul.f32 %v1749, %v2127
    %v2132 = vmul.f32 %v1751, %v2128
    %v2133 = vmul.f32 %v2129, %v1387
    %v2134 = vmul.f32 %v2130, %v1387
    %v2135 = vmul.f32 %v2131, %v1387
    %v2136 = vmul.f32 %v2132, %v1387
    %2139 = vrot.lane.b32.xlu0 %v1790, 96
    %v2140 = vpop.permute.xlu0 %2139
    %2141 = vrot.lane.b32.xlu0 %v1791, 96
    %v2142 = vpop.permute.xlu0 %2141
    %v2145 = vsel %vm969, %v2140, 0.0
    %2146 = vadd.xlane.f32.xlu0 %v2145
    %v2147 = vpop.xlane.xlu0 %2146
    %v2148 = vsel %vm969, %v2142, 0.0
    %2149 = vadd.xlane.f32.xlu0 %v2148
    %v2150 = vpop.xlane.xlu0 %2149
    %v2151 = vmul.f32 %v2147, %v982
    %v2152 = vmul.f32 %v2150, %v982
    %v2153 = vadd.f32 %v2151, 1e-06
    %v2154 = vadd.f32 %v2152, 1e-06
    %v2155 = vrsqrt.pop %v2153
    %v2156 = vrsqrt.pop %v2154
    %v2157 = vmul.f32 %v827, %v2155
    %v2158 = vmul.f32 %v831, %v2156
    %v2159 = vmul.f32 %v2157, %v1416
    %v2160 = vmul.f32 %v2158, %v1416
    %2162 = vrot.lane.b32.xlu0 %v1808, 96
    %v2163 = vpop.permute.xlu0 %2162
    %v2165 = vsel %vm969, %v2163, 0.0
    %2166 = vadd.xlane.f32.xlu0 %v2165
    %v2167 = vpop.xlane.xlu0 %2166
    %v2168 = vmul.f32 %v2167, %v982
    %v2169 = vadd.f32 %v2168, 1e-06
    %v2170 = vrsqrt.pop %v2169
    %v2171 = vmul.f32 %v936, %v2170
    %v2172 = vmul.f32 %v2171, %v1416
    %v2173 = vpack.c.bf16 %v2134, %v2133
    %v2174 = vpack.c.bf16 %v2136, %v2135
    %v2175 = vpack.c.bf16 %v2159, %v2172
    %v2176 = vpack.c.bf16 %v2160, %v2160
    %2179 = vrot.lane.b32.xlu0 %v2173, 64
    %v2180 = vpop.permute.xlu0 %2179
    %2181 = vrot.lane.b32.xlu0 %v2174, 64
    %v2182 = vpop.permute.xlu0 %2181
    %2185 = vrot.lane.b32.xlu0 %v2175, 96
    %v2186 = vpop.permute.xlu0 %2185
    %2187 = vrot.lane.b32.xlu0 %v2176, 96
    %v2188 = vpop.permute.xlu0 %2187
    %v2190 = vsel %vm969, %v2180, 0
    %v2193 = vsel %vm969, %v2182, 0
    %v2196 = vsel %vm969, %v2186, 0
    %v2199 = vsel %vm969, %v2188, 0
    %2201 = vmatprep.subr.bf16.mxu0 0
    %2202 = vmatpush1.bf16.xpose.msra.mxu0 %v2196
    %2203 = vmatprep.subr.bf16.mxu0 0
    %2204 = vmatpush1.bf16.xpose.msra.mxu0 %v2199
    %2205 = vmatprep.subr.bf16.mxu0 0
    %2206 = vmatpush1.bf16.xpose.msra.mxu0 0
    %2207 = vmatprep.subr.bf16.mxu0 0
    %2208 = vmatpush1.bf16.xpose.msra.mxu0 0
    %2209 = vmatprep.subr.bf16.mxu0 0
    %2210 = vmatpush1.bf16.xpose.msra.mxu0 0
    %2211 = vmatprep.subr.bf16.mxu0 0
    %2212 = vmatpush1.bf16.xpose.msra.mxu0 0
    %2213 = vmatprep.subr.bf16.mxu0 0
    %2214 = vmatpush1.bf16.xpose.msra.mxu0 0
    %2215 = vmatprep.subr.bf16.mxu0 0
    %2216 = vmatpush1.bf16.xpose.msra.mxu0 0
    %2217 = vmatprep.subr.bf16.mxu0 0
    %2218 = vmatpush1.bf16.xpose.msra.mxu0 0
    %2219 = vmatprep.subr.bf16.mxu0 0
    %2220 = vmatpush1.bf16.xpose.msra.mxu0 0
    %2221 = vmatprep.subr.bf16.mxu0 0
    %2222 = vmatpush1.bf16.xpose.msra.mxu0 0
    %2223 = vmatprep.subr.bf16.mxu0 0
    %2224 = vmatpush1.bf16.xpose.msra.mxu0 0
    %2225 = vmatprep.subr.bf16.mxu0 0
    %2226 = vmatpush1.bf16.xpose.msra.mxu0 0
    %2227 = vmatprep.subr.bf16.mxu0 0
    %2228 = vmatpush1.bf16.xpose.msra.mxu0 0
    %2229 = vmatprep.subr.bf16.mxu0 0
    %2230 = vmatpush1.bf16.xpose.msra.mxu0 0
    %2231 = vmatprep.subr.bf16.mxu0 0
    %2232 = vmatpush1.bf16.xpose.msra.mxu0 0
    %2233 = vmatprep.mubr.bf16.mxu0 0
    %2234 = vmatmul.mubr.bf16.gmra.mrb[0].mxu0 %v2190
    %v2235 = vpop.f32.mrb[0].mxu0
    %v2236 = vadd.f32 0.0, %v2235
    %v2237 = vpop.f32.mrb[0].mxu0
    %v2238 = vpop.f32.mrb[0].mxu0
    %v2239 = vadd.f32 0.0, %v2238
    %v2240 = vpop.f32.mrb[0].mxu0
    %2241 = vmatprep.mubr.bf16.mxu0 0
    %2242 = vmatmul.mubr.bf16.gmra.mrb[0].mxu0 %v2193
    %v2243 = vpop.f32.mrb[0].mxu0
    %v2244 = vadd.f32 0.0, %v2243
    %v2245 = vpop.f32.mrb[0].mxu0
    %v2246 = vpop.f32.mrb[0].mxu0
    %v2247 = vadd.f32 0.0, %v2246
    %v2248 = vpop.f32.mrb[0].mxu0
    %2249 = vdwg.mxu0
    %v2250 = vmul.f32 %v2236, 0.17677669
    %v2251 = vmul.f32 %v2239, 0.17677669
    %v2252 = vmul.f32 %v2244, 0.17677669
    %v2253 = vmul.f32 %v2247, 0.17677669
    %v2254 = vsel %vm1113, %v2250, -inf
    %2255 = vmax.xlane.f32.xlu0 %v2254
    %v2256 = vpop.xlane.xlu0 %2255
    %v2257 = vsel %vm1113, %v2251, -inf
    %2258 = vmax.xlane.f32.xlu0 %v2257
    %v2259 = vpop.xlane.xlu0 %2258
    %v2260 = vsel %vm1113, %v2252, -inf
    %2261 = vmax.xlane.f32.xlu0 %v2260
    %v2262 = vpop.xlane.xlu0 %2261
    %v2263 = vsel %vm1113, %v2253, -inf
    %2264 = vmax.xlane.f32.xlu0 %v2263
    %v2265 = vpop.xlane.xlu0 %2264
    %v2266 = vsub.f32 %v2250, %v2256
    %v2267 = vsub.f32 %v2251, %v2259
    %v2268 = vsub.f32 %v2252, %v2262
    %v2269 = vsub.f32 %v2253, %v2265
    %v2270 = vmul.f32 %v2266, 1.442695
    %v2271 = vpow.pop %v2270
    %v2272 = vmul.f32 %v2267, 1.442695
    %v2273 = vpow.pop %v2272
    %v2274 = vmul.f32 %v2268, 1.442695
    %v2275 = vpow.pop %v2274
    %v2276 = vmul.f32 %v2269, 1.442695
    %v2277 = vpow.pop %v2276
    %v2278 = vsel %vm1113, %v2271, 0.0
    %2279 = vadd.xlane.f32.xlu0 %v2278
    %v2280 = vpop.xlane.xlu0 %2279
    %v2281 = vsel %vm1113, %v2273, 0.0
    %2282 = vadd.xlane.f32.xlu0 %v2281
    %v2283 = vpop.xlane.xlu0 %2282
    %v2284 = vsel %vm1113, %v2275, 0.0
    %2285 = vadd.xlane.f32.xlu0 %v2284
    %v2286 = vpop.xlane.xlu0 %2285
    %v2287 = vsel %vm1113, %v2277, 0.0
    %2288 = vadd.xlane.f32.xlu0 %v2287
    %v2289 = vpop.xlane.xlu0 %2288
    %v2290 = vrcp.pop %v2280
    %v2291 = vrcp.pop %v2283
    %v2292 = vrcp.pop %v2286
    %v2293 = vrcp.pop %v2289
    %v2294 = vmul.f32 %v2271, %v2290
    %v2295 = vmul.f32 %v2273, %v2291
    %v2296 = vmul.f32 %v2275, %v2292
    %v2297 = vmul.f32 %v2277, %v2293
    %v2298 = vpack.c.bf16 %v2295, %v2294
    %v2299 = vpack.c.bf16 %v2297, %v2296
    %2300 = vrot.lane.b32.xlu0 %v1932, 32
    %v2301 = vpop.permute.xlu0 %2300
    %2302 = vrot.lane.b32.xlu0 %v1933, 32
    %v2303 = vpop.permute.xlu0 %2302
    %v2306 = vsel %vm1113, %v2298, 0
    %v2309 = vsel %vm1113, %v2299, 0
    %v2312 = vsel %vm1175, %v2303, 0
    %2314 = vmatprep.subr.bf16.mxu0 0
    %2315 = vmatpush1.bf16.msra.mxu0 %v2301
    %2316 = vmatprep.subr.bf16.mxu0 0
    %2317 = vmatpush1.bf16.msra.mxu0 %v2312
    %2318 = vmatprep.subr.bf16.mxu0 0
    %2319 = vmatpush1.bf16.msra.mxu0 0
    %2320 = vmatprep.subr.bf16.mxu0 0
    %2321 = vmatpush1.bf16.msra.mxu0 0
    %2322 = vmatprep.subr.bf16.mxu0 0
    %2323 = vmatpush1.bf16.msra.mxu0 0
    %2324 = vmatprep.subr.bf16.mxu0 0
    %2325 = vmatpush1.bf16.msra.mxu0 0
    %2326 = vmatprep.subr.bf16.mxu0 0
    %2327 = vmatpush1.bf16.msra.mxu0 0
    %2328 = vmatprep.subr.bf16.mxu0 0
    %2329 = vmatpush1.bf16.msra.mxu0 0
    %2330 = vmatprep.subr.bf16.mxu0 0
    %2331 = vmatpush1.bf16.msra.mxu0 0
    %2332 = vmatprep.subr.bf16.mxu0 0
    %2333 = vmatpush1.bf16.msra.mxu0 0
    %2334 = vmatprep.subr.bf16.mxu0 0
    %2335 = vmatpush1.bf16.msra.mxu0 0
    %2336 = vmatprep.subr.bf16.mxu0 0
    %2337 = vmatpush1.bf16.msra.mxu0 0
    %2338 = vmatprep.subr.bf16.mxu0 0
    %2339 = vmatpush1.bf16.msra.mxu0 0
    %2340 = vmatprep.subr.bf16.mxu0 0
    %2341 = vmatpush1.bf16.msra.mxu0 0
    %2342 = vmatprep.subr.bf16.mxu0 0
    %2343 = vmatpush1.bf16.msra.mxu0 0
    %2344 = vmatprep.subr.bf16.mxu0 0
    %2345 = vmatpush1.bf16.msra.mxu0 0
    %2346 = vmatprep.mubr.bf16.mxu0 0
    %2347 = vmatmul.mubr.bf16.gmra.mrb[0].mxu0 %v2306
    %v2348 = vpop.f32.mrb[0].mxu0
    %v2349 = vadd.f32 0.0, %v2348
    %v2350 = vpop.f32.mrb[0].mxu0
    %v2351 = vpop.f32.mrb[0].mxu0
    %v2352 = vadd.f32 0.0, %v2351
    %v2353 = vpop.f32.mrb[0].mxu0
    %2354 = vmatprep.mubr.bf16.mxu0 0
    %2355 = vmatmul.mubr.bf16.gmra.mrb[0].mxu0 %v2309
    %v2356 = vpop.f32.mrb[0].mxu0
    %v2357 = vadd.f32 0.0, %v2356
    %v2358 = vpop.f32.mrb[0].mxu0
    %v2359 = vpop.f32.mrb[0].mxu0
    %v2360 = vadd.f32 0.0, %v2359
    %v2361 = vpop.f32.mrb[0].mxu0
    %2362 = vdwg.mxu0
    %v2363 = vpack.c.bf16 %v2352, %v2349
    %v2365 = vsel %vm969, %v2363, 0
    %2367 = vmatprep.subr.bf16.mxu0 0
    %2368 = vmatpush1.bf16.msra.mxu0 %v1631
    %2369 = vmatprep.subr.bf16.mxu0 0
    %2370 = vmatpush1.bf16.msra.mxu0 %v1632
    %2371 = vmatprep.subr.bf16.mxu0 0
    %2372 = vmatpush1.bf16.msra.mxu0 0
    %2373 = vmatprep.subr.bf16.mxu0 0
    %2374 = vmatpush1.bf16.msra.mxu0 0
    %2375 = vmatprep.subr.bf16.mxu0 0
    %2376 = vmatpush1.bf16.msra.mxu0 0
    %2377 = vmatprep.subr.bf16.mxu0 0
    %2378 = vmatpush1.bf16.msra.mxu0 0
    %2379 = vmatprep.subr.bf16.mxu0 0
    %2380 = vmatpush1.bf16.msra.mxu0 0
    %2381 = vmatprep.subr.bf16.mxu0 0
    %2382 = vmatpush1.bf16.msra.mxu0 0
    %2383 = vmatprep.subr.bf16.mxu0 0
    %2384 = vmatpush1.bf16.msra.mxu0 0
    %2385 = vmatprep.subr.bf16.mxu0 0
    %2386 = vmatpush1.bf16.msra.mxu0 0
    %2387 = vmatprep.subr.bf16.mxu0 0
    %2388 = vmatpush1.bf16.msra.mxu0 0
    %2389 = vmatprep.subr.bf16.mxu0 0
    %2390 = vmatpush1.bf16.msra.mxu0 0
    %2391 = vmatprep.subr.bf16.mxu0 0
    %2392 = vmatpush1.bf16.msra.mxu0 0
    %2393 = vmatprep.subr.bf16.mxu0 0
    %2394 = vmatpush1.bf16.msra.mxu0 0
    %2395 = vmatprep.subr.bf16.mxu0 0
    %2396 = vmatpush1.bf16.msra.mxu0 0
    %2397 = vmatprep.subr.bf16.mxu0 0
    %2398 = vmatpush1.bf16.msra.mxu0 0
    %2399 = vmatprep.mubr.bf16.mxu0 0
    %2400 = vmatmul.mubr.bf16.gmra.mrb[0].mxu0 %v2365
    %v2401 = vpop.f32.mrb[0].mxu0
    %v2402 = vadd.f32 0.0, %v2401
    %v2403 = vpop.f32.mrb[0].mxu0
    %v2404 = vpop.f32.mrb[0].mxu0
    %v2405 = vadd.f32 0.0, %v2404
    %v2406 = vpop.f32.mrb[0].mxu0
    %2407 = vdwg.mxu0
    %v2408 = vadd.f32 %v2083, %v2402
    %v2409 = vadd.f32 %v2086, %v2405
    %v2410 = vpack.c.bf16 %v2360, %v2357
    %v2412 = vsel %vm969, %v2410, 0
    %2414 = vmatprep.subr.bf16.mxu0 0
    %2415 = vmatpush1.bf16.msra.mxu0 %v1690
    %2416 = vmatprep.subr.bf16.mxu0 0
    %2417 = vmatpush1.bf16.msra.mxu0 %v1691
    %2418 = vmatprep.subr.bf16.mxu0 0
    %2419 = vmatpush1.bf16.msra.mxu0 0
    %2420 = vmatprep.subr.bf16.mxu0 0
    %2421 = vmatpush1.bf16.msra.mxu0 0
    %2422 = vmatprep.subr.bf16.mxu0 0
    %2423 = vmatpush1.bf16.msra.mxu0 0
    %2424 = vmatprep.subr.bf16.mxu0 0
    %2425 = vmatpush1.bf16.msra.mxu0 0
    %2426 = vmatprep.subr.bf16.mxu0 0
    %2427 = vmatpush1.bf16.msra.mxu0 0
    %2428 = vmatprep.subr.bf16.mxu0 0
    %2429 = vmatpush1.bf16.msra.mxu0 0
    %2430 = vmatprep.subr.bf16.mxu0 0
    %2431 = vmatpush1.bf16.msra.mxu0 0
    %2432 = vmatprep.subr.bf16.mxu0 0
    %2433 = vmatpush1.bf16.msra.mxu0 0
    %2434 = vmatprep.subr.bf16.mxu0 0
    %2435 = vmatpush1.bf16.msra.mxu0 0
    %2436 = vmatprep.subr.bf16.mxu0 0
    %2437 = vmatpush1.bf16.msra.mxu0 0
    %2438 = vmatprep.subr.bf16.mxu0 0
    %2439 = vmatpush1.bf16.msra.mxu0 0
    %2440 = vmatprep.subr.bf16.mxu0 0
    %2441 = vmatpush1.bf16.msra.mxu0 0
    %2442 = vmatprep.subr.bf16.mxu0 0
    %2443 = vmatpush1.bf16.msra.mxu0 0
    %2444 = vmatprep.subr.bf16.mxu0 0
    %2445 = vmatpush1.bf16.msra.mxu0 0
    %2446 = vmatprep.mubr.bf16.mxu0 0
    %2447 = vmatmul.mubr.bf16.gmra.mrb[0].mxu0 %v2412
    %v2448 = vpop.f32.mrb[0].mxu0
    %v2449 = vadd.f32 0.0, %v2448
    %v2450 = vpop.f32.mrb[0].mxu0
    %v2451 = vpop.f32.mrb[0].mxu0
    %v2452 = vadd.f32 0.0, %v2451
    %v2453 = vpop.f32.mrb[0].mxu0
    %2454 = vdwg.mxu0
    %v2455 = vadd.f32 %v2408, %v2449
    %v2456 = vadd.f32 %v2409, %v2452
    %v2457 = vlaneseq
    %v2458 = vshrl.u32 %v2457, 7
    %v2459 = vsub.s32 1, %v2458
    %v2460 = vrot.slane %v569, %v2459
    %v2461 = vmul.f32 %v2460, %v2455
    %v2462 = vmul.f32 %v2460, %v2456
    %v2463 = vadd.f32 %v158, %v1744
    %v2464 = vadd.f32 %v159, %v1745
    %v2465 = vadd.f32 %v160, %v2461
    %v2466 = vadd.f32 %v161, %v2462
    %v2467 = vld [vmem:[%s11] sm:$0x1]
    %v2468 = vmul.f32 %v2463, %v2463
    %v2469 = vmul.f32 %v2464, %v2464
    %v2470 = vmul.f32 %v2465, %v2465
    %v2471 = vmul.f32 %v2466, %v2466
    %2472 = vadd.xlane.f32.xlu0 %v2468
    %v2473 = vpop.xlane.xlu0 %2472
    %2474 = vadd.xlane.f32.xlu0 %v2469
    %v2475 = vpop.xlane.xlu0 %2474
    %2476 = vadd.xlane.f32.xlu0 %v2470
    %v2477 = vpop.xlane.xlu0 %2476
    %2478 = vadd.xlane.f32.xlu0 %v2471
    %v2479 = vpop.xlane.xlu0 %2478
    %v2480 = vmul.f32 %v2473, %v629
    %v2481 = vmul.f32 %v2475, %v629
    %v2482 = vmul.f32 %v2477, %v629
    %v2483 = vmul.f32 %v2479, %v629
    %v2484 = vadd.f32 %v2480, 1e-06
    %v2485 = vadd.f32 %v2481, 1e-06
    %v2486 = vadd.f32 %v2482, 1e-06
    %v2487 = vadd.f32 %v2483, 1e-06
    %v2488 = vrsqrt.pop %v2484
    %v2489 = vrsqrt.pop %v2485
    %v2490 = vrsqrt.pop %v2486
    %v2491 = vrsqrt.pop %v2487
    %v2492 = vmul.f32 %v2463, %v2488
    %v2493 = vmul.f32 %v2464, %v2489
    %v2494 = vmul.f32 %v2465, %v2490
    %v2495 = vmul.f32 %v2466, %v2491
    %v2496 = vadd.f32 %v2467, 1.0
    %v2498 = vlaneseq
    %v2499 = vshrl.u32 %v2498, 7
    %v2500 = vsub.s32 0, %v2499
    %v2501 = vrot.slane %v2496, %v2500
    %v2503 = vmul.f32 %v2492, %v2501
    %v2504 = vmul.f32 %v2493, %v2501
    %v2505 = vmul.f32 %v2494, %v2501
    %v2506 = vmul.f32 %v2495, %v2501
    %v2507 = vadd.f32 %v610, 1.0
    %v2508 = vlaneseq
    %v2509 = vshrl.u32 %v2508, 7
    %v2510 = vsub.s32 0, %v2509
    %v2511 = vrot.slane %v2507, %v2510
    %v2512 = vmul.f32 %v2503, %v2511
    %v2513 = vmul.f32 %v2504, %v2511
    %v2514 = vlaneseq
    %v2515 = vshrl.u32 %v2514, 7
    %v2516 = vsub.s32 0, %v2515
    %v2517 = vrot.slane %v571, %v2516
    %v2518 = vadd.f32 %v2512, %v2517
    %v2519 = vadd.f32 %v2513, %v2517
    %v2520 = vlaneseq
    %v2521 = vshrl.u32 %v2520, 7
    %v2522 = vsub.s32 1, %v2521
    %v2523 = vrot.slane %v2507, %v2522
    %v2524 = vmul.f32 %v2505, %v2523
    %v2525 = vmul.f32 %v2506, %v2523
    %v2526 = vlaneseq
    %v2527 = vshrl.u32 %v2526, 7
    %v2528 = vsub.s32 1, %v2527
    %v2529 = vrot.slane %v571, %v2528
    %v2530 = vadd.f32 %v2524, %v2529
    %v2531 = vadd.f32 %v2525, %v2529
    %v2532 = vpack.c.bf16 %v2519, %v2518
    %v2533 = vpack.c.bf16 %v2531, %v2530
    %v2534 = vld [vmem:[#allocation13] sm:$0xff]
    %v2535 = vld [vmem:[#allocation13 + $0x8] sm:$0xff]
    %v2536 = vld [vmem:[#allocation13 + $0x10] sm:$0xff]
    %v2537 = vld [vmem:[#allocation13 + $0x18] sm:$0xff]
    %v2538 = vld [vmem:[#allocation13 + $0x20] sm:$0xff]
    %v2539 = vld [vmem:[#allocation13 + $0x28] sm:$0xff]
    %v2540 = vld [vmem:[#allocation13 + $0x30] sm:$0xff]
    %v2541 = vld [vmem:[#allocation13 + $0x38] sm:$0xff]
    %v2542 = vld [vmem:[#allocation13 + $0x40] sm:$0xff]
    %v2543 = vld [vmem:[#allocation13 + $0x48] sm:$0xff]
    %v2544 = vld [vmem:[#allocation13 + $0x50] sm:$0xff]
    %v2545 = vld [vmem:[#allocation13 + $0x58] sm:$0xff]
    %v2546 = vld [vmem:[#allocation13 + $0x60] sm:$0xff]
    %v2547 = vld [vmem:[#allocation13 + $0x68] sm:$0xff]
    %v2548 = vld [vmem:[#allocation13 + $0x70] sm:$0xff]
    %v2549 = vld [vmem:[#allocation13 + $0x78] sm:$0xff]
    %v2550 = vld [vmem:[#allocation13 + $0x80] sm:$0xff]
    %v2551 = vld [vmem:[#allocation13 + $0x88] sm:$0xff]
    %v2552 = vld [vmem:[#allocation13 + $0x90] sm:$0xff]
    %v2553 = vld [vmem:[#allocation13 + $0x98] sm:$0xff]
    %v2554 = vld [vmem:[#allocation13 + $0xa0] sm:$0xff]
    %v2555 = vld [vmem:[#allocation13 + $0xa8] sm:$0xff]
    %v2556 = vld [vmem:[#allocation13 + $0xb0] sm:$0xff]
    %v2557 = vld [vmem:[#allocation13 + $0xb8] sm:$0xff]
    %v2558 = vld [vmem:[#allocation13 + $0xc0] sm:$0xff]
    %v2559 = vld [vmem:[#allocation13 + $0xc8] sm:$0xff]
    %v2560 = vld [vmem:[#allocation13 + $0xd0] sm:$0xff]
    %v2561 = vld [vmem:[#allocation13 + $0xd8] sm:$0xff]
    %v2562 = vld [vmem:[#allocation13 + $0xe0] sm:$0xff]
    %v2563 = vld [vmem:[#allocation13 + $0xe8] sm:$0xff]
    %v2564 = vld [vmem:[#allocation13 + $0xf0] sm:$0xff]
    %v2565 = vld [vmem:[#allocation13 + $0xf8] sm:$0xff]
    %v2598 = vunpack.c.l.b16 %v2534
    %v2599 = vunpack.c.h.b16 %v2534
    %v2600 = vunpack.c.l.b16 %v2535
    %v2601 = vunpack.c.h.b16 %v2535
    %v2602 = vunpack.c.l.b16 %v2536
    %v2603 = vunpack.c.h.b16 %v2536
    %v2604 = vunpack.c.l.b16 %v2537
    %v2605 = vunpack.c.h.b16 %v2537
    %v2606 = vunpack.c.l.b16 %v2538
    %v2607 = vunpack.c.h.b16 %v2538
    %v2608 = vunpack.c.l.b16 %v2539
    %v2609 = vunpack.c.h.b16 %v2539
    %v2610 = vunpack.c.l.b16 %v2540
    %v2611 = vunpack.c.h.b16 %v2540
    %v2612 = vunpack.c.l.b16 %v2541
    %v2613 = vunpack.c.h.b16 %v2541
    %v2614 = vunpack.c.l.b16 %v2542
    %v2615 = vunpack.c.h.b16 %v2542
    %v2616 = vunpack.c.l.b16 %v2543
    %v2617 = vunpack.c.h.b16 %v2543
    %v2618 = vunpack.c.l.b16 %v2544
    %v2619 = vunpack.c.h.b16 %v2544
    %v2620 = vunpack.c.l.b16 %v2545
    %v2621 = vunpack.c.h.b16 %v2545
    %v2622 = vunpack.c.l.b16 %v2546
    %v2623 = vunpack.c.h.b16 %v2546
    %v2624 = vunpack.c.l.b16 %v2547
    %v2625 = vunpack.c.h.b16 %v2547
    %v2626 = vunpack.c.l.b16 %v2548
    %v2627 = vunpack.c.h.b16 %v2548
    %v2628 = vunpack.c.l.b16 %v2549
    %v2629 = vunpack.c.h.b16 %v2549
    %v2630 = vunpack.c.l.b16 %v2550
    %v2631 = vunpack.c.h.b16 %v2550
    %v2632 = vunpack.c.l.b16 %v2551
    %v2633 = vunpack.c.h.b16 %v2551
    %v2634 = vunpack.c.l.b16 %v2552
    %v2635 = vunpack.c.h.b16 %v2552
    %v2636 = vunpack.c.l.b16 %v2553
    %v2637 = vunpack.c.h.b16 %v2553
    %v2638 = vunpack.c.l.b16 %v2554
    %v2639 = vunpack.c.h.b16 %v2554
    %v2640 = vunpack.c.l.b16 %v2555
    %v2641 = vunpack.c.h.b16 %v2555
    %v2642 = vunpack.c.l.b16 %v2556
    %v2643 = vunpack.c.h.b16 %v2556
    %v2644 = vunpack.c.l.b16 %v2557
    %v2645 = vunpack.c.h.b16 %v2557
    %v2646 = vunpack.c.l.b16 %v2558
    %v2647 = vunpack.c.h.b16 %v2558
    %v2648 = vunpack.c.l.b16 %v2559
    %v2649 = vunpack.c.h.b16 %v2559
    %v2650 = vunpack.c.l.b16 %v2560
    %v2651 = vunpack.c.h.b16 %v2560
    %v2652 = vunpack.c.l.b16 %v2561
    %v2653 = vunpack.c.h.b16 %v2561
    %v2654 = vunpack.c.l.b16 %v2562
    %v2655 = vunpack.c.h.b16 %v2562
    %v2656 = vunpack.c.l.b16 %v2563
    %v2657 = vunpack.c.h.b16 %v2563
    %v2658 = vunpack.c.l.b16 %v2564
    %v2659 = vunpack.c.h.b16 %v2564
    %v2660 = vunpack.c.l.b16 %v2565
    %v2661 = vunpack.c.h.b16 %v2565
    %v2662 = vpack.c.b16 %v2602, %v2598
    %v2663 = vpack.c.b16 %v2603, %v2599
    %v2664 = vpack.c.b16 %v2604, %v2600
    %v2665 = vpack.c.b16 %v2605, %v2601
    %v2666 = vpack.c.b16 %v2610, %v2606
    %v2667 = vpack.c.b16 %v2611, %v2607
    %v2668 = vpack.c.b16 %v2612, %v2608
    %v2669 = vpack.c.b16 %v2613, %v2609
    %v2670 = vpack.c.b16 %v2618, %v2614
    %v2671 = vpack.c.b16 %v2619, %v2615
    %v2672 = vpack.c.b16 %v2620, %v2616
    %v2673 = vpack.c.b16 %v2621, %v2617
    %v2674 = vpack.c.b16 %v2626, %v2622
    %v2675 = vpack.c.b16 %v2627, %v2623
    %v2676 = vpack.c.b16 %v2628, %v2624
    %v2677 = vpack.c.b16 %v2629, %v2625
    %v2678 = vpack.c.b16 %v2634, %v2630
    %v2679 = vpack.c.b16 %v2635, %v2631
    %v2680 = vpack.c.b16 %v2636, %v2632
    %v2681 = vpack.c.b16 %v2637, %v2633
    %v2682 = vpack.c.b16 %v2642, %v2638
    %v2683 = vpack.c.b16 %v2643, %v2639
    %v2684 = vpack.c.b16 %v2644, %v2640
    %v2685 = vpack.c.b16 %v2645, %v2641
    %v2686 = vpack.c.b16 %v2650, %v2646
    %v2687 = vpack.c.b16 %v2651, %v2647
    %v2688 = vpack.c.b16 %v2652, %v2648
    %v2689 = vpack.c.b16 %v2653, %v2649
    %v2690 = vpack.c.b16 %v2658, %v2654
    %v2691 = vpack.c.b16 %v2659, %v2655
    %v2692 = vpack.c.b16 %v2660, %v2656
    %v2693 = vpack.c.b16 %v2661, %v2657
    %2726 = vmatprep.subr.bf16.mxu0 %v2663
    %2727 = vmatpush1.bf16.msra.mxu0 %v2662
    %2728 = vmatprep.subr.bf16.mxu0 %v2667
    %2729 = vmatpush1.bf16.msra.mxu0 %v2666
    %2730 = vmatprep.subr.bf16.mxu0 %v2671
    %2731 = vmatpush1.bf16.msra.mxu0 %v2670
    %2732 = vmatprep.subr.bf16.mxu0 %v2675
    %2733 = vmatpush1.bf16.msra.mxu0 %v2674
    %2734 = vmatprep.subr.bf16.mxu0 %v2679
    %2735 = vmatpush1.bf16.msra.mxu0 %v2678
    %2736 = vmatprep.subr.bf16.mxu0 %v2683
    %2737 = vmatpush1.bf16.msra.mxu0 %v2682
    %2738 = vmatprep.subr.bf16.mxu0 %v2687
    %2739 = vmatpush1.bf16.msra.mxu0 %v2686
    %2740 = vmatprep.subr.bf16.mxu0 %v2691
    %2741 = vmatpush1.bf16.msra.mxu0 %v2690
    %2742 = vmatprep.subr.bf16.mxu0 0
    %2743 = vmatpush1.bf16.msra.mxu0 0
    %2744 = vmatprep.subr.bf16.mxu0 0
    %2745 = vmatpush1.bf16.msra.mxu0 0
    %2746 = vmatprep.subr.bf16.mxu0 0
    %2747 = vmatpush1.bf16.msra.mxu0 0
    %2748 = vmatprep.subr.bf16.mxu0 0
    %2749 = vmatpush1.bf16.msra.mxu0 0
    %2750 = vmatprep.subr.bf16.mxu0 0
    %2751 = vmatpush1.bf16.msra.mxu0 0
    %2752 = vmatprep.subr.bf16.mxu0 0
    %2753 = vmatpush1.bf16.msra.mxu0 0
    %2754 = vmatprep.subr.bf16.mxu0 0
    %2755 = vmatpush1.bf16.msra.mxu0 0
    %2756 = vmatprep.subr.bf16.mxu0 0
    %2757 = vmatpush1.bf16.msra.mxu0 0
    %2758 = vmatprep.mubr.bf16.mxu0 0
    %2759 = vmatmul.mubr.bf16.gmra.mrb[0].mxu0 %v2532
    %v2760 = vpop.f32.mrb[0].mxu0
    %v2761 = vadd.f32 0.0, %v2760
    %v2762 = vpop.f32.mrb[0].mxu0
    %v2763 = vadd.f32 0.0, %v2762
    %v2764 = vpop.f32.mrb[0].mxu0
    %v2765 = vadd.f32 0.0, %v2764
    %v2766 = vpop.f32.mrb[0].mxu0
    %v2767 = vadd.f32 0.0, %v2766
    %2768 = vmatprep.mubr.bf16.mxu0 0
    %2769 = vmatmul.mubr.bf16.gmra.mrb[0].mxu0 %v2533
    %v2770 = vpop.f32.mrb[0].mxu0
    %v2771 = vadd.f32 0.0, %v2770
    %v2772 = vpop.f32.mrb[0].mxu0
    %v2773 = vadd.f32 0.0, %v2772
    %v2774 = vpop.f32.mrb[0].mxu0
    %v2775 = vadd.f32 0.0, %v2774
    %v2776 = vpop.f32.mrb[0].mxu0
    %v2777 = vadd.f32 0.0, %v2776
    %2778 = vdwg.mxu0
    %2779 = vmatprep.subr.bf16.mxu0 %v2665
    %2780 = vmatpush1.bf16.msra.mxu0 %v2664
    %2781 = vmatprep.subr.bf16.mxu0 %v2669
    %2782 = vmatpush1.bf16.msra.mxu0 %v2668
    %2783 = vmatprep.subr.bf16.mxu0 %v2673
    %2784 = vmatpush1.bf16.msra.mxu0 %v2672
    %2785 = vmatprep.subr.bf16.mxu0 %v2677
    %2786 = vmatpush1.bf16.msra.mxu0 %v2676
    %2787 = vmatprep.subr.bf16.mxu0 %v2681
    %2788 = vmatpush1.bf16.msra.mxu0 %v2680
    %2789 = vmatprep.subr.bf16.mxu0 %v2685
    %2790 = vmatpush1.bf16.msra.mxu0 %v2684
    %2791 = vmatprep.subr.bf16.mxu0 %v2689
    %2792 = vmatpush1.bf16.msra.mxu0 %v2688
    %2793 = vmatprep.subr.bf16.mxu0 %v2693
    %2794 = vmatpush1.bf16.msra.mxu0 %v2692
    %2795 = vmatprep.subr.bf16.mxu0 0
    %2796 = vmatpush1.bf16.msra.mxu0 0
    %2797 = vmatprep.subr.bf16.mxu0 0
    %2798 = vmatpush1.bf16.msra.mxu0 0
    %2799 = vmatprep.subr.bf16.mxu0 0
    %2800 = vmatpush1.bf16.msra.mxu0 0
    %2801 = vmatprep.subr.bf16.mxu0 0
    %2802 = vmatpush1.bf16.msra.mxu0 0
    %2803 = vmatprep.subr.bf16.mxu0 0
    %2804 = vmatpush1.bf16.msra.mxu0 0
    %2805 = vmatprep.subr.bf16.mxu0 0
    %2806 = vmatpush1.bf16.msra.mxu0 0
    %2807 = vmatprep.subr.bf16.mxu0 0
    %2808 = vmatpush1.bf16.msra.mxu0 0
    %2809 = vmatprep.subr.bf16.mxu0 0
    %2810 = vmatpush1.bf16.msra.mxu0 0
    %2811 = vmatprep.mubr.bf16.mxu0 0
    %2812 = vmatmul.mubr.bf16.gmra.mrb[0].mxu0 %v2532
    %v2813 = vpop.f32.mrb[0].mxu0
    %v2814 = vadd.f32 0.0, %v2813
    %v2815 = vpop.f32.mrb[0].mxu0
    %v2816 = vadd.f32 0.0, %v2815
    %v2817 = vpop.f32.mrb[0].mxu0
    %v2818 = vadd.f32 0.0, %v2817
    %v2819 = vpop.f32.mrb[0].mxu0
    %v2820 = vadd.f32 0.0, %v2819
    %2821 = vmatprep.mubr.bf16.mxu0 0
    %2822 = vmatmul.mubr.bf16.gmra.mrb[0].mxu0 %v2533
    %v2823 = vpop.f32.mrb[0].mxu0
    %v2824 = vadd.f32 0.0, %v2823
    %v2825 = vpop.f32.mrb[0].mxu0
    %v2826 = vadd.f32 0.0, %v2825
    %v2827 = vpop.f32.mrb[0].mxu0
    %v2828 = vadd.f32 0.0, %v2827
    %v2829 = vpop.f32.mrb[0].mxu0
    %v2830 = vadd.f32 0.0, %v2829
    %2831 = vdwg.mxu0
    %v2832 = vmul.f32 %v2761, 0.5
    %v2833 = vmul.f32 %v2763, 0.5
    %v2834 = vmul.f32 %v2765, 0.5
    %v2835 = vmul.f32 %v2767, 0.5
    %v2836 = vmul.f32 %v2771, 0.5
    %v2837 = vmul.f32 %v2773, 0.5
    %v2838 = vmul.f32 %v2775, 0.5
    %v2839 = vmul.f32 %v2777, 0.5
    %v2840 = vmul.f32 %v2761, 0.044715
    %v2841 = vmul.f32 %v2763, 0.044715
    %v2842 = vmul.f32 %v2765, 0.044715
    %v2843 = vmul.f32 %v2767, 0.044715
    %v2844 = vmul.f32 %v2771, 0.044715
    %v2845 = vmul.f32 %v2773, 0.044715
    %v2846 = vmul.f32 %v2775, 0.044715
    %v2847 = vmul.f32 %v2777, 0.044715
    %v2848 = vmul.f32 %v2840, %v2761
    %v2849 = vmul.f32 %v2841, %v2763
    %v2850 = vmul.f32 %v2842, %v2765
    %v2851 = vmul.f32 %v2843, %v2767
    %v2852 = vmul.f32 %v2844, %v2771
    %v2853 = vmul.f32 %v2845, %v2773
    %v2854 = vmul.f32 %v2846, %v2775
    %v2855 = vmul.f32 %v2847, %v2777
    %v2856 = vmul.f32 %v2848, %v2761
    %v2857 = vmul.f32 %v2849, %v2763
    %v2858 = vmul.f32 %v2850, %v2765
    %v2859 = vmul.f32 %v2851, %v2767
    %v2860 = vmul.f32 %v2852, %v2771
    %v2861 = vmul.f32 %v2853, %v2773
    %v2862 = vmul.f32 %v2854, %v2775
    %v2863 = vmul.f32 %v2855, %v2777
    %v2864 = vadd.f32 %v2761, %v2856
    %v2865 = vadd.f32 %v2763, %v2857
    %v2866 = vadd.f32 %v2765, %v2858
    %v2867 = vadd.f32 %v2767, %v2859
    %v2868 = vadd.f32 %v2771, %v2860
    %v2869 = vadd.f32 %v2773, %v2861
    %v2870 = vadd.f32 %v2775, %v2862
    %v2871 = vadd.f32 %v2777, %v2863
    %v2872 = vmul.f32 %v2864, 0.7978846
    %v2873 = vmul.f32 %v2865, 0.7978846
    %v2874 = vmul.f32 %v2866, 0.7978846
    %v2875 = vmul.f32 %v2867, 0.7978846
    %v2876 = vmul.f32 %v2868, 0.7978846
    %v2877 = vmul.f32 %v2869, 0.7978846
    %v2878 = vmul.f32 %v2870, 0.7978846
    %v2879 = vmul.f32 %v2871, 0.7978846
    %v2880 = vtanh.pop %v2872
    %v2881 = vtanh.pop %v2873
    %v2882 = vtanh.pop %v2874
    %v2883 = vtanh.pop %v2875
    %v2884 = vtanh.pop %v2876
    %v2885 = vtanh.pop %v2877
    %v2886 = vtanh.pop %v2878
    %v2887 = vtanh.pop %v2879
    %v2888 = vadd.f32 %v2880, 1.0
    %v2889 = vadd.f32 %v2881, 1.0
    %v2890 = vadd.f32 %v2882, 1.0
    %v2891 = vadd.f32 %v2883, 1.0
    %v2892 = vadd.f32 %v2884, 1.0
    %v2893 = vadd.f32 %v2885, 1.0
    %v2894 = vadd.f32 %v2886, 1.0
    %v2895 = vadd.f32 %v2887, 1.0
    %v2896 = vmul.f32 %v2832, %v2888
    %v2897 = vmul.f32 %v2833, %v2889
    %v2898 = vmul.f32 %v2834, %v2890
    %v2899 = vmul.f32 %v2835, %v2891
    %v2900 = vmul.f32 %v2836, %v2892
    %v2901 = vmul.f32 %v2837, %v2893
    %v2902 = vmul.f32 %v2838, %v2894
    %v2903 = vmul.f32 %v2839, %v2895
    %v2904 = vmul.f32 %v2896, %v2814
    %v2905 = vmul.f32 %v2897, %v2816
    %v2906 = vmul.f32 %v2898, %v2818
    %v2907 = vmul.f32 %v2899, %v2820
    %v2908 = vmul.f32 %v2900, %v2824
    %v2909 = vmul.f32 %v2901, %v2826
    %v2910 = vmul.f32 %v2902, %v2828
    %v2911 = vmul.f32 %v2903, %v2830
    %v2912 = vpack.c.bf16 %v2906, %v2904
    %v2913 = vpack.c.bf16 %v2907, %v2905
    %v2914 = vpack.c.bf16 %v2910, %v2908
    %v2915 = vpack.c.bf16 %v2911, %v2909
    %v2916 = vld [vmem:[#allocation14] sm:$0xf]
    %v2917 = vld [vmem:[#allocation14 + $0x4] sm:$0xf]
    %v2918 = vld [vmem:[#allocation14 + $0x8] sm:$0xf]
    %v2919 = vld [vmem:[#allocation14 + $0xc] sm:$0xf]
    %v2920 = vld [vmem:[#allocation14 + $0x10] sm:$0xf]
    %v2921 = vld [vmem:[#allocation14 + $0x14] sm:$0xf]
    %v2922 = vld [vmem:[#allocation14 + $0x18] sm:$0xf]
    %v2923 = vld [vmem:[#allocation14 + $0x1c] sm:$0xf]
    %v2924 = vld [vmem:[#allocation14 + $0x20] sm:$0xf]
    %v2925 = vld [vmem:[#allocation14 + $0x24] sm:$0xf]
    %v2926 = vld [vmem:[#allocation14 + $0x28] sm:$0xf]
    %v2927 = vld [vmem:[#allocation14 + $0x2c] sm:$0xf]
    %v2928 = vld [vmem:[#allocation14 + $0x30] sm:$0xf]
    %v2929 = vld [vmem:[#allocation14 + $0x34] sm:$0xf]
    %v2930 = vld [vmem:[#allocation14 + $0x38] sm:$0xf]
    %v2931 = vld [vmem:[#allocation14 + $0x3c] sm:$0xf]
    %v2932 = vld [vmem:[#allocation14 + $0x40] sm:$0xf]
    %v2933 = vld [vmem:[#allocation14 + $0x44] sm:$0xf]
    %v2934 = vld [vmem:[#allocation14 + $0x48] sm:$0xf]
    %v2935 = vld [vmem:[#allocation14 + $0x4c] sm:$0xf]
    %v2936 = vld [vmem:[#allocation14 + $0x50] sm:$0xf]
    %v2937 = vld [vmem:[#allocation14 + $0x54] sm:$0xf]
    %v2938 = vld [vmem:[#allocation14 + $0x58] sm:$0xf]
    %v2939 = vld [vmem:[#allocation14 + $0x5c] sm:$0xf]
    %v2940 = vld [vmem:[#allocation14 + $0x60] sm:$0xf]
    %v2941 = vld [vmem:[#allocation14 + $0x64] sm:$0xf]
    %v2942 = vld [vmem:[#allocation14 + $0x68] sm:$0xf]
    %v2943 = vld [vmem:[#allocation14 + $0x6c] sm:$0xf]
    %v2944 = vld [vmem:[#allocation14 + $0x70] sm:$0xf]
    %v2945 = vld [vmem:[#allocation14 + $0x74] sm:$0xf]
    %v2946 = vld [vmem:[#allocation14 + $0x78] sm:$0xf]
    %v2947 = vld [vmem:[#allocation14 + $0x7c] sm:$0xf]
    %v2980 = vunpack.c.l.b16 %v2916
    %v2981 = vunpack.c.l.b16 %v2917
    %v2982 = vunpack.c.l.b16 %v2918
    %v2983 = vunpack.c.l.b16 %v2919
    %v2984 = vunpack.c.l.b16 %v2920
    %v2985 = vunpack.c.l.b16 %v2921
    %v2986 = vunpack.c.l.b16 %v2922
    %v2987 = vunpack.c.l.b16 %v2923
    %v2988 = vunpack.c.l.b16 %v2924
    %v2989 = vunpack.c.l.b16 %v2925
    %v2990 = vunpack.c.l.b16 %v2926
    %v2991 = vunpack.c.l.b16 %v2927
    %v2992 = vunpack.c.l.b16 %v2928
    %v2993 = vunpack.c.l.b16 %v2929
    %v2994 = vunpack.c.l.b16 %v2930
    %v2995 = vunpack.c.l.b16 %v2931
    %v2996 = vunpack.c.l.b16 %v2932
    %v2997 = vunpack.c.l.b16 %v2933
    %v2998 = vunpack.c.l.b16 %v2934
    %v2999 = vunpack.c.l.b16 %v2935
    %v3000 = vunpack.c.l.b16 %v2936
    %v3001 = vunpack.c.l.b16 %v2937
    %v3002 = vunpack.c.l.b16 %v2938
    %v3003 = vunpack.c.l.b16 %v2939
    %v3004 = vunpack.c.l.b16 %v2940
    %v3005 = vunpack.c.l.b16 %v2941
    %v3006 = vunpack.c.l.b16 %v2942
    %v3007 = vunpack.c.l.b16 %v2943
    %v3008 = vunpack.c.l.b16 %v2944
    %v3009 = vunpack.c.l.b16 %v2945
    %v3010 = vunpack.c.l.b16 %v2946
    %v3011 = vunpack.c.l.b16 %v2947
    %v3012 = vpack.c.b16 %v2981, %v2980
    %v3013 = vpack.c.b16 %v2983, %v2982
    %v3014 = vpack.c.b16 %v2985, %v2984
    %v3015 = vpack.c.b16 %v2987, %v2986
    %v3016 = vpack.c.b16 %v2989, %v2988
    %v3017 = vpack.c.b16 %v2991, %v2990
    %v3018 = vpack.c.b16 %v2993, %v2992
    %v3019 = vpack.c.b16 %v2995, %v2994
    %v3020 = vpack.c.b16 %v2997, %v2996
    %v3021 = vpack.c.b16 %v2999, %v2998
    %v3022 = vpack.c.b16 %v3001, %v3000
    %v3023 = vpack.c.b16 %v3003, %v3002
    %v3024 = vpack.c.b16 %v3005, %v3004
    %v3025 = vpack.c.b16 %v3007, %v3006
    %v3026 = vpack.c.b16 %v3009, %v3008
    %v3027 = vpack.c.b16 %v3011, %v3010
    %3044 = vmatprep.subr.bf16.mxu0 0
    %3045 = vmatpush1.bf16.msra.mxu0 %v3012
    %3046 = vmatprep.subr.bf16.mxu0 0
    %3047 = vmatpush1.bf16.msra.mxu0 %v3013
    %3048 = vmatprep.subr.bf16.mxu0 0
    %3049 = vmatpush1.bf16.msra.mxu0 %v3014
    %3050 = vmatprep.subr.bf16.mxu0 0
    %3051 = vmatpush1.bf16.msra.mxu0 %v3015
    %3052 = vmatprep.subr.bf16.mxu0 0
    %3053 = vmatpush1.bf16.msra.mxu0 %v3016
    %3054 = vmatprep.subr.bf16.mxu0 0
    %3055 = vmatpush1.bf16.msra.mxu0 %v3017
    %3056 = vmatprep.subr.bf16.mxu0 0
    %3057 = vmatpush1.bf16.msra.mxu0 %v3018
    %3058 = vmatprep.subr.bf16.mxu0 0
    %3059 = vmatpush1.bf16.msra.mxu0 %v3019
    %3060 = vmatprep.subr.bf16.mxu0 0
    %3061 = vmatpush1.bf16.msra.mxu0 %v3020
    %3062 = vmatprep.subr.bf16.mxu0 0
    %3063 = vmatpush1.bf16.msra.mxu0 %v3021
    %3064 = vmatprep.subr.bf16.mxu0 0
    %3065 = vmatpush1.bf16.msra.mxu0 %v3022
    %3066 = vmatprep.subr.bf16.mxu0 0
    %3067 = vmatpush1.bf16.msra.mxu0 %v3023
    %3068 = vmatprep.subr.bf16.mxu0 0
    %3069 = vmatpush1.bf16.msra.mxu0 %v3024
    %3070 = vmatprep.subr.bf16.mxu0 0
    %3071 = vmatpush1.bf16.msra.mxu0 %v3025
    %3072 = vmatprep.subr.bf16.mxu0 0
    %3073 = vmatpush1.bf16.msra.mxu0 %v3026
    %3074 = vmatprep.subr.bf16.mxu0 0
    %3075 = vmatpush1.bf16.msra.mxu0 %v3027
    %3076 = vmatprep.mubr.bf16.mxu0 %v2913
    %3077 = vmatmul.mubr.bf16.gmra.mrb[0].mxu0 %v2912
    %v3078 = vpop.f32.mrb[0].mxu0
    %v3079 = vadd.f32 0.0, %v3078
    %v3080 = vpop.f32.mrb[0].mxu0
    %v3081 = vpop.f32.mrb[0].mxu0
    %v3082 = vadd.f32 0.0, %v3081
    %v3083 = vpop.f32.mrb[0].mxu0
    %3084 = vmatprep.mubr.bf16.mxu0 %v2915
    %3085 = vmatmul.mubr.bf16.gmra.mrb[0].mxu0 %v2914
    %v3086 = vpop.f32.mrb[0].mxu0
    %v3087 = vadd.f32 0.0, %v3086
    %v3088 = vpop.f32.mrb[0].mxu0
    %v3089 = vpop.f32.mrb[0].mxu0
    %v3090 = vadd.f32 0.0, %v3089
    %v3091 = vpop.f32.mrb[0].mxu0
    %3092 = vdwg.mxu0
    %v3093 = vlaneseq
    %v3094 = vshrl.u32 %v3093, 7
    %v3095 = vsub.s32 0, %v3094
    %v3096 = vrot.slane %v612, %v3095
    %v3097 = vmul.f32 %v3096, %v3079
    %v3098 = vmul.f32 %v3096, %v3082
    %v3099 = vlaneseq
    %v3100 = vshrl.u32 %v3099, 7
    %v3101 = vsub.s32 1, %v3100
    %v3102 = vrot.slane %v612, %v3101
    %v3103 = vmul.f32 %v3102, %v3087
    %v3104 = vmul.f32 %v3102, %v3090
    %v3105 = vadd.f32 %v2463, %v3097
    %v3106 = vadd.f32 %v2464, %v3098
    %v3107 = vadd.f32 %v2465, %v3103
    %v3108 = vadd.f32 %v2466, %v3104
    %3109 = vst [vmem:[#allocation16] sm:$0xff] %v3105
    %3110 = vst [vmem:[#allocation16 + $0x8] sm:$0xff] %v3106
    %3111 = vst [vmem:[#allocation16 + $0x10] sm:$0xff] %v3107
    %3112 = vst [vmem:[#allocation16 + $0x18] sm:$0xff] %v3108
    // Predicated region
    $region90: #{dit_layer.1} parent=1 // pred_check
      _
    $region91: #{dit_layer.1} parent=1 // pred_check_branch
      %3114 = sbr.rel (0) target = $region93
    $region92: #{dit_layer.1} parent=1 // pred_region
      %s3116 = ssub.s32 512, 512
      %3117 = vsyncadd [#allocation4], %s3116
      %s3118 = sshll.u32 [#allocation16], 4
      %s3119 = int_to_ptr.vmem [resolvable:$true] %s3118
      %3124 = dma.vmem_to_hbm [thread:$0]  %s3119, 512, %s14, [#allocation4], 128, 128, 8
    $region93: #{dit_layer.1} parent=1 // pred_fallthru
      _
    // Predicated region
    $region94: #{dit_layer.1} parent=1 // pred_check
      _
    $region95: #{dit_layer.1} parent=1 // pred_check_branch
      %3126 = sbr.rel (0) target = $region97
    $region96: #{dit_layer.1} parent=1 // pred_region
      %3127 = dma.done [#allocation4], 512
    $region97: #{dit_layer.1} parent=1 // pred_fallthru
      _
    %3128 = vsyncpa [#allocation3], 1
    %3129 = vsyncpa [#allocation6], 1
    %3130 = vsyncpa [#allocation9], 1
    %3131 = vsyncpa [#allocation12], 1
    %3132 = vsyncpa [#allocation15], 1
    %3133 = vsyncpa [#allocation4], 1

</llo_original>
